<compile_context>
chip_gen: v6e
topology: v6e:2x2x1
jax: 0.10.0
libtpu: 0.0.40
codegen_flags: <defaults>
</compile_context>

<pallas_src>
import math
import functools

import numpy as np
import jax
import jax.numpy as jnp
from jax import lax
from jax.experimental import pallas as pl
from jax.experimental.pallas import tpu as pltpu

# ----------------------- small hyperparameters --------------------------------
VOCAB = 64
DIM = 32
DIM_ATTN = 32
DIM_FFN = 64
NUM_HEADS = 4
NUM_LAYERS = 2
NUM_BUCKETS = 16
HEAD_DIM = DIM_ATTN // NUM_HEADS
EPS = 1e-6
MAX_DIST = 128
NEG = float(jnp.finfo(jnp.float32).min)

_HIGH = lax.Precision.HIGHEST   # only used by the pure-JAX reference


# ============================ fused decoder kernel =============================
def _decoder_kernel(x_ref, enc_ref, sbias_ref, cbias_ref, normf_ref,
                    w_sa_qkv_ref, w_sa_o_ref, w_ca_q_ref, w_ca_kv_ref,
                    w_ca_o_ref, w_ffn_ref, w_fc2_ref, o_ref,
                    *, S, L_enc, num_layers, num_heads, head_dim, eps):
    f32 = jnp.float32
    DA = num_heads * head_dim

    x = x_ref[0]                   # [S, DIM]      this grid step's batch element
    enc = enc_ref[0]               # [L_enc, DIM]
    sbias = sbias_ref[...]         # [N, S, S]     rel-pos + causal (batch-shared)
    # Encoder-mask bias broadcast ONCE per forward (not per head / per layer).
    cbias = jnp.broadcast_to(cbias_ref[...], (num_heads, S, L_enc))   # [N,S,Lk]

    def rms(v):
        # norm1/2/3 scale vectors are folded into the downstream weights.
        return v * lax.rsqrt(jnp.mean(v * v, axis=-1, keepdims=True) + eps)

    def gelu(v):
        # tanh-approx GELU, exactly as the torch module
        return 0.5 * v * (1.0 + jnp.tanh(
            math.sqrt(2.0 / math.pi) * (v + 0.044715 * v * v * v)))

    def mha(q, k, v, bias, w_o):
        """q:[Lq,N*C]  k,v:[Lk,N*C]  bias:[N,Lq,Lk]  w_o:[N*C,DIM] -> [Lq,DIM]."""
        outs = []
        for h in range(num_heads):
            sl = slice(h * head_dim, (h + 1) * head_dim)
            s = jnp.einsum('qc,kc->qk', q[:, sl], k[:, sl],
                           preferred_element_type=f32) + bias[h]
            s = s - jnp.max(s, axis=-1, keepdims=True)
            p = jnp.exp(s)
            p = p / jnp.sum(p, axis=-1, keepdims=True)        # exact softmax
            outs.append(jnp.dot(p, v[:, sl], preferred_element_type=f32))
        o = jnp.concatenate(outs, axis=-1)                    # [Lq, N*C]
        # Single K=32 output projection instead of 4x K=8 partial matmuls.
        return jnp.dot(o, w_o, preferred_element_type=f32)

    # Cross-attn K/V of the layer-invariant encoder states for ALL layers at
    # once: one lane-dense [DIM, L*2*DIM_ATTN] = [32,128] MXU push.
    kv_all = jnp.dot(enc, w_ca_kv_ref[...], preferred_element_type=f32)

    for l in range(num_layers):                               # static unroll
        # ------------------------------ self attention ------------------------
        qkv = jnp.dot(rms(x), w_sa_qkv_ref[l], preferred_element_type=f32)
        x = x + mha(qkv[:, 0:DA], qkv[:, DA:2 * DA], qkv[:, 2 * DA:3 * DA],
                    sbias, w_sa_o_ref[l])

        # ------------------------------ cross attention -----------------------
        q = jnp.dot(rms(x), w_ca_q_ref[l], preferred_element_type=f32)
        base = 2 * DA * l
        x = x + mha(q,
                    kv_all[:, base:base + DA],
                    kv_all[:, base + DA:base + 2 * DA],
                    cbias, w_ca_o_ref[l])

        # ------------------------------ feed forward --------------------------
        hh = jnp.dot(rms(x), w_ffn_ref[l], preferred_element_type=f32)
        h1 = hh[:, 0:DIM_FFN]
        hg = hh[:, DIM_FFN:2 * DIM_FFN]
        x = x + jnp.dot(h1 * gelu(hg), w_fc2_ref[l], preferred_element_type=f32)

    o_ref[0] = normf_ref[...] * rms(x)                        # final T5LayerNorm


# ============================== host-side glue =================================
def rel_pos_bias(emb, lq, lk, num_buckets=NUM_BUCKETS, max_dist=MAX_DIST):
    """T5RelativeEmbedding, bidirectional=False (decoder) -> [N, lq, lk]."""
    rel_pos = jnp.arange(lk)[None, :] - jnp.arange(lq)[:, None]
    rp = -jnp.minimum(rel_pos, 0)
    max_exact = num_buckets // 2
    rp_large = max_exact + (
        jnp.log(jnp.maximum(rp, 1).astype(jnp.float32) / max_exact)
        / math.log(max_dist / max_exact) * (num_buckets - max_exact)
    ).astype(jnp.int32)
    rp_large = jnp.minimum(rp_large, num_buckets - 1)
    buckets = jnp.where(rp < max_exact, rp, rp_large)
    bias = jnp.take(emb, buckets, axis=0)            # [lq, lk, N]
    return jnp.transpose(bias, (2, 0, 1))            # [N, lq, lk]


def pack_params(params):
    """One-time weight packing: transpose to [in,out], fuse QKV / all-layer KV /
    FFN-in, and fold RMSNorm scales into the downstream projection weights."""
    T = jnp.transpose
    blocks = params['blocks']

    def fold(norm_w, w_in_out):
        # rmsnorm(x; w) @ W == (x * rsqrt(mean(x^2)+eps)) @ (diag(w) @ W)
        return norm_w[:, None] * w_in_out

    return {
        'token_embedding': params['token_embedding'],
        'pos_emb': params['pos_emb'],
        'norm_final': params['norm'].reshape(1, DIM),
        'w_sa_qkv': jnp.stack([fold(p['norm1'], jnp.concatenate(
            [T(p['sa_q']), T(p['sa_k']), T(p['sa_v'])], axis=1)) for p in blocks]),
        'w_sa_o': jnp.stack([T(p['sa_o']) for p in blocks]),
        'w_ca_q': jnp.stack([fold(p['norm2'], T(p['ca_q'])) for p in blocks]),
        # all-layer fused cross-attn K/V: [DIM, NUM_LAYERS*2*DIM_ATTN]
        'w_ca_kv': jnp.concatenate([jnp.concatenate(
            [T(p['ca_k']), T(p['ca_v'])], axis=1) for p in blocks], axis=1),
        'w_ca_o': jnp.stack([T(p['ca_o']) for p in blocks]),
        'w_ffn_in': jnp.stack([fold(p['norm3'], jnp.concatenate(
            [T(p['fc1']), T(p['gate'])], axis=1)) for p in blocks]),
        'w_fc2': jnp.stack([T(p['fc2']) for p in blocks]),
    }


def t5_decoder_forward(packed, ids, encoder_states, encoder_mask):
    B, S = ids.shape
    L_enc = encoder_states.shape[1]

    # Tiny XLA glue (gathers / mask arithmetic); everything else is in-kernel.
    x = jnp.take(packed['token_embedding'], ids, axis=0)                # [B,S,DIM]
    enc = encoder_states.astype(jnp.float32)                            # [B,L,DIM]

    pos = rel_pos_bias(packed['pos_emb'], S, S)                         # [N,S,S]
    causal = jnp.tril(jnp.ones((S, S), jnp.float32))
    sbias = jnp.where(causal[None] == 0, NEG, pos)                      # [N,S,S]
    cbias = jnp.where(encoder_mask == 0, NEG, 0.0).astype(jnp.float32)
    cbias = cbias.reshape(B, 1, L_enc)                                  # [B,1,L]

    kern = functools.partial(
        _decoder_kernel, S=S, L_enc=L_enc, num_layers=NUM_LAYERS,
        num_heads=NUM_HEADS, head_dim=HEAD_DIM, eps=EPS)

    def shared(a):
        nd = a.ndim
        return pl.BlockSpec(tuple(a.shape), lambda b, nd=nd: (0,) * nd)

    inputs = (x, enc, sbias, cbias, packed['norm_final'],
              packed['w_sa_qkv'], packed['w_sa_o'], packed['w_ca_q'],
              packed['w_ca_kv'], packed['w_ca_o'], packed['w_ffn_in'],
              packed['w_fc2'])

    in_specs = [
        pl.BlockSpec((1, S, DIM), lambda b: (b, 0, 0)),       # x     (per batch)
        pl.BlockSpec((1, L_enc, DIM), lambda b: (b, 0, 0)),   # enc   (per batch)
        shared(sbias),                                        # shared self bias
        pl.BlockSpec((1, 1, L_enc), lambda b: (b, 0, 0)),     # cbias (per batch)
    ] + [shared(a) for a in inputs[4:]]                       # weights (resident)

    out = pl.pallas_call(
        kern,
        out_shape=jax.ShapeDtypeStruct((B, S, DIM), jnp.float32),
        grid=(B,),
        in_specs=in_specs,
        out_specs=pl.BlockSpec((1, S, DIM), lambda b: (b, 0, 0)),
        compiler_params=pltpu.CompilerParams(
            dimension_semantics=("parallel",)),
    )(*inputs)
    return out


# ========================= pure-JAX reference (for sanity) =====================
def _ref_linear(x, w):
    return jnp.dot(x, w.T, precision=_HIGH)


def _ref_norm(x, w, eps=EPS):
    var = jnp.mean(x * x, axis=-1, keepdims=True)
    return w * (x * lax.rsqrt(var + eps))


def _ref_attention(x, context, bias, wq, wk, wv, wo, n):
    B, L1, _ = x.shape
    L2 = context.shape[1]
    c = wq.shape[0] // n
    q = _ref_linear(x, wq).reshape(B, L1, n, c)
    k = _ref_linear(context, wk).reshape(B, L2, n, c)
    v = _ref_linear(context, wv).reshape(B, L2, n, c)
    attn = jnp.einsum('binc,bjnc->bnij', q, k, precision=_HIGH) + bias
    attn = jax.nn.softmax(attn.astype(jnp.float32), axis=-1)
    o = jnp.einsum('bnij,bjnc->binc', attn, v, precision=_HIGH)
    return _ref_linear(o.reshape(B, L1, n * c), wo)


def _ref_ffn(x, w_gate, w_fc1, w_fc2):
    h1 = _ref_linear(x, w_fc1)
    hg = _ref_linear(x, w_gate)
    g = 0.5 * hg * (1.0 + jnp.tanh(math.sqrt(2.0 / math.pi)
                                   * (hg + 0.044715 * hg ** 3)))
    return _ref_linear(h1 * g, w_fc2)


def _ref_biases(params, B, S, L_enc, encoder_mask):
    pos = rel_pos_bias(params['pos_emb'], S, S)[None]                 # [1,N,S,S]
    causal = jnp.tril(jnp.ones((S, S), jnp.float32))
    self_bias = jnp.where(causal[None, None] == 0, NEG, pos)          # [1,N,S,S]
    cross_bias = jnp.where(encoder_mask[:, None, None, :] == 0, NEG,
                           jnp.zeros((B, NUM_HEADS, S, L_enc), jnp.float32))
    return self_bias, cross_bias


def t5_decoder_ref(params, ids, encoder_states, encoder_mask):
    B, S = ids.shape
    L_enc = encoder_states.shape[1]
    x = jnp.take(params['token_embedding'], ids, axis=0)
    self_bias, cross_bias = _ref_biases(params, B, S, L_enc, encoder_mask)
    for p in params['blocks']:
        h = _ref_norm(x, p['norm1'])
        x = x + _ref_attention(h, h, self_bias,
                               p['sa_q'], p['sa_k'], p['sa_v'], p['sa_o'],
                               NUM_HEADS)
        h = _ref_norm(x, p['norm2'])
        x = x + _ref_attention(h, encoder_states, cross_bias,
                               p['ca_q'], p['ca_k'], p['ca_v'], p['ca_o'],
                               NUM_HEADS)
        x = x + _ref_ffn(_ref_norm(x, p['norm3']), p['gate'], p['fc1'], p['fc2'])
    return _ref_norm(x, params['norm'])


# =============================== params init ===================================
def init_params(key):
    keys = jax.random.split(key, 3 + NUM_LAYERS)

    def nrm(k, shape, std):
        return (std * jax.random.normal(k, shape)).astype(jnp.float32)

    params = {
        'token_embedding': nrm(keys[0], (VOCAB, DIM), 1.0),
        'pos_emb': nrm(keys[1], (NUM_BUCKETS, NUM_HEADS),
                       (2 * NUM_BUCKETS * NUM_HEADS) ** -0.5),
        'norm': jnp.ones((DIM,), jnp.float32),
        'blocks': [],
    }
    for layer in range(NUM_LAYERS):
        ks = jax.random.split(keys[3 + layer], 11)
        blk = {
            'norm1': jnp.ones((DIM,), jnp.float32),
            'norm2': jnp.ones((DIM,), jnp.float32),
            'norm3': jnp.ones((DIM,), jnp.float32),
            'sa_q': nrm(ks[0], (DIM_ATTN, DIM), (DIM * DIM_ATTN) ** -0.5),
            'sa_k': nrm(ks[1], (DIM_ATTN, DIM), DIM ** -0.5),
            'sa_v': nrm(ks[2], (DIM_ATTN, DIM), DIM ** -0.5),
            'sa_o': nrm(ks[3], (DIM, DIM_ATTN), (NUM_HEADS * DIM_ATTN) ** -0.5),
            'ca_q': nrm(ks[4], (DIM_ATTN, DIM), (DIM * DIM_ATTN) ** -0.5),
            'ca_k': nrm(ks[5], (DIM_ATTN, DIM), DIM ** -0.5),
            'ca_v': nrm(ks[6], (DIM_ATTN, DIM), DIM ** -0.5),
            'ca_o': nrm(ks[7], (DIM, DIM_ATTN), (NUM_HEADS * DIM_ATTN) ** -0.5),
            'gate': nrm(ks[8], (DIM_FFN, DIM), DIM ** -0.5),
            'fc1': nrm(ks[9], (DIM_FFN, DIM), DIM ** -0.5),
            'fc2': nrm(ks[10], (DIM, DIM_FFN), DIM_FFN ** -0.5),
        }
        params['blocks'].append(blk)
    return params


# =============================== main ==========================================
if __name__ == "__main__":
    key = jax.random.PRNGKey(0)
    kp, kids, kenc = jax.random.split(key, 3)
    params = init_params(kp)
    packed = pack_params(params)     # one-time transpose / fuse / norm-fold

    B, S, L_ENC = 2, 8, 8
    ids = jax.random.randint(kids, (B, S), 0, VOCAB)
    encoder_states = jax.random.normal(kenc, (B, L_ENC, DIM), jnp.float32)
    # encoder mask [B, L_enc]: mask out the last two encoder positions
    encoder_mask = jnp.ones((B, L_ENC), jnp.int32).at[:, -2:].set(0)

    fwd = jax.jit(t5_decoder_forward)
    out = jax.block_until_ready(fwd(packed, ids, encoder_states, encoder_mask))

    ref = t5_decoder_ref(params, ids, encoder_states, encoder_mask)
    assert out.shape == (B, S, DIM), out.shape
    # kernel uses default MXU precision (vs HIGHEST/f32 reference) -> loose tol
    np.testing.assert_allclose(np.asarray(out), np.asarray(ref),
                               rtol=5e-2, atol=5e-2)
    print("KERNEL_OK")
</pallas_src>

<mosaic_0001>
module attributes {stable_mosaic.version = 11 : i64} {
  func.func @_decoder_kernel(%arg0: i32, %arg1: memref<1x8x32xf32, #tpu.memory_space<vmem>>, %arg2: memref<1x8x32xf32, #tpu.memory_space<vmem>>, %arg3: memref<4x8x8xf32, #tpu.memory_space<vmem>>, %arg4: memref<1x1x8xf32, #tpu.memory_space<vmem>>, %arg5: memref<1x32xf32, #tpu.memory_space<vmem>>, %arg6: memref<2x32x96xf32, #tpu.memory_space<vmem>>, %arg7: memref<2x32x32xf32, #tpu.memory_space<vmem>>, %arg8: memref<2x32x32xf32, #tpu.memory_space<vmem>>, %arg9: memref<32x128xf32, #tpu.memory_space<vmem>>, %arg10: memref<2x32x32xf32, #tpu.memory_space<vmem>>, %arg11: memref<2x32x128xf32, #tpu.memory_space<vmem>>, %arg12: memref<2x64x32xf32, #tpu.memory_space<vmem>>, %arg13: memref<1x8x32xf32, #tpu.memory_space<vmem>>) attributes {dimension_semantics = [#tpu.dimension_semantics<parallel>], iteration_bounds = array<i64: 2>, scalar_prefetch = 0 : i64, scratch_operands = 0 : i64, tpu.core_type = #tpu.core_type<tc>, window_params = [{transform_indices = @transform_0, window_bounds = array<i64: 1, 8, 32>}, {transform_indices = @transform_1, window_bounds = array<i64: 1, 8, 32>}, {pipeline_mode = #tpu.pipeline_mode<synchronous>, transform_indices = @transform_2, window_bounds = array<i64: 4, 8, 8>}, {transform_indices = @transform_3, window_bounds = array<i64: 1, 1, 8>}, {pipeline_mode = #tpu.pipeline_mode<synchronous>, transform_indices = @transform_4, window_bounds = array<i64: 1, 32>}, {pipeline_mode = #tpu.pipeline_mode<synchronous>, transform_indices = @transform_5, window_bounds = array<i64: 2, 32, 96>}, {pipeline_mode = #tpu.pipeline_mode<synchronous>, transform_indices = @transform_6, window_bounds = array<i64: 2, 32, 32>}, {pipeline_mode = #tpu.pipeline_mode<synchronous>, transform_indices = @transform_7, window_bounds = array<i64: 2, 32, 32>}, {pipeline_mode = #tpu.pipeline_mode<synchronous>, transform_indices = @transform_8, window_bounds = array<i64: 32, 128>}, {pipeline_mode = #tpu.pipeline_mode<synchronous>, transform_indices = @transform_9, window_bounds = array<i64: 2, 32, 32>}, {pipeline_mode = #tpu.pipeline_mode<synchronous>, transform_indices = @transform_10, window_bounds = array<i64: 2, 32, 128>}, {pipeline_mode = #tpu.pipeline_mode<synchronous>, transform_indices = @transform_11, window_bounds = array<i64: 2, 64, 32>}, {transform_indices = @transform_12, window_bounds = array<i64: 1, 8, 32>}]} {
    %c0 = arith.constant 0 : index
    %c0_0 = arith.constant 0 : index
    %c0_1 = arith.constant 0 : index
    %0 = vector.load %arg1[%c0, %c0_0, %c0_1] : memref<1x8x32xf32, #tpu.memory_space<vmem>>, vector<1x8x32xf32>
    %1 = vector.shape_cast %0 : vector<1x8x32xf32> to vector<8x32xf32>
    %c0_2 = arith.constant 0 : index
    %c0_3 = arith.constant 0 : index
    %c0_4 = arith.constant 0 : index
    %2 = vector.load %arg2[%c0_2, %c0_3, %c0_4] : memref<1x8x32xf32, #tpu.memory_space<vmem>>, vector<1x8x32xf32>
    %3 = vector.shape_cast %2 : vector<1x8x32xf32> to vector<8x32xf32>
    %c0_5 = arith.constant 0 : index
    %c0_6 = arith.constant 0 : index
    %c0_7 = arith.constant 0 : index
    %4 = vector.load %arg3[%c0_5, %c0_6, %c0_7] : memref<4x8x8xf32, #tpu.memory_space<vmem>>, vector<4x8x8xf32>
    %c0_8 = arith.constant 0 : index
    %c0_9 = arith.constant 0 : index
    %c0_10 = arith.constant 0 : index
    %5 = vector.load %arg4[%c0_8, %c0_9, %c0_10] : memref<1x1x8xf32, #tpu.memory_space<vmem>>, vector<1x1x8xf32>
    %6 = vector.shape_cast %5 : vector<1x1x8xf32> to vector<1x1x8xf32>
    %7 = vector.broadcast %6 : vector<1x1x8xf32> to vector<4x8x8xf32>
    %c0_11 = arith.constant 0 : index
    %c0_12 = arith.constant 0 : index
    %8 = vector.load %arg9[%c0_11, %c0_12] : memref<32x128xf32, #tpu.memory_space<vmem>>, vector<32x128xf32>
    %cst = arith.constant dense<0.000000e+00> : vector<8x128xf32>
    %9 = tpu.matmul %3, %8, %cst {dimension_numbers = #tpu.dot_dimension_numbers<[1], [0], [0], [1], [0, 0, 1, 1], [], []>} : vector<8x32xf32>, vector<32x128xf32>, vector<8x128xf32> -> vector<8x128xf32>
    %10 = arith.mulf %1, %1 : vector<8x32xf32>
    %cst_13 = arith.constant dense<0.000000e+00> : vector<8xf32>
    %11 = vector.multi_reduction <add>, %10, %cst_13 [1] : vector<8x32xf32> to vector<8xf32>
    %12 = vector.shape_cast %11 : vector<8xf32> to vector<8x1xf32>
    %cst_14 = arith.constant 3.200000e+01 : f32
    %13 = vector.broadcast %cst_14 : f32 to vector<8x1xf32>
    %14 = arith.divf %12, %13 : vector<8x1xf32>
    %cst_15 = arith.constant 9.99999997E-7 : f32
    %15 = vector.broadcast %cst_15 : f32 to vector<8x1xf32>
    %16 = arith.addf %14, %15 : vector<8x1xf32>
    %17 = math.rsqrt %16 : vector<8x1xf32>
    %18 = vector.broadcast %17 : vector<8x1xf32> to vector<8x32xf32>
    %19 = arith.mulf %1, %18 : vector<8x32xf32>
    %c0_16 = arith.constant 0 : index
    %c0_17 = arith.constant 0 : index
    %c0_18 = arith.constant 0 : index
    %20 = vector.load %arg6[%c0_16, %c0_17, %c0_18] : memref<2x32x96xf32, #tpu.memory_space<vmem>>, vector<1x32x96xf32>
    %21 = vector.shape_cast %20 : vector<1x32x96xf32> to vector<32x96xf32>
    %cst_19 = arith.constant dense<0.000000e+00> : vector<8x96xf32>
    %22 = tpu.matmul %19, %21, %cst_19 {dimension_numbers = #tpu.dot_dimension_numbers<[1], [0], [0], [1], [0, 0, 1, 1], [], []>} : vector<8x32xf32>, vector<32x96xf32>, vector<8x96xf32> -> vector<8x96xf32>
    %23 = vector.extract_strided_slice %22 {offsets = [0, 0], sizes = [8, 32], strides = [1, 1]} : vector<8x96xf32> to vector<8x32xf32>
    %24 = vector.extract_strided_slice %22 {offsets = [0, 32], sizes = [8, 32], strides = [1, 1]} : vector<8x96xf32> to vector<8x32xf32>
    %25 = vector.extract_strided_slice %22 {offsets = [0, 64], sizes = [8, 32], strides = [1, 1]} : vector<8x96xf32> to vector<8x32xf32>
    %c0_20 = arith.constant 0 : index
    %c0_21 = arith.constant 0 : index
    %c0_22 = arith.constant 0 : index
    %26 = vector.load %arg7[%c0_20, %c0_21, %c0_22] : memref<2x32x32xf32, #tpu.memory_space<vmem>>, vector<1x32x32xf32>
    %27 = vector.shape_cast %26 : vector<1x32x32xf32> to vector<32x32xf32>
    %28 = vector.extract_strided_slice %23 {offsets = [0, 0], sizes = [8, 8], strides = [1, 1]} : vector<8x32xf32> to vector<8x8xf32>
    %29 = vector.extract_strided_slice %24 {offsets = [0, 0], sizes = [8, 8], strides = [1, 1]} : vector<8x32xf32> to vector<8x8xf32>
    "tpu.trace_start"() <{level = 10 : i32, message = "qc,kc->qk"}> : () -> ()
    %cst_23 = arith.constant dense<0.000000e+00> : vector<8x8xf32>
    %30 = tpu.matmul %28, %29, %cst_23 {dimension_numbers = #tpu.dot_dimension_numbers<[1], [1], [0], [0], [0, 0, 1, 0], [], []>} : vector<8x8xf32>, vector<8x8xf32>, vector<8x8xf32> -> vector<8x8xf32>
    "tpu.trace_stop"() : () -> ()
    %31 = vector.extract_strided_slice %4 {offsets = [0, 0, 0], sizes = [1, 8, 8], strides = [1, 1, 1]} : vector<4x8x8xf32> to vector<1x8x8xf32>
    %32 = vector.shape_cast %31 : vector<1x8x8xf32> to vector<8x8xf32>
    %33 = arith.addf %30, %32 : vector<8x8xf32>
    %cst_24 = arith.constant dense<0xFF800000> : vector<8xf32>
    %34 = vector.multi_reduction <maximumf>, %33, %cst_24 [1] : vector<8x8xf32> to vector<8xf32>
    %35 = vector.shape_cast %34 : vector<8xf32> to vector<8x1xf32>
    %36 = vector.broadcast %35 : vector<8x1xf32> to vector<8x8xf32>
    %37 = arith.subf %33, %36 : vector<8x8xf32>
    %38 = math.exp %37 : vector<8x8xf32>
    %cst_25 = arith.constant dense<0.000000e+00> : vector<8xf32>
    %39 = vector.multi_reduction <add>, %38, %cst_25 [1] : vector<8x8xf32> to vector<8xf32>
    %40 = vector.shape_cast %39 : vector<8xf32> to vector<8x1xf32>
    %41 = vector.broadcast %40 : vector<8x1xf32> to vector<8x8xf32>
    %42 = arith.divf %38, %41 : vector<8x8xf32>
    %43 = vector.extract_strided_slice %25 {offsets = [0, 0], sizes = [8, 8], strides = [1, 1]} : vector<8x32xf32> to vector<8x8xf32>
    %cst_26 = arith.constant dense<0.000000e+00> : vector<8x8xf32>
    %44 = tpu.matmul %42, %43, %cst_26 {dimension_numbers = #tpu.dot_dimension_numbers<[1], [0], [0], [1], [0, 0, 1, 1], [], []>} : vector<8x8xf32>, vector<8x8xf32>, vector<8x8xf32> -> vector<8x8xf32>
    %45 = vector.extract_strided_slice %23 {offsets = [0, 8], sizes = [8, 8], strides = [1, 1]} : vector<8x32xf32> to vector<8x8xf32>
    %46 = vector.extract_strided_slice %24 {offsets = [0, 8], sizes = [8, 8], strides = [1, 1]} : vector<8x32xf32> to vector<8x8xf32>
    "tpu.trace_start"() <{level = 10 : i32, message = "qc,kc->qk"}> : () -> ()
    %cst_27 = arith.constant dense<0.000000e+00> : vector<8x8xf32>
    %47 = tpu.matmul %45, %46, %cst_27 {dimension_numbers = #tpu.dot_dimension_numbers<[1], [1], [0], [0], [0, 0, 1, 0], [], []>} : vector<8x8xf32>, vector<8x8xf32>, vector<8x8xf32> -> vector<8x8xf32>
    "tpu.trace_stop"() : () -> ()
    %48 = vector.extract_strided_slice %4 {offsets = [1, 0, 0], sizes = [1, 8, 8], strides = [1, 1, 1]} : vector<4x8x8xf32> to vector<1x8x8xf32>
    %49 = vector.shape_cast %48 : vector<1x8x8xf32> to vector<8x8xf32>
    %50 = arith.addf %47, %49 : vector<8x8xf32>
    %cst_28 = arith.constant dense<0xFF800000> : vector<8xf32>
    %51 = vector.multi_reduction <maximumf>, %50, %cst_28 [1] : vector<8x8xf32> to vector<8xf32>
    %52 = vector.shape_cast %51 : vector<8xf32> to vector<8x1xf32>
    %53 = vector.broadcast %52 : vector<8x1xf32> to vector<8x8xf32>
    %54 = arith.subf %50, %53 : vector<8x8xf32>
    %55 = math.exp %54 : vector<8x8xf32>
    %cst_29 = arith.constant dense<0.000000e+00> : vector<8xf32>
    %56 = vector.multi_reduction <add>, %55, %cst_29 [1] : vector<8x8xf32> to vector<8xf32>
    %57 = vector.shape_cast %56 : vector<8xf32> to vector<8x1xf32>
    %58 = vector.broadcast %57 : vector<8x1xf32> to vector<8x8xf32>
    %59 = arith.divf %55, %58 : vector<8x8xf32>
    %60 = vector.extract_strided_slice %25 {offsets = [0, 8], sizes = [8, 8], strides = [1, 1]} : vector<8x32xf32> to vector<8x8xf32>
    %cst_30 = arith.constant dense<0.000000e+00> : vector<8x8xf32>
    %61 = tpu.matmul %59, %60, %cst_30 {dimension_numbers = #tpu.dot_dimension_numbers<[1], [0], [0], [1], [0, 0, 1, 1], [], []>} : vector<8x8xf32>, vector<8x8xf32>, vector<8x8xf32> -> vector<8x8xf32>
    %62 = vector.extract_strided_slice %23 {offsets = [0, 16], sizes = [8, 8], strides = [1, 1]} : vector<8x32xf32> to vector<8x8xf32>
    %63 = vector.extract_strided_slice %24 {offsets = [0, 16], sizes = [8, 8], strides = [1, 1]} : vector<8x32xf32> to vector<8x8xf32>
    "tpu.trace_start"() <{level = 10 : i32, message = "qc,kc->qk"}> : () -> ()
    %cst_31 = arith.constant dense<0.000000e+00> : vector<8x8xf32>
    %64 = tpu.matmul %62, %63, %cst_31 {dimension_numbers = #tpu.dot_dimension_numbers<[1], [1], [0], [0], [0, 0, 1, 0], [], []>} : vector<8x8xf32>, vector<8x8xf32>, vector<8x8xf32> -> vector<8x8xf32>
    "tpu.trace_stop"() : () -> ()
    %65 = vector.extract_strided_slice %4 {offsets = [2, 0, 0], sizes = [1, 8, 8], strides = [1, 1, 1]} : vector<4x8x8xf32> to vector<1x8x8xf32>
    %66 = vector.shape_cast %65 : vector<1x8x8xf32> to vector<8x8xf32>
    %67 = arith.addf %64, %66 : vector<8x8xf32>
    %cst_32 = arith.constant dense<0xFF800000> : vector<8xf32>
    %68 = vector.multi_reduction <maximumf>, %67, %cst_32 [1] : vector<8x8xf32> to vector<8xf32>
    %69 = vector.shape_cast %68 : vector<8xf32> to vector<8x1xf32>
    %70 = vector.broadcast %69 : vector<8x1xf32> to vector<8x8xf32>
    %71 = arith.subf %67, %70 : vector<8x8xf32>
    %72 = math.exp %71 : vector<8x8xf32>
    %cst_33 = arith.constant dense<0.000000e+00> : vector<8xf32>
    %73 = vector.multi_reduction <add>, %72, %cst_33 [1] : vector<8x8xf32> to vector<8xf32>
    %74 = vector.shape_cast %73 : vector<8xf32> to vector<8x1xf32>
    %75 = vector.broadcast %74 : vector<8x1xf32> to vector<8x8xf32>
    %76 = arith.divf %72, %75 : vector<8x8xf32>
    %77 = vector.extract_strided_slice %25 {offsets = [0, 16], sizes = [8, 8], strides = [1, 1]} : vector<8x32xf32> to vector<8x8xf32>
    %cst_34 = arith.constant dense<0.000000e+00> : vector<8x8xf32>
    %78 = tpu.matmul %76, %77, %cst_34 {dimension_numbers = #tpu.dot_dimension_numbers<[1], [0], [0], [1], [0, 0, 1, 1], [], []>} : vector<8x8xf32>, vector<8x8xf32>, vector<8x8xf32> -> vector<8x8xf32>
    %79 = vector.extract_strided_slice %23 {offsets = [0, 24], sizes = [8, 8], strides = [1, 1]} : vector<8x32xf32> to vector<8x8xf32>
    %80 = vector.extract_strided_slice %24 {offsets = [0, 24], sizes = [8, 8], strides = [1, 1]} : vector<8x32xf32> to vector<8x8xf32>
    "tpu.trace_start"() <{level = 10 : i32, message = "qc,kc->qk"}> : () -> ()
    %cst_35 = arith.constant dense<0.000000e+00> : vector<8x8xf32>
    %81 = tpu.matmul %79, %80, %cst_35 {dimension_numbers = #tpu.dot_dimension_numbers<[1], [1], [0], [0], [0, 0, 1, 0], [], []>} : vector<8x8xf32>, vector<8x8xf32>, vector<8x8xf32> -> vector<8x8xf32>
    "tpu.trace_stop"() : () -> ()
    %82 = vector.extract_strided_slice %4 {offsets = [3, 0, 0], sizes = [1, 8, 8], strides = [1, 1, 1]} : vector<4x8x8xf32> to vector<1x8x8xf32>
    %83 = vector.shape_cast %82 : vector<1x8x8xf32> to vector<8x8xf32>
    %84 = arith.addf %81, %83 : vector<8x8xf32>
    %cst_36 = arith.constant dense<0xFF800000> : vector<8xf32>
    %85 = vector.multi_reduction <maximumf>, %84, %cst_36 [1] : vector<8x8xf32> to vector<8xf32>
    %86 = vector.shape_cast %85 : vector<8xf32> to vector<8x1xf32>
    %87 = vector.broadcast %86 : vector<8x1xf32> to vector<8x8xf32>
    %88 = arith.subf %84, %87 : vector<8x8xf32>
    %89 = math.exp %88 : vector<8x8xf32>
    %cst_37 = arith.constant dense<0.000000e+00> : vector<8xf32>
    %90 = vector.multi_reduction <add>, %89, %cst_37 [1] : vector<8x8xf32> to vector<8xf32>
    %91 = vector.shape_cast %90 : vector<8xf32> to vector<8x1xf32>
    %92 = vector.broadcast %91 : vector<8x1xf32> to vector<8x8xf32>
    %93 = arith.divf %89, %92 : vector<8x8xf32>
    %94 = vector.extract_strided_slice %25 {offsets = [0, 24], sizes = [8, 8], strides = [1, 1]} : vector<8x32xf32> to vector<8x8xf32>
    %cst_38 = arith.constant dense<0.000000e+00> : vector<8x8xf32>
    %95 = tpu.matmul %93, %94, %cst_38 {dimension_numbers = #tpu.dot_dimension_numbers<[1], [0], [0], [1], [0, 0, 1, 1], [], []>} : vector<8x8xf32>, vector<8x8xf32>, vector<8x8xf32> -> vector<8x8xf32>
    %96 = tpu.concatenate %44, %61, %78, %95 in 1 : vector<8x8xf32>, vector<8x8xf32>, vector<8x8xf32>, vector<8x8xf32> -> vector<8x32xf32>
    %cst_39 = arith.constant dense<0.000000e+00> : vector<8x32xf32>
    %97 = tpu.matmul %96, %27, %cst_39 {dimension_numbers = #tpu.dot_dimension_numbers<[1], [0], [0], [1], [0, 0, 1, 1], [], []>} : vector<8x32xf32>, vector<32x32xf32>, vector<8x32xf32> -> vector<8x32xf32>
    %98 = arith.addf %1, %97 : vector<8x32xf32>
    %99 = arith.mulf %98, %98 : vector<8x32xf32>
    %cst_40 = arith.constant dense<0.000000e+00> : vector<8xf32>
    %100 = vector.multi_reduction <add>, %99, %cst_40 [1] : vector<8x32xf32> to vector<8xf32>
    %101 = vector.shape_cast %100 : vector<8xf32> to vector<8x1xf32>
    %cst_41 = arith.constant 3.200000e+01 : f32
    %102 = vector.broadcast %cst_41 : f32 to vector<8x1xf32>
    %103 = arith.divf %101, %102 : vector<8x1xf32>
    %cst_42 = arith.constant 9.99999997E-7 : f32
    %104 = vector.broadcast %cst_42 : f32 to vector<8x1xf32>
    %105 = arith.addf %103, %104 : vector<8x1xf32>
    %106 = math.rsqrt %105 : vector<8x1xf32>
    %107 = vector.broadcast %106 : vector<8x1xf32> to vector<8x32xf32>
    %108 = arith.mulf %98, %107 : vector<8x32xf32>
    %c0_43 = arith.constant 0 : index
    %c0_44 = arith.constant 0 : index
    %c0_45 = arith.constant 0 : index
    %109 = vector.load %arg8[%c0_43, %c0_44, %c0_45] : memref<2x32x32xf32, #tpu.memory_space<vmem>>, vector<1x32x32xf32>
    %110 = vector.shape_cast %109 : vector<1x32x32xf32> to vector<32x32xf32>
    %cst_46 = arith.constant dense<0.000000e+00> : vector<8x32xf32>
    %111 = tpu.matmul %108, %110, %cst_46 {dimension_numbers = #tpu.dot_dimension_numbers<[1], [0], [0], [1], [0, 0, 1, 1], [], []>} : vector<8x32xf32>, vector<32x32xf32>, vector<8x32xf32> -> vector<8x32xf32>
    %112 = vector.extract_strided_slice %9 {offsets = [0, 0], sizes = [8, 32], strides = [1, 1]} : vector<8x128xf32> to vector<8x32xf32>
    %113 = vector.extract_strided_slice %9 {offsets = [0, 32], sizes = [8, 32], strides = [1, 1]} : vector<8x128xf32> to vector<8x32xf32>
    %c0_47 = arith.constant 0 : index
    %c0_48 = arith.constant 0 : index
    %c0_49 = arith.constant 0 : index
    %114 = vector.load %arg10[%c0_47, %c0_48, %c0_49] : memref<2x32x32xf32, #tpu.memory_space<vmem>>, vector<1x32x32xf32>
    %115 = vector.shape_cast %114 : vector<1x32x32xf32> to vector<32x32xf32>
    %116 = vector.extract_strided_slice %111 {offsets = [0, 0], sizes = [8, 8], strides = [1, 1]} : vector<8x32xf32> to vector<8x8xf32>
    %117 = vector.extract_strided_slice %112 {offsets = [0, 0], sizes = [8, 8], strides = [1, 1]} : vector<8x32xf32> to vector<8x8xf32>
    "tpu.trace_start"() <{level = 10 : i32, message = "qc,kc->qk"}> : () -> ()
    %cst_50 = arith.constant dense<0.000000e+00> : vector<8x8xf32>
    %118 = tpu.matmul %116, %117, %cst_50 {dimension_numbers = #tpu.dot_dimension_numbers<[1], [1], [0], [0], [0, 0, 1, 0], [], []>} : vector<8x8xf32>, vector<8x8xf32>, vector<8x8xf32> -> vector<8x8xf32>
    "tpu.trace_stop"() : () -> ()
    %119 = vector.extract_strided_slice %7 {offsets = [0, 0, 0], sizes = [1, 8, 8], strides = [1, 1, 1]} : vector<4x8x8xf32> to vector<1x8x8xf32>
    %120 = vector.shape_cast %119 : vector<1x8x8xf32> to vector<8x8xf32>
    %121 = arith.addf %118, %120 : vector<8x8xf32>
    %cst_51 = arith.constant dense<0xFF800000> : vector<8xf32>
    %122 = vector.multi_reduction <maximumf>, %121, %cst_51 [1] : vector<8x8xf32> to vector<8xf32>
    %123 = vector.shape_cast %122 : vector<8xf32> to vector<8x1xf32>
    %124 = vector.broadcast %123 : vector<8x1xf32> to vector<8x8xf32>
    %125 = arith.subf %121, %124 : vector<8x8xf32>
    %126 = math.exp %125 : vector<8x8xf32>
    %cst_52 = arith.constant dense<0.000000e+00> : vector<8xf32>
    %127 = vector.multi_reduction <add>, %126, %cst_52 [1] : vector<8x8xf32> to vector<8xf32>
    %128 = vector.shape_cast %127 : vector<8xf32> to vector<8x1xf32>
    %129 = vector.broadcast %128 : vector<8x1xf32> to vector<8x8xf32>
    %130 = arith.divf %126, %129 : vector<8x8xf32>
    %131 = vector.extract_strided_slice %113 {offsets = [0, 0], sizes = [8, 8], strides = [1, 1]} : vector<8x32xf32> to vector<8x8xf32>
    %cst_53 = arith.constant dense<0.000000e+00> : vector<8x8xf32>
    %132 = tpu.matmul %130, %131, %cst_53 {dimension_numbers = #tpu.dot_dimension_numbers<[1], [0], [0], [1], [0, 0, 1, 1], [], []>} : vector<8x8xf32>, vector<8x8xf32>, vector<8x8xf32> -> vector<8x8xf32>
    %133 = vector.extract_strided_slice %111 {offsets = [0, 8], sizes = [8, 8], strides = [1, 1]} : vector<8x32xf32> to vector<8x8xf32>
    %134 = vector.extract_strided_slice %112 {offsets = [0, 8], sizes = [8, 8], strides = [1, 1]} : vector<8x32xf32> to vector<8x8xf32>
    "tpu.trace_start"() <{level = 10 : i32, message = "qc,kc->qk"}> : () -> ()
    %cst_54 = arith.constant dense<0.000000e+00> : vector<8x8xf32>
    %135 = tpu.matmul %133, %134, %cst_54 {dimension_numbers = #tpu.dot_dimension_numbers<[1], [1], [0], [0], [0, 0, 1, 0], [], []>} : vector<8x8xf32>, vector<8x8xf32>, vector<8x8xf32> -> vector<8x8xf32>
    "tpu.trace_stop"() : () -> ()
    %136 = vector.extract_strided_slice %7 {offsets = [1, 0, 0], sizes = [1, 8, 8], strides = [1, 1, 1]} : vector<4x8x8xf32> to vector<1x8x8xf32>
    %137 = vector.shape_cast %136 : vector<1x8x8xf32> to vector<8x8xf32>
    %138 = arith.addf %135, %137 : vector<8x8xf32>
    %cst_55 = arith.constant dense<0xFF800000> : vector<8xf32>
    %139 = vector.multi_reduction <maximumf>, %138, %cst_55 [1] : vector<8x8xf32> to vector<8xf32>
    %140 = vector.shape_cast %139 : vector<8xf32> to vector<8x1xf32>
    %141 = vector.broadcast %140 : vector<8x1xf32> to vector<8x8xf32>
    %142 = arith.subf %138, %141 : vector<8x8xf32>
    %143 = math.exp %142 : vector<8x8xf32>
    %cst_56 = arith.constant dense<0.000000e+00> : vector<8xf32>
    %144 = vector.multi_reduction <add>, %143, %cst_56 [1] : vector<8x8xf32> to vector<8xf32>
    %145 = vector.shape_cast %144 : vector<8xf32> to vector<8x1xf32>
    %146 = vector.broadcast %145 : vector<8x1xf32> to vector<8x8xf32>
    %147 = arith.divf %143, %146 : vector<8x8xf32>
    %148 = vector.extract_strided_slice %113 {offsets = [0, 8], sizes = [8, 8], strides = [1, 1]} : vector<8x32xf32> to vector<8x8xf32>
    %cst_57 = arith.constant dense<0.000000e+00> : vector<8x8xf32>
    %149 = tpu.matmul %147, %148, %cst_57 {dimension_numbers = #tpu.dot_dimension_numbers<[1], [0], [0], [1], [0, 0, 1, 1], [], []>} : vector<8x8xf32>, vector<8x8xf32>, vector<8x8xf32> -> vector<8x8xf32>
    %150 = vector.extract_strided_slice %111 {offsets = [0, 16], sizes = [8, 8], strides = [1, 1]} : vector<8x32xf32> to vector<8x8xf32>
    %151 = vector.extract_strided_slice %112 {offsets = [0, 16], sizes = [8, 8], strides = [1, 1]} : vector<8x32xf32> to vector<8x8xf32>
    "tpu.trace_start"() <{level = 10 : i32, message = "qc,kc->qk"}> : () -> ()
    %cst_58 = arith.constant dense<0.000000e+00> : vector<8x8xf32>
    %152 = tpu.matmul %150, %151, %cst_58 {dimension_numbers = #tpu.dot_dimension_numbers<[1], [1], [0], [0], [0, 0, 1, 0], [], []>} : vector<8x8xf32>, vector<8x8xf32>, vector<8x8xf32> -> vector<8x8xf32>
    "tpu.trace_stop"() : () -> ()
    %153 = vector.extract_strided_slice %7 {offsets = [2, 0, 0], sizes = [1, 8, 8], strides = [1, 1, 1]} : vector<4x8x8xf32> to vector<1x8x8xf32>
    %154 = vector.shape_cast %153 : vector<1x8x8xf32> to vector<8x8xf32>
    %155 = arith.addf %152, %154 : vector<8x8xf32>
    %cst_59 = arith.constant dense<0xFF800000> : vector<8xf32>
    %156 = vector.multi_reduction <maximumf>, %155, %cst_59 [1] : vector<8x8xf32> to vector<8xf32>
    %157 = vector.shape_cast %156 : vector<8xf32> to vector<8x1xf32>
    %158 = vector.broadcast %157 : vector<8x1xf32> to vector<8x8xf32>
    %159 = arith.subf %155, %158 : vector<8x8xf32>
    %160 = math.exp %159 : vector<8x8xf32>
    %cst_60 = arith.constant dense<0.000000e+00> : vector<8xf32>
    %161 = vector.multi_reduction <add>, %160, %cst_60 [1] : vector<8x8xf32> to vector<8xf32>
    %162 = vector.shape_cast %161 : vector<8xf32> to vector<8x1xf32>
    %163 = vector.broadcast %162 : vector<8x1xf32> to vector<8x8xf32>
    %164 = arith.divf %160, %163 : vector<8x8xf32>
    %165 = vector.extract_strided_slice %113 {offsets = [0, 16], sizes = [8, 8], strides = [1, 1]} : vector<8x32xf32> to vector<8x8xf32>
    %cst_61 = arith.constant dense<0.000000e+00> : vector<8x8xf32>
    %166 = tpu.matmul %164, %165, %cst_61 {dimension_numbers = #tpu.dot_dimension_numbers<[1], [0], [0], [1], [0, 0, 1, 1], [], []>} : vector<8x8xf32>, vector<8x8xf32>, vector<8x8xf32> -> vector<8x8xf32>
    %167 = vector.extract_strided_slice %111 {offsets = [0, 24], sizes = [8, 8], strides = [1, 1]} : vector<8x32xf32> to vector<8x8xf32>
    %168 = vector.extract_strided_slice %112 {offsets = [0, 24], sizes = [8, 8], strides = [1, 1]} : vector<8x32xf32> to vector<8x8xf32>
    "tpu.trace_start"() <{level = 10 : i32, message = "qc,kc->qk"}> : () -> ()
    %cst_62 = arith.constant dense<0.000000e+00> : vector<8x8xf32>
    %169 = tpu.matmul %167, %168, %cst_62 {dimension_numbers = #tpu.dot_dimension_numbers<[1], [1], [0], [0], [0, 0, 1, 0], [], []>} : vector<8x8xf32>, vector<8x8xf32>, vector<8x8xf32> -> vector<8x8xf32>
    "tpu.trace_stop"() : () -> ()
    %170 = vector.extract_strided_slice %7 {offsets = [3, 0, 0], sizes = [1, 8, 8], strides = [1, 1, 1]} : vector<4x8x8xf32> to vector<1x8x8xf32>
    %171 = vector.shape_cast %170 : vector<1x8x8xf32> to vector<8x8xf32>
    %172 = arith.addf %169, %171 : vector<8x8xf32>
    %cst_63 = arith.constant dense<0xFF800000> : vector<8xf32>
    %173 = vector.multi_reduction <maximumf>, %172, %cst_63 [1] : vector<8x8xf32> to vector<8xf32>
    %174 = vector.shape_cast %173 : vector<8xf32> to vector<8x1xf32>
    %175 = vector.broadcast %174 : vector<8x1xf32> to vector<8x8xf32>
    %176 = arith.subf %172, %175 : vector<8x8xf32>
    %177 = math.exp %176 : vector<8x8xf32>
    %cst_64 = arith.constant dense<0.000000e+00> : vector<8xf32>
    %178 = vector.multi_reduction <add>, %177, %cst_64 [1] : vector<8x8xf32> to vector<8xf32>
    %179 = vector.shape_cast %178 : vector<8xf32> to vector<8x1xf32>
    %180 = vector.broadcast %179 : vector<8x1xf32> to vector<8x8xf32>
    %181 = arith.divf %177, %180 : vector<8x8xf32>
    %182 = vector.extract_strided_slice %113 {offsets = [0, 24], sizes = [8, 8], strides = [1, 1]} : vector<8x32xf32> to vector<8x8xf32>
    %cst_65 = arith.constant dense<0.000000e+00> : vector<8x8xf32>
    %183 = tpu.matmul %181, %182, %cst_65 {dimension_numbers = #tpu.dot_dimension_numbers<[1], [0], [0], [1], [0, 0, 1, 1], [], []>} : vector<8x8xf32>, vector<8x8xf32>, vector<8x8xf32> -> vector<8x8xf32>
    %184 = tpu.concatenate %132, %149, %166, %183 in 1 : vector<8x8xf32>, vector<8x8xf32>, vector<8x8xf32>, vector<8x8xf32> -> vector<8x32xf32>
    %cst_66 = arith.constant dense<0.000000e+00> : vector<8x32xf32>
    %185 = tpu.matmul %184, %115, %cst_66 {dimension_numbers = #tpu.dot_dimension_numbers<[1], [0], [0], [1], [0, 0, 1, 1], [], []>} : vector<8x32xf32>, vector<32x32xf32>, vector<8x32xf32> -> vector<8x32xf32>
    %186 = arith.addf %98, %185 : vector<8x32xf32>
    %187 = arith.mulf %186, %186 : vector<8x32xf32>
    %cst_67 = arith.constant dense<0.000000e+00> : vector<8xf32>
    %188 = vector.multi_reduction <add>, %187, %cst_67 [1] : vector<8x32xf32> to vector<8xf32>
    %189 = vector.shape_cast %188 : vector<8xf32> to vector<8x1xf32>
    %cst_68 = arith.constant 3.200000e+01 : f32
    %190 = vector.broadcast %cst_68 : f32 to vector<8x1xf32>
    %191 = arith.divf %189, %190 : vector<8x1xf32>
    %cst_69 = arith.constant 9.99999997E-7 : f32
    %192 = vector.broadcast %cst_69 : f32 to vector<8x1xf32>
    %193 = arith.addf %191, %192 : vector<8x1xf32>
    %194 = math.rsqrt %193 : vector<8x1xf32>
    %195 = vector.broadcast %194 : vector<8x1xf32> to vector<8x32xf32>
    %196 = arith.mulf %186, %195 : vector<8x32xf32>
    %c0_70 = arith.constant 0 : index
    %c0_71 = arith.constant 0 : index
    %c0_72 = arith.constant 0 : index
    %197 = vector.load %arg11[%c0_70, %c0_71, %c0_72] : memref<2x32x128xf32, #tpu.memory_space<vmem>>, vector<1x32x128xf32>
    %198 = vector.shape_cast %197 : vector<1x32x128xf32> to vector<32x128xf32>
    %cst_73 = arith.constant dense<0.000000e+00> : vector<8x128xf32>
    %199 = tpu.matmul %196, %198, %cst_73 {dimension_numbers = #tpu.dot_dimension_numbers<[1], [0], [0], [1], [0, 0, 1, 1], [], []>} : vector<8x32xf32>, vector<32x128xf32>, vector<8x128xf32> -> vector<8x128xf32>
    %200 = vector.extract_strided_slice %199 {offsets = [0, 0], sizes = [8, 64], strides = [1, 1]} : vector<8x128xf32> to vector<8x64xf32>
    %201 = vector.extract_strided_slice %199 {offsets = [0, 64], sizes = [8, 64], strides = [1, 1]} : vector<8x128xf32> to vector<8x64xf32>
    %cst_74 = arith.constant 5.000000e-01 : f32
    %202 = vector.broadcast %cst_74 : f32 to vector<8x64xf32>
    %203 = arith.mulf %202, %201 : vector<8x64xf32>
    %cst_75 = arith.constant 4.471500e-02 : f32
    %204 = vector.broadcast %cst_75 : f32 to vector<8x64xf32>
    %205 = arith.mulf %204, %201 : vector<8x64xf32>
    %206 = arith.mulf %205, %201 : vector<8x64xf32>
    %207 = arith.mulf %206, %201 : vector<8x64xf32>
    %208 = arith.addf %201, %207 : vector<8x64xf32>
    %cst_76 = arith.constant 0.797884583 : f32
    %209 = vector.broadcast %cst_76 : f32 to vector<8x64xf32>
    %210 = arith.mulf %209, %208 : vector<8x64xf32>
    %211 = math.tanh %210 : vector<8x64xf32>
    %cst_77 = arith.constant 1.000000e+00 : f32
    %212 = vector.broadcast %cst_77 : f32 to vector<8x64xf32>
    %213 = arith.addf %212, %211 : vector<8x64xf32>
    %214 = arith.mulf %203, %213 : vector<8x64xf32>
    %215 = arith.mulf %200, %214 : vector<8x64xf32>
    %c0_78 = arith.constant 0 : index
    %c0_79 = arith.constant 0 : index
    %c0_80 = arith.constant 0 : index
    %216 = vector.load %arg12[%c0_78, %c0_79, %c0_80] : memref<2x64x32xf32, #tpu.memory_space<vmem>>, vector<1x64x32xf32>
    %217 = vector.shape_cast %216 : vector<1x64x32xf32> to vector<64x32xf32>
    %cst_81 = arith.constant dense<0.000000e+00> : vector<8x32xf32>
    %218 = tpu.matmul %215, %217, %cst_81 {dimension_numbers = #tpu.dot_dimension_numbers<[1], [0], [0], [1], [0, 0, 1, 1], [], []>} : vector<8x64xf32>, vector<64x32xf32>, vector<8x32xf32> -> vector<8x32xf32>
    %219 = arith.addf %186, %218 : vector<8x32xf32>
    %220 = arith.mulf %219, %219 : vector<8x32xf32>
    %cst_82 = arith.constant dense<0.000000e+00> : vector<8xf32>
    %221 = vector.multi_reduction <add>, %220, %cst_82 [1] : vector<8x32xf32> to vector<8xf32>
    %222 = vector.shape_cast %221 : vector<8xf32> to vector<8x1xf32>
    %cst_83 = arith.constant 3.200000e+01 : f32
    %223 = vector.broadcast %cst_83 : f32 to vector<8x1xf32>
    %224 = arith.divf %222, %223 : vector<8x1xf32>
    %cst_84 = arith.constant 9.99999997E-7 : f32
    %225 = vector.broadcast %cst_84 : f32 to vector<8x1xf32>
    %226 = arith.addf %224, %225 : vector<8x1xf32>
    %227 = math.rsqrt %226 : vector<8x1xf32>
    %228 = vector.broadcast %227 : vector<8x1xf32> to vector<8x32xf32>
    %229 = arith.mulf %219, %228 : vector<8x32xf32>
    %c1 = arith.constant 1 : index
    %c0_85 = arith.constant 0 : index
    %c0_86 = arith.constant 0 : index
    %230 = vector.load %arg6[%c1, %c0_85, %c0_86] : memref<2x32x96xf32, #tpu.memory_space<vmem>>, vector<1x32x96xf32>
    %231 = vector.shape_cast %230 : vector<1x32x96xf32> to vector<32x96xf32>
    %cst_87 = arith.constant dense<0.000000e+00> : vector<8x96xf32>
    %232 = tpu.matmul %229, %231, %cst_87 {dimension_numbers = #tpu.dot_dimension_numbers<[1], [0], [0], [1], [0, 0, 1, 1], [], []>} : vector<8x32xf32>, vector<32x96xf32>, vector<8x96xf32> -> vector<8x96xf32>
    %233 = vector.extract_strided_slice %232 {offsets = [0, 0], sizes = [8, 32], strides = [1, 1]} : vector<8x96xf32> to vector<8x32xf32>
    %234 = vector.extract_strided_slice %232 {offsets = [0, 32], sizes = [8, 32], strides = [1, 1]} : vector<8x96xf32> to vector<8x32xf32>
    %235 = vector.extract_strided_slice %232 {offsets = [0, 64], sizes = [8, 32], strides = [1, 1]} : vector<8x96xf32> to vector<8x32xf32>
    %c1_88 = arith.constant 1 : index
    %c0_89 = arith.constant 0 : index
    %c0_90 = arith.constant 0 : index
    %236 = vector.load %arg7[%c1_88, %c0_89, %c0_90] : memref<2x32x32xf32, #tpu.memory_space<vmem>>, vector<1x32x32xf32>
    %237 = vector.shape_cast %236 : vector<1x32x32xf32> to vector<32x32xf32>
    %238 = vector.extract_strided_slice %233 {offsets = [0, 0], sizes = [8, 8], strides = [1, 1]} : vector<8x32xf32> to vector<8x8xf32>
    %239 = vector.extract_strided_slice %234 {offsets = [0, 0], sizes = [8, 8], strides = [1, 1]} : vector<8x32xf32> to vector<8x8xf32>
    "tpu.trace_start"() <{level = 10 : i32, message = "qc,kc->qk"}> : () -> ()
    %cst_91 = arith.constant dense<0.000000e+00> : vector<8x8xf32>
    %240 = tpu.matmul %238, %239, %cst_91 {dimension_numbers = #tpu.dot_dimension_numbers<[1], [1], [0], [0], [0, 0, 1, 0], [], []>} : vector<8x8xf32>, vector<8x8xf32>, vector<8x8xf32> -> vector<8x8xf32>
    "tpu.trace_stop"() : () -> ()
    %241 = vector.extract_strided_slice %4 {offsets = [0, 0, 0], sizes = [1, 8, 8], strides = [1, 1, 1]} : vector<4x8x8xf32> to vector<1x8x8xf32>
    %242 = vector.shape_cast %241 : vector<1x8x8xf32> to vector<8x8xf32>
    %243 = arith.addf %240, %242 : vector<8x8xf32>
    %cst_92 = arith.constant dense<0xFF800000> : vector<8xf32>
    %244 = vector.multi_reduction <maximumf>, %243, %cst_92 [1] : vector<8x8xf32> to vector<8xf32>
    %245 = vector.shape_cast %244 : vector<8xf32> to vector<8x1xf32>
    %246 = vector.broadcast %245 : vector<8x1xf32> to vector<8x8xf32>
    %247 = arith.subf %243, %246 : vector<8x8xf32>
    %248 = math.exp %247 : vector<8x8xf32>
    %cst_93 = arith.constant dense<0.000000e+00> : vector<8xf32>
    %249 = vector.multi_reduction <add>, %248, %cst_93 [1] : vector<8x8xf32> to vector<8xf32>
    %250 = vector.shape_cast %249 : vector<8xf32> to vector<8x1xf32>
    %251 = vector.broadcast %250 : vector<8x1xf32> to vector<8x8xf32>
    %252 = arith.divf %248, %251 : vector<8x8xf32>
    %253 = vector.extract_strided_slice %235 {offsets = [0, 0], sizes = [8, 8], strides = [1, 1]} : vector<8x32xf32> to vector<8x8xf32>
    %cst_94 = arith.constant dense<0.000000e+00> : vector<8x8xf32>
    %254 = tpu.matmul %252, %253, %cst_94 {dimension_numbers = #tpu.dot_dimension_numbers<[1], [0], [0], [1], [0, 0, 1, 1], [], []>} : vector<8x8xf32>, vector<8x8xf32>, vector<8x8xf32> -> vector<8x8xf32>
    %255 = vector.extract_strided_slice %233 {offsets = [0, 8], sizes = [8, 8], strides = [1, 1]} : vector<8x32xf32> to vector<8x8xf32>
    %256 = vector.extract_strided_slice %234 {offsets = [0, 8], sizes = [8, 8], strides = [1, 1]} : vector<8x32xf32> to vector<8x8xf32>
    "tpu.trace_start"() <{level = 10 : i32, message = "qc,kc->qk"}> : () -> ()
    %cst_95 = arith.constant dense<0.000000e+00> : vector<8x8xf32>
    %257 = tpu.matmul %255, %256, %cst_95 {dimension_numbers = #tpu.dot_dimension_numbers<[1], [1], [0], [0], [0, 0, 1, 0], [], []>} : vector<8x8xf32>, vector<8x8xf32>, vector<8x8xf32> -> vector<8x8xf32>
    "tpu.trace_stop"() : () -> ()
    %258 = vector.extract_strided_slice %4 {offsets = [1, 0, 0], sizes = [1, 8, 8], strides = [1, 1, 1]} : vector<4x8x8xf32> to vector<1x8x8xf32>
    %259 = vector.shape_cast %258 : vector<1x8x8xf32> to vector<8x8xf32>
    %260 = arith.addf %257, %259 : vector<8x8xf32>
    %cst_96 = arith.constant dense<0xFF800000> : vector<8xf32>
    %261 = vector.multi_reduction <maximumf>, %260, %cst_96 [1] : vector<8x8xf32> to vector<8xf32>
    %262 = vector.shape_cast %261 : vector<8xf32> to vector<8x1xf32>
    %263 = vector.broadcast %262 : vector<8x1xf32> to vector<8x8xf32>
    %264 = arith.subf %260, %263 : vector<8x8xf32>
    %265 = math.exp %264 : vector<8x8xf32>
    %cst_97 = arith.constant dense<0.000000e+00> : vector<8xf32>
    %266 = vector.multi_reduction <add>, %265, %cst_97 [1] : vector<8x8xf32> to vector<8xf32>
    %267 = vector.shape_cast %266 : vector<8xf32> to vector<8x1xf32>
    %268 = vector.broadcast %267 : vector<8x1xf32> to vector<8x8xf32>
    %269 = arith.divf %265, %268 : vector<8x8xf32>
    %270 = vector.extract_strided_slice %235 {offsets = [0, 8], sizes = [8, 8], strides = [1, 1]} : vector<8x32xf32> to vector<8x8xf32>
    %cst_98 = arith.constant dense<0.000000e+00> : vector<8x8xf32>
    %271 = tpu.matmul %269, %270, %cst_98 {dimension_numbers = #tpu.dot_dimension_numbers<[1], [0], [0], [1], [0, 0, 1, 1], [], []>} : vector<8x8xf32>, vector<8x8xf32>, vector<8x8xf32> -> vector<8x8xf32>
    %272 = vector.extract_strided_slice %233 {offsets = [0, 16], sizes = [8, 8], strides = [1, 1]} : vector<8x32xf32> to vector<8x8xf32>
    %273 = vector.extract_strided_slice %234 {offsets = [0, 16], sizes = [8, 8], strides = [1, 1]} : vector<8x32xf32> to vector<8x8xf32>
    "tpu.trace_start"() <{level = 10 : i32, message = "qc,kc->qk"}> : () -> ()
    %cst_99 = arith.constant dense<0.000000e+00> : vector<8x8xf32>
    %274 = tpu.matmul %272, %273, %cst_99 {dimension_numbers = #tpu.dot_dimension_numbers<[1], [1], [0], [0], [0, 0, 1, 0], [], []>} : vector<8x8xf32>, vector<8x8xf32>, vector<8x8xf32> -> vector<8x8xf32>
    "tpu.trace_stop"() : () -> ()
    %275 = vector.extract_strided_slice %4 {offsets = [2, 0, 0], sizes = [1, 8, 8], strides = [1, 1, 1]} : vector<4x8x8xf32> to vector<1x8x8xf32>
    %276 = vector.shape_cast %275 : vector<1x8x8xf32> to vector<8x8xf32>
    %277 = arith.addf %274, %276 : vector<8x8xf32>
    %cst_100 = arith.constant dense<0xFF800000> : vector<8xf32>
    %278 = vector.multi_reduction <maximumf>, %277, %cst_100 [1] : vector<8x8xf32> to vector<8xf32>
    %279 = vector.shape_cast %278 : vector<8xf32> to vector<8x1xf32>
    %280 = vector.broadcast %279 : vector<8x1xf32> to vector<8x8xf32>
    %281 = arith.subf %277, %280 : vector<8x8xf32>
    %282 = math.exp %281 : vector<8x8xf32>
    %cst_101 = arith.constant dense<0.000000e+00> : vector<8xf32>
    %283 = vector.multi_reduction <add>, %282, %cst_101 [1] : vector<8x8xf32> to vector<8xf32>
    %284 = vector.shape_cast %283 : vector<8xf32> to vector<8x1xf32>
    %285 = vector.broadcast %284 : vector<8x1xf32> to vector<8x8xf32>
    %286 = arith.divf %282, %285 : vector<8x8xf32>
    %287 = vector.extract_strided_slice %235 {offsets = [0, 16], sizes = [8, 8], strides = [1, 1]} : vector<8x32xf32> to vector<8x8xf32>
    %cst_102 = arith.constant dense<0.000000e+00> : vector<8x8xf32>
    %288 = tpu.matmul %286, %287, %cst_102 {dimension_numbers = #tpu.dot_dimension_numbers<[1], [0], [0], [1], [0, 0, 1, 1], [], []>} : vector<8x8xf32>, vector<8x8xf32>, vector<8x8xf32> -> vector<8x8xf32>
    %289 = vector.extract_strided_slice %233 {offsets = [0, 24], sizes = [8, 8], strides = [1, 1]} : vector<8x32xf32> to vector<8x8xf32>
    %290 = vector.extract_strided_slice %234 {offsets = [0, 24], sizes = [8, 8], strides = [1, 1]} : vector<8x32xf32> to vector<8x8xf32>
    "tpu.trace_start"() <{level = 10 : i32, message = "qc,kc->qk"}> : () -> ()
    %cst_103 = arith.constant dense<0.000000e+00> : vector<8x8xf32>
    %291 = tpu.matmul %289, %290, %cst_103 {dimension_numbers = #tpu.dot_dimension_numbers<[1], [1], [0], [0], [0, 0, 1, 0], [], []>} : vector<8x8xf32>, vector<8x8xf32>, vector<8x8xf32> -> vector<8x8xf32>
    "tpu.trace_stop"() : () -> ()
    %292 = vector.extract_strided_slice %4 {offsets = [3, 0, 0], sizes = [1, 8, 8], strides = [1, 1, 1]} : vector<4x8x8xf32> to vector<1x8x8xf32>
    %293 = vector.shape_cast %292 : vector<1x8x8xf32> to vector<8x8xf32>
    %294 = arith.addf %291, %293 : vector<8x8xf32>
    %cst_104 = arith.constant dense<0xFF800000> : vector<8xf32>
    %295 = vector.multi_reduction <maximumf>, %294, %cst_104 [1] : vector<8x8xf32> to vector<8xf32>
    %296 = vector.shape_cast %295 : vector<8xf32> to vector<8x1xf32>
    %297 = vector.broadcast %296 : vector<8x1xf32> to vector<8x8xf32>
    %298 = arith.subf %294, %297 : vector<8x8xf32>
    %299 = math.exp %298 : vector<8x8xf32>
    %cst_105 = arith.constant dense<0.000000e+00> : vector<8xf32>
    %300 = vector.multi_reduction <add>, %299, %cst_105 [1] : vector<8x8xf32> to vector<8xf32>
    %301 = vector.shape_cast %300 : vector<8xf32> to vector<8x1xf32>
    %302 = vector.broadcast %301 : vector<8x1xf32> to vector<8x8xf32>
    %303 = arith.divf %299, %302 : vector<8x8xf32>
    %304 = vector.extract_strided_slice %235 {offsets = [0, 24], sizes = [8, 8], strides = [1, 1]} : vector<8x32xf32> to vector<8x8xf32>
    %cst_106 = arith.constant dense<0.000000e+00> : vector<8x8xf32>
    %305 = tpu.matmul %303, %304, %cst_106 {dimension_numbers = #tpu.dot_dimension_numbers<[1], [0], [0], [1], [0, 0, 1, 1], [], []>} : vector<8x8xf32>, vector<8x8xf32>, vector<8x8xf32> -> vector<8x8xf32>
    %306 = tpu.concatenate %254, %271, %288, %305 in 1 : vector<8x8xf32>, vector<8x8xf32>, vector<8x8xf32>, vector<8x8xf32> -> vector<8x32xf32>
    %cst_107 = arith.constant dense<0.000000e+00> : vector<8x32xf32>
    %307 = tpu.matmul %306, %237, %cst_107 {dimension_numbers = #tpu.dot_dimension_numbers<[1], [0], [0], [1], [0, 0, 1, 1], [], []>} : vector<8x32xf32>, vector<32x32xf32>, vector<8x32xf32> -> vector<8x32xf32>
    %308 = arith.addf %219, %307 : vector<8x32xf32>
    %309 = arith.mulf %308, %308 : vector<8x32xf32>
    %cst_108 = arith.constant dense<0.000000e+00> : vector<8xf32>
    %310 = vector.multi_reduction <add>, %309, %cst_108 [1] : vector<8x32xf32> to vector<8xf32>
    %311 = vector.shape_cast %310 : vector<8xf32> to vector<8x1xf32>
    %cst_109 = arith.constant 3.200000e+01 : f32
    %312 = vector.broadcast %cst_109 : f32 to vector<8x1xf32>
    %313 = arith.divf %311, %312 : vector<8x1xf32>
    %cst_110 = arith.constant 9.99999997E-7 : f32
    %314 = vector.broadcast %cst_110 : f32 to vector<8x1xf32>
    %315 = arith.addf %313, %314 : vector<8x1xf32>
    %316 = math.rsqrt %315 : vector<8x1xf32>
    %317 = vector.broadcast %316 : vector<8x1xf32> to vector<8x32xf32>
    %318 = arith.mulf %308, %317 : vector<8x32xf32>
    %c1_111 = arith.constant 1 : index
    %c0_112 = arith.constant 0 : index
    %c0_113 = arith.constant 0 : index
    %319 = vector.load %arg8[%c1_111, %c0_112, %c0_113] : memref<2x32x32xf32, #tpu.memory_space<vmem>>, vector<1x32x32xf32>
    %320 = vector.shape_cast %319 : vector<1x32x32xf32> to vector<32x32xf32>
    %cst_114 = arith.constant dense<0.000000e+00> : vector<8x32xf32>
    %321 = tpu.matmul %318, %320, %cst_114 {dimension_numbers = #tpu.dot_dimension_numbers<[1], [0], [0], [1], [0, 0, 1, 1], [], []>} : vector<8x32xf32>, vector<32x32xf32>, vector<8x32xf32> -> vector<8x32xf32>
    %322 = vector.extract_strided_slice %9 {offsets = [0, 64], sizes = [8, 32], strides = [1, 1]} : vector<8x128xf32> to vector<8x32xf32>
    %323 = vector.extract_strided_slice %9 {offsets = [0, 96], sizes = [8, 32], strides = [1, 1]} : vector<8x128xf32> to vector<8x32xf32>
    %c1_115 = arith.constant 1 : index
    %c0_116 = arith.constant 0 : index
    %c0_117 = arith.constant 0 : index
    %324 = vector.load %arg10[%c1_115, %c0_116, %c0_117] : memref<2x32x32xf32, #tpu.memory_space<vmem>>, vector<1x32x32xf32>
    %325 = vector.shape_cast %324 : vector<1x32x32xf32> to vector<32x32xf32>
    %326 = vector.extract_strided_slice %321 {offsets = [0, 0], sizes = [8, 8], strides = [1, 1]} : vector<8x32xf32> to vector<8x8xf32>
    %327 = vector.extract_strided_slice %322 {offsets = [0, 0], sizes = [8, 8], strides = [1, 1]} : vector<8x32xf32> to vector<8x8xf32>
    "tpu.trace_start"() <{level = 10 : i32, message = "qc,kc->qk"}> : () -> ()
    %cst_118 = arith.constant dense<0.000000e+00> : vector<8x8xf32>
    %328 = tpu.matmul %326, %327, %cst_118 {dimension_numbers = #tpu.dot_dimension_numbers<[1], [1], [0], [0], [0, 0, 1, 0], [], []>} : vector<8x8xf32>, vector<8x8xf32>, vector<8x8xf32> -> vector<8x8xf32>
    "tpu.trace_stop"() : () -> ()
    %329 = vector.extract_strided_slice %7 {offsets = [0, 0, 0], sizes = [1, 8, 8], strides = [1, 1, 1]} : vector<4x8x8xf32> to vector<1x8x8xf32>
    %330 = vector.shape_cast %329 : vector<1x8x8xf32> to vector<8x8xf32>
    %331 = arith.addf %328, %330 : vector<8x8xf32>
    %cst_119 = arith.constant dense<0xFF800000> : vector<8xf32>
    %332 = vector.multi_reduction <maximumf>, %331, %cst_119 [1] : vector<8x8xf32> to vector<8xf32>
    %333 = vector.shape_cast %332 : vector<8xf32> to vector<8x1xf32>
    %334 = vector.broadcast %333 : vector<8x1xf32> to vector<8x8xf32>
    %335 = arith.subf %331, %334 : vector<8x8xf32>
    %336 = math.exp %335 : vector<8x8xf32>
    %cst_120 = arith.constant dense<0.000000e+00> : vector<8xf32>
    %337 = vector.multi_reduction <add>, %336, %cst_120 [1] : vector<8x8xf32> to vector<8xf32>
    %338 = vector.shape_cast %337 : vector<8xf32> to vector<8x1xf32>
    %339 = vector.broadcast %338 : vector<8x1xf32> to vector<8x8xf32>
    %340 = arith.divf %336, %339 : vector<8x8xf32>
    %341 = vector.extract_strided_slice %323 {offsets = [0, 0], sizes = [8, 8], strides = [1, 1]} : vector<8x32xf32> to vector<8x8xf32>
    %cst_121 = arith.constant dense<0.000000e+00> : vector<8x8xf32>
    %342 = tpu.matmul %340, %341, %cst_121 {dimension_numbers = #tpu.dot_dimension_numbers<[1], [0], [0], [1], [0, 0, 1, 1], [], []>} : vector<8x8xf32>, vector<8x8xf32>, vector<8x8xf32> -> vector<8x8xf32>
    %343 = vector.extract_strided_slice %321 {offsets = [0, 8], sizes = [8, 8], strides = [1, 1]} : vector<8x32xf32> to vector<8x8xf32>
    %344 = vector.extract_strided_slice %322 {offsets = [0, 8], sizes = [8, 8], strides = [1, 1]} : vector<8x32xf32> to vector<8x8xf32>
    "tpu.trace_start"() <{level = 10 : i32, message = "qc,kc->qk"}> : () -> ()
    %cst_122 = arith.constant dense<0.000000e+00> : vector<8x8xf32>
    %345 = tpu.matmul %343, %344, %cst_122 {dimension_numbers = #tpu.dot_dimension_numbers<[1], [1], [0], [0], [0, 0, 1, 0], [], []>} : vector<8x8xf32>, vector<8x8xf32>, vector<8x8xf32> -> vector<8x8xf32>
    "tpu.trace_stop"() : () -> ()
    %346 = vector.extract_strided_slice %7 {offsets = [1, 0, 0], sizes = [1, 8, 8], strides = [1, 1, 1]} : vector<4x8x8xf32> to vector<1x8x8xf32>
    %347 = vector.shape_cast %346 : vector<1x8x8xf32> to vector<8x8xf32>
    %348 = arith.addf %345, %347 : vector<8x8xf32>
    %cst_123 = arith.constant dense<0xFF800000> : vector<8xf32>
    %349 = vector.multi_reduction <maximumf>, %348, %cst_123 [1] : vector<8x8xf32> to vector<8xf32>
    %350 = vector.shape_cast %349 : vector<8xf32> to vector<8x1xf32>
    %351 = vector.broadcast %350 : vector<8x1xf32> to vector<8x8xf32>
    %352 = arith.subf %348, %351 : vector<8x8xf32>
    %353 = math.exp %352 : vector<8x8xf32>
    %cst_124 = arith.constant dense<0.000000e+00> : vector<8xf32>
    %354 = vector.multi_reduction <add>, %353, %cst_124 [1] : vector<8x8xf32> to vector<8xf32>
    %355 = vector.shape_cast %354 : vector<8xf32> to vector<8x1xf32>
    %356 = vector.broadcast %355 : vector<8x1xf32> to vector<8x8xf32>
    %357 = arith.divf %353, %356 : vector<8x8xf32>
    %358 = vector.extract_strided_slice %323 {offsets = [0, 8], sizes = [8, 8], strides = [1, 1]} : vector<8x32xf32> to vector<8x8xf32>
    %cst_125 = arith.constant dense<0.000000e+00> : vector<8x8xf32>
    %359 = tpu.matmul %357, %358, %cst_125 {dimension_numbers = #tpu.dot_dimension_numbers<[1], [0], [0], [1], [0, 0, 1, 1], [], []>} : vector<8x8xf32>, vector<8x8xf32>, vector<8x8xf32> -> vector<8x8xf32>
    %360 = vector.extract_strided_slice %321 {offsets = [0, 16], sizes = [8, 8], strides = [1, 1]} : vector<8x32xf32> to vector<8x8xf32>
    %361 = vector.extract_strided_slice %322 {offsets = [0, 16], sizes = [8, 8], strides = [1, 1]} : vector<8x32xf32> to vector<8x8xf32>
    "tpu.trace_start"() <{level = 10 : i32, message = "qc,kc->qk"}> : () -> ()
    %cst_126 = arith.constant dense<0.000000e+00> : vector<8x8xf32>
    %362 = tpu.matmul %360, %361, %cst_126 {dimension_numbers = #tpu.dot_dimension_numbers<[1], [1], [0], [0], [0, 0, 1, 0], [], []>} : vector<8x8xf32>, vector<8x8xf32>, vector<8x8xf32> -> vector<8x8xf32>
    "tpu.trace_stop"() : () -> ()
    %363 = vector.extract_strided_slice %7 {offsets = [2, 0, 0], sizes = [1, 8, 8], strides = [1, 1, 1]} : vector<4x8x8xf32> to vector<1x8x8xf32>
    %364 = vector.shape_cast %363 : vector<1x8x8xf32> to vector<8x8xf32>
    %365 = arith.addf %362, %364 : vector<8x8xf32>
    %cst_127 = arith.constant dense<0xFF800000> : vector<8xf32>
    %366 = vector.multi_reduction <maximumf>, %365, %cst_127 [1] : vector<8x8xf32> to vector<8xf32>
    %367 = vector.shape_cast %366 : vector<8xf32> to vector<8x1xf32>
    %368 = vector.broadcast %367 : vector<8x1xf32> to vector<8x8xf32>
    %369 = arith.subf %365, %368 : vector<8x8xf32>
    %370 = math.exp %369 : vector<8x8xf32>
    %cst_128 = arith.constant dense<0.000000e+00> : vector<8xf32>
    %371 = vector.multi_reduction <add>, %370, %cst_128 [1] : vector<8x8xf32> to vector<8xf32>
    %372 = vector.shape_cast %371 : vector<8xf32> to vector<8x1xf32>
    %373 = vector.broadcast %372 : vector<8x1xf32> to vector<8x8xf32>
    %374 = arith.divf %370, %373 : vector<8x8xf32>
    %375 = vector.extract_strided_slice %323 {offsets = [0, 16], sizes = [8, 8], strides = [1, 1]} : vector<8x32xf32> to vector<8x8xf32>
    %cst_129 = arith.constant dense<0.000000e+00> : vector<8x8xf32>
    %376 = tpu.matmul %374, %375, %cst_129 {dimension_numbers = #tpu.dot_dimension_numbers<[1], [0], [0], [1], [0, 0, 1, 1], [], []>} : vector<8x8xf32>, vector<8x8xf32>, vector<8x8xf32> -> vector<8x8xf32>
    %377 = vector.extract_strided_slice %321 {offsets = [0, 24], sizes = [8, 8], strides = [1, 1]} : vector<8x32xf32> to vector<8x8xf32>
    %378 = vector.extract_strided_slice %322 {offsets = [0, 24], sizes = [8, 8], strides = [1, 1]} : vector<8x32xf32> to vector<8x8xf32>
    "tpu.trace_start"() <{level = 10 : i32, message = "qc,kc->qk"}> : () -> ()
    %cst_130 = arith.constant dense<0.000000e+00> : vector<8x8xf32>
    %379 = tpu.matmul %377, %378, %cst_130 {dimension_numbers = #tpu.dot_dimension_numbers<[1], [1], [0], [0], [0, 0, 1, 0], [], []>} : vector<8x8xf32>, vector<8x8xf32>, vector<8x8xf32> -> vector<8x8xf32>
    "tpu.trace_stop"() : () -> ()
    %380 = vector.extract_strided_slice %7 {offsets = [3, 0, 0], sizes = [1, 8, 8], strides = [1, 1, 1]} : vector<4x8x8xf32> to vector<1x8x8xf32>
    %381 = vector.shape_cast %380 : vector<1x8x8xf32> to vector<8x8xf32>
    %382 = arith.addf %379, %381 : vector<8x8xf32>
    %cst_131 = arith.constant dense<0xFF800000> : vector<8xf32>
    %383 = vector.multi_reduction <maximumf>, %382, %cst_131 [1] : vector<8x8xf32> to vector<8xf32>
    %384 = vector.shape_cast %383 : vector<8xf32> to vector<8x1xf32>
    %385 = vector.broadcast %384 : vector<8x1xf32> to vector<8x8xf32>
    %386 = arith.subf %382, %385 : vector<8x8xf32>
    %387 = math.exp %386 : vector<8x8xf32>
    %cst_132 = arith.constant dense<0.000000e+00> : vector<8xf32>
    %388 = vector.multi_reduction <add>, %387, %cst_132 [1] : vector<8x8xf32> to vector<8xf32>
    %389 = vector.shape_cast %388 : vector<8xf32> to vector<8x1xf32>
    %390 = vector.broadcast %389 : vector<8x1xf32> to vector<8x8xf32>
    %391 = arith.divf %387, %390 : vector<8x8xf32>
    %392 = vector.extract_strided_slice %323 {offsets = [0, 24], sizes = [8, 8], strides = [1, 1]} : vector<8x32xf32> to vector<8x8xf32>
    %cst_133 = arith.constant dense<0.000000e+00> : vector<8x8xf32>
    %393 = tpu.matmul %391, %392, %cst_133 {dimension_numbers = #tpu.dot_dimension_numbers<[1], [0], [0], [1], [0, 0, 1, 1], [], []>} : vector<8x8xf32>, vector<8x8xf32>, vector<8x8xf32> -> vector<8x8xf32>
    %394 = tpu.concatenate %342, %359, %376, %393 in 1 : vector<8x8xf32>, vector<8x8xf32>, vector<8x8xf32>, vector<8x8xf32> -> vector<8x32xf32>
    %cst_134 = arith.constant dense<0.000000e+00> : vector<8x32xf32>
    %395 = tpu.matmul %394, %325, %cst_134 {dimension_numbers = #tpu.dot_dimension_numbers<[1], [0], [0], [1], [0, 0, 1, 1], [], []>} : vector<8x32xf32>, vector<32x32xf32>, vector<8x32xf32> -> vector<8x32xf32>
    %396 = arith.addf %308, %395 : vector<8x32xf32>
    %397 = arith.mulf %396, %396 : vector<8x32xf32>
    %cst_135 = arith.constant dense<0.000000e+00> : vector<8xf32>
    %398 = vector.multi_reduction <add>, %397, %cst_135 [1] : vector<8x32xf32> to vector<8xf32>
    %399 = vector.shape_cast %398 : vector<8xf32> to vector<8x1xf32>
    %cst_136 = arith.constant 3.200000e+01 : f32
    %400 = vector.broadcast %cst_136 : f32 to vector<8x1xf32>
    %401 = arith.divf %399, %400 : vector<8x1xf32>
    %cst_137 = arith.constant 9.99999997E-7 : f32
    %402 = vector.broadcast %cst_137 : f32 to vector<8x1xf32>
    %403 = arith.addf %401, %402 : vector<8x1xf32>
    %404 = math.rsqrt %403 : vector<8x1xf32>
    %405 = vector.broadcast %404 : vector<8x1xf32> to vector<8x32xf32>
    %406 = arith.mulf %396, %405 : vector<8x32xf32>
    %c1_138 = arith.constant 1 : index
    %c0_139 = arith.constant 0 : index
    %c0_140 = arith.constant 0 : index
    %407 = vector.load %arg11[%c1_138, %c0_139, %c0_140] : memref<2x32x128xf32, #tpu.memory_space<vmem>>, vector<1x32x128xf32>
    %408 = vector.shape_cast %407 : vector<1x32x128xf32> to vector<32x128xf32>
    %cst_141 = arith.constant dense<0.000000e+00> : vector<8x128xf32>
    %409 = tpu.matmul %406, %408, %cst_141 {dimension_numbers = #tpu.dot_dimension_numbers<[1], [0], [0], [1], [0, 0, 1, 1], [], []>} : vector<8x32xf32>, vector<32x128xf32>, vector<8x128xf32> -> vector<8x128xf32>
    %410 = vector.extract_strided_slice %409 {offsets = [0, 0], sizes = [8, 64], strides = [1, 1]} : vector<8x128xf32> to vector<8x64xf32>
    %411 = vector.extract_strided_slice %409 {offsets = [0, 64], sizes = [8, 64], strides = [1, 1]} : vector<8x128xf32> to vector<8x64xf32>
    %cst_142 = arith.constant 5.000000e-01 : f32
    %412 = vector.broadcast %cst_142 : f32 to vector<8x64xf32>
    %413 = arith.mulf %412, %411 : vector<8x64xf32>
    %cst_143 = arith.constant 4.471500e-02 : f32
    %414 = vector.broadcast %cst_143 : f32 to vector<8x64xf32>
    %415 = arith.mulf %414, %411 : vector<8x64xf32>
    %416 = arith.mulf %415, %411 : vector<8x64xf32>
    %417 = arith.mulf %416, %411 : vector<8x64xf32>
    %418 = arith.addf %411, %417 : vector<8x64xf32>
    %cst_144 = arith.constant 0.797884583 : f32
    %419 = vector.broadcast %cst_144 : f32 to vector<8x64xf32>
    %420 = arith.mulf %419, %418 : vector<8x64xf32>
    %421 = math.tanh %420 : vector<8x64xf32>
    %cst_145 = arith.constant 1.000000e+00 : f32
    %422 = vector.broadcast %cst_145 : f32 to vector<8x64xf32>
    %423 = arith.addf %422, %421 : vector<8x64xf32>
    %424 = arith.mulf %413, %423 : vector<8x64xf32>
    %425 = arith.mulf %410, %424 : vector<8x64xf32>
    %c1_146 = arith.constant 1 : index
    %c0_147 = arith.constant 0 : index
    %c0_148 = arith.constant 0 : index
    %426 = vector.load %arg12[%c1_146, %c0_147, %c0_148] : memref<2x64x32xf32, #tpu.memory_space<vmem>>, vector<1x64x32xf32>
    %427 = vector.shape_cast %426 : vector<1x64x32xf32> to vector<64x32xf32>
    %cst_149 = arith.constant dense<0.000000e+00> : vector<8x32xf32>
    %428 = tpu.matmul %425, %427, %cst_149 {dimension_numbers = #tpu.dot_dimension_numbers<[1], [0], [0], [1], [0, 0, 1, 1], [], []>} : vector<8x64xf32>, vector<64x32xf32>, vector<8x32xf32> -> vector<8x32xf32>
    %429 = arith.addf %396, %428 : vector<8x32xf32>
    %c0_150 = arith.constant 0 : index
    %c0_151 = arith.constant 0 : index
    %430 = vector.load %arg5[%c0_150, %c0_151] : memref<1x32xf32, #tpu.memory_space<vmem>>, vector<1x32xf32>
    %431 = arith.mulf %429, %429 : vector<8x32xf32>
    %cst_152 = arith.constant dense<0.000000e+00> : vector<8xf32>
    %432 = vector.multi_reduction <add>, %431, %cst_152 [1] : vector<8x32xf32> to vector<8xf32>
    %433 = vector.shape_cast %432 : vector<8xf32> to vector<8x1xf32>
    %cst_153 = arith.constant 3.200000e+01 : f32
    %434 = vector.broadcast %cst_153 : f32 to vector<8x1xf32>
    %435 = arith.divf %433, %434 : vector<8x1xf32>
    %cst_154 = arith.constant 9.99999997E-7 : f32
    %436 = vector.broadcast %cst_154 : f32 to vector<8x1xf32>
    %437 = arith.addf %435, %436 : vector<8x1xf32>
    %438 = math.rsqrt %437 : vector<8x1xf32>
    %439 = vector.broadcast %438 : vector<8x1xf32> to vector<8x32xf32>
    %440 = arith.mulf %429, %439 : vector<8x32xf32>
    %441 = vector.broadcast %430 : vector<1x32xf32> to vector<8x32xf32>
    %442 = arith.mulf %441, %440 : vector<8x32xf32>
    %c0_155 = arith.constant 0 : index
    %c0_156 = arith.constant 0 : index
    %c0_157 = arith.constant 0 : index
    %443 = vector.load %arg13[%c0_155, %c0_156, %c0_157] : memref<1x8x32xf32, #tpu.memory_space<vmem>>, vector<1x8x32xf32>
    %444 = vector.shape_cast %443 : vector<1x8x32xf32> to vector<8x32xf32>
    %445 = vector.shape_cast %442 : vector<8x32xf32> to vector<1x8x32xf32>
    tpu.vector_store %arg13[%c0_155, %c0_156, %c0_157], %445 {strides = array<i32>} : memref<1x8x32xf32, #tpu.memory_space<vmem>>, vector<1x8x32xf32>,
    return
  }
  func.func @transform_0(%arg0: i32) -> (i32, i32, i32) {
    %c0_i32 = arith.constant 0 : i32
    %c0_i32_0 = arith.constant 0 : i32
    %c0_i32_1 = arith.constant 0 : i32
    return %arg0, %c0_i32, %c0_i32_0 : i32, i32, i32
  }
  func.func @transform_1(%arg0: i32) -> (i32, i32, i32) {
    %c0_i32 = arith.constant 0 : i32
    %c0_i32_0 = arith.constant 0 : i32
    %c0_i32_1 = arith.constant 0 : i32
    return %arg0, %c0_i32, %c0_i32_0 : i32, i32, i32
  }
  func.func @transform_2(%arg0: i32) -> (i32, i32, i32) {
    %c0_i32 = arith.constant 0 : i32
    %c0_i32_0 = arith.constant 0 : i32
    %c0_i32_1 = arith.constant 0 : i32
    %c0_i32_2 = arith.constant 0 : i32
    return %c0_i32, %c0_i32_0, %c0_i32_1 : i32, i32, i32
  }
  func.func @transform_3(%arg0: i32) -> (i32, i32, i32) {
    %c0_i32 = arith.constant 0 : i32
    %c0_i32_0 = arith.constant 0 : i32
    %c0_i32_1 = arith.constant 0 : i32
    return %arg0, %c0_i32, %c0_i32_0 : i32, i32, i32
  }
  func.func @transform_4(%arg0: i32) -> (i32, i32) {
    %c0_i32 = arith.constant 0 : i32
    %c0_i32_0 = arith.constant 0 : i32
    %c0_i32_1 = arith.constant 0 : i32
    return %c0_i32, %c0_i32_0 : i32, i32
  }
  func.func @transform_5(%arg0: i32) -> (i32, i32, i32) {
    %c0_i32 = arith.constant 0 : i32
    %c0_i32_0 = arith.constant 0 : i32
    %c0_i32_1 = arith.constant 0 : i32
    %c0_i32_2 = arith.constant 0 : i32
    return %c0_i32, %c0_i32_0, %c0_i32_1 : i32, i32, i32
  }
  func.func @transform_6(%arg0: i32) -> (i32, i32, i32) {
    %c0_i32 = arith.constant 0 : i32
    %c0_i32_0 = arith.constant 0 : i32
    %c0_i32_1 = arith.constant 0 : i32
    %c0_i32_2 = arith.constant 0 : i32
    return %c0_i32, %c0_i32_0, %c0_i32_1 : i32, i32, i32
  }
  func.func @transform_7(%arg0: i32) -> (i32, i32, i32) {
    %c0_i32 = arith.constant 0 : i32
    %c0_i32_0 = arith.constant 0 : i32
    %c0_i32_1 = arith.constant 0 : i32
    %c0_i32_2 = arith.constant 0 : i32
    return %c0_i32, %c0_i32_0, %c0_i32_1 : i32, i32, i32
  }
  func.func @transform_8(%arg0: i32) -> (i32, i32) {
    %c0_i32 = arith.constant 0 : i32
    %c0_i32_0 = arith.constant 0 : i32
    %c0_i32_1 = arith.constant 0 : i32
    return %c0_i32, %c0_i32_0 : i32, i32
  }
  func.func @transform_9(%arg0: i32) -> (i32, i32, i32) {
    %c0_i32 = arith.constant 0 : i32
    %c0_i32_0 = arith.constant 0 : i32
    %c0_i32_1 = arith.constant 0 : i32
    %c0_i32_2 = arith.constant 0 : i32
    return %c0_i32, %c0_i32_0, %c0_i32_1 : i32, i32, i32
  }
  func.func @transform_10(%arg0: i32) -> (i32, i32, i32) {
    %c0_i32 = arith.constant 0 : i32
    %c0_i32_0 = arith.constant 0 : i32
    %c0_i32_1 = arith.constant 0 : i32
    %c0_i32_2 = arith.constant 0 : i32
    return %c0_i32, %c0_i32_0, %c0_i32_1 : i32, i32, i32
  }
  func.func @transform_11(%arg0: i32) -> (i32, i32, i32) {
    %c0_i32 = arith.constant 0 : i32
    %c0_i32_0 = arith.constant 0 : i32
    %c0_i32_1 = arith.constant 0 : i32
    %c0_i32_2 = arith.constant 0 : i32
    return %c0_i32, %c0_i32_0, %c0_i32_1 : i32, i32, i32
  }
  func.func @transform_12(%arg0: i32) -> (i32, i32, i32) {
    %c0_i32 = arith.constant 0 : i32
    %c0_i32_0 = arith.constant 0 : i32
    %c0_i32_1 = arith.constant 0 : i32
    return %arg0, %c0_i32, %c0_i32_0 : i32, i32, i32
  }
}

</mosaic_0001>

<llo_original>
// kernel: t5_decoder_forward.1
$region0: #{t5_decoder_forward.1}
  #allocation0 [shape = 'u32[]', space=smem, size = 0x4, offset = 0x4, fixed_abs, tag = 'smem constant byte address 0x4 - core index']
  #allocation1 [shape = 'u32[144,128]{1,0:T(1,128)}', space=vmem, size = 0x12000, scoped, tag = 'internal scratch']
  %s0 = inlined_call_operand.vmem [shape: f32[2,8,32], index: 0, kind: input, shape index: {}]
  %s1 = inlined_call_operand.vmem [shape: f32[2,8,32], index: 1, kind: input, shape index: {}]
  %s2 = inlined_call_operand.vmem [shape: f32[4,8,8], index: 2, kind: input, shape index: {}]
  %s3 = inlined_call_operand.vmem [shape: f32[2,1,8], index: 3, kind: input, shape index: {}]
  %s4 = inlined_call_operand.vmem [shape: f32[1,32], index: 4, kind: input, shape index: {}]
  %s5 = inlined_call_operand.vmem [shape: f32[2,32,96], index: 5, kind: input, shape index: {}]
  %s6 = inlined_call_operand.vmem [shape: f32[2,32,32], index: 6, kind: input, shape index: {}]
  %s7 = inlined_call_operand.vmem [shape: f32[2,32,32], index: 7, kind: input, shape index: {}]
  %s8 = inlined_call_operand.vmem [shape: f32[32,128], index: 8, kind: input, shape index: {}]
  %s9 = inlined_call_operand.vmem [shape: f32[2,32,32], index: 9, kind: input, shape index: {}]
  %s10 = inlined_call_operand.vmem [shape: f32[2,32,128], index: 10, kind: input, shape index: {}]
  %s11 = inlined_call_operand.vmem [shape: f32[2,64,32], index: 11, kind: input, shape index: {}]
  %s12 = inlined_call_operand.hbm [shape: f32[2,8,32], index: 12, kind: output, shape index: {}]
  %s13 = sld [smem:[#allocation0]]
  $region81: #{t5_decoder_forward.1} parent=0
    _
  %s15 = ssub.s32 1, %s13
  %s16 = scalar_select 0, %s15, %s13
  $region1: #{t5_decoder_forward.1} parent=0
    #allocation2 [shape = 'u8[8192]{0}', space=vmem, size = 0x2000, scoped, tag = 'output window, operand 0']
    #allocation3 [shape = 's32[2]{0}', space=sflag, size = 0x8, scoped, tag = 'scoped memory for t5_decoder_forward.1']
    %17 = vsyncpa [#allocation3], 0
    %s18 = scalar_lea.sflag [#allocation3], 1
    %19 = vsyncpa %s18, 0
    loop: start=0, step=1, limit=4
    $region2: #{t5_decoder_forward.1} parent=1 // loop_pre_header
      _
    $region3: #{t5_decoder_forward.1} parent=1 // loop_header
      %s21 = sphi 0, %s25
      %p22 = scmp.ge.s32.totalorder %s21, 4
      %s31 = sphi 0, %s33
      %s34 = sphi 0, %s31
      %s35 = sphi 0, %s34
      %s51 = sphi 0, %s35
      %s57 = sphi 0, %s59
      %s60 = sphi 0, %s57
      %s61 = sphi 0, %s60
      %s77 = sphi 0, %s61
      %s81 = sphi 0, %s81
      %s83 = sphi 0, %s81
      %s84 = sphi 0, %s83
      %s98 = sphi 0, %s84
      %s104 = sphi 0, %s106
      %s107 = sphi 0, %s104
      %s108 = sphi 0, %s107
      %s124 = sphi 0, %s108
      %s128 = sphi 0, %s128
      %s130 = sphi 0, %s128
      %s131 = sphi 0, %s130
      %s145 = sphi 0, %s131
      %s149 = sphi 0, %s149
      %s151 = sphi 0, %s149
      %s152 = sphi 0, %s151
      %s166 = sphi 0, %s152
      %s170 = sphi 0, %s170
      %s172 = sphi 0, %s170
      %s173 = sphi 0, %s172
      %s187 = sphi 0, %s173
      %s191 = sphi 0, %s191
      %s193 = sphi 0, %s191
      %s194 = sphi 0, %s193
      %s208 = sphi 0, %s194
      %s212 = sphi 0, %s212
      %s214 = sphi 0, %s212
      %s215 = sphi 0, %s214
      %s229 = sphi 0, %s215
      %s233 = sphi 0, %s233
      %s235 = sphi 0, %s233
      %s236 = sphi 0, %s235
      %s250 = sphi 0, %s236
      %s254 = sphi 0, %s254
      %s256 = sphi 0, %s254
      %s257 = sphi 0, %s256
      %s271 = sphi 0, %s257
      %s275 = sphi 0, %s275
      %s277 = sphi 0, %s275
      %s278 = sphi 0, %s277
      %s292 = sphi 0, %s278
      %s298 = sphi 0, %s300
      %s301 = sphi 0, %s298
      %s302 = sphi 0, %s301
      %s318 = sphi 0, %s302
    $region4: #{t5_decoder_forward.1} parent=1 // loop_header_branch
      %24 = sbr.rel (%p22) target = $region8
    $region5: #{t5_decoder_forward.1} parent=1 // loop_body
      %s26 = ssub.s32 %s21, 1
      %s27 = ssub.s32 %s21, 2
      %s28 = sadd.s32 %s21, 1
      %s29 = ssub.s32 %s21, %s28
      %p30 = scmp.eq.s32.totalorder %s29, 0
      %s32 = sadd.s32 %s31, 1
      %s33 = scalar_select %p30, %s31, %s32
      %p36 = pneg %p30
      %p37 = scmp.eq.s32.totalorder %s21, 1
      %p38 = por %p36, %p37
      %p39 = scmp.ne.s32.totalorder %s31, %s34
      %p40 = scmp.eq.s32.totalorder %s21, 0
      %p41 = por %p39, %p40
      %p42 = scmp.ne.s32.totalorder %s31, %s34
      %p43 = scmp.eq.s32.totalorder %s26, 1
      %p44 = por %p42, %p43
      %p45 = scmp.ne.s32.totalorder %s34, %s35
      %p46 = scmp.eq.s32.totalorder %s26, 0
      %p47 = por %p45, %p46
      %p48 = scmp.ne.s32.totalorder %s34, %s35
      %p49 = scmp.eq.s32.totalorder %s27, 1
      %p50 = por %p48, %p49
      %p52 = scmp.ne.s32.totalorder %s35, %s51
      %p53 = scmp.eq.s32.totalorder %s27, 0
      %p54 = por %p52, %p53
      %s55 = ssub.s32 %s21, %s28
      %p56 = scmp.eq.s32.totalorder %s55, 0
      %s58 = sadd.s32 %s57, 1
      %s59 = scalar_select %p56, %s57, %s58
      %p62 = pneg %p56
      %p63 = scmp.eq.s32.totalorder %s21, 1
      %p64 = por %p62, %p63
      %p65 = scmp.ne.s32.totalorder %s57, %s60
      %p66 = scmp.eq.s32.totalorder %s21, 0
      %p67 = por %p65, %p66
      %p68 = scmp.ne.s32.totalorder %s57, %s60
      %p69 = scmp.eq.s32.totalorder %s26, 1
      %p70 = por %p68, %p69
      %p71 = scmp.ne.s32.totalorder %s60, %s61
      %p72 = scmp.eq.s32.totalorder %s26, 0
      %p73 = por %p71, %p72
      %p74 = scmp.ne.s32.totalorder %s60, %s61
      %p75 = scmp.eq.s32.totalorder %s27, 1
      %p76 = por %p74, %p75
      %p78 = scmp.ne.s32.totalorder %s61, %s77
      %p79 = scmp.eq.s32.totalorder %s27, 0
      %p80 = por %p78, %p79
      %s82 = sadd.s32 %s81, 1
      %p85 = scmp.eq.s32.totalorder %s21, 1
      %p86 = scmp.ne.s32.totalorder %s81, %s83
      %p87 = scmp.eq.s32.totalorder %s21, 0
      %p88 = por %p86, %p87
      %p89 = scmp.ne.s32.totalorder %s81, %s83
      %p90 = scmp.eq.s32.totalorder %s26, 1
      %p91 = por %p89, %p90
      %p92 = scmp.ne.s32.totalorder %s83, %s84
      %p93 = scmp.eq.s32.totalorder %s26, 0
      %p94 = por %p92, %p93
      %p95 = scmp.ne.s32.totalorder %s83, %s84
      %p96 = scmp.eq.s32.totalorder %s27, 1
      %p97 = por %p95, %p96
      %p99 = scmp.ne.s32.totalorder %s84, %s98
      %p100 = scmp.eq.s32.totalorder %s27, 0
      %p101 = por %p99, %p100
      %s102 = ssub.s32 %s21, %s28
      %p103 = scmp.eq.s32.totalorder %s102, 0
      %s105 = sadd.s32 %s104, 1
      %s106 = scalar_select %p103, %s104, %s105
      %p109 = pneg %p103
      %p110 = scmp.eq.s32.totalorder %s21, 1
      %p111 = por %p109, %p110
      %p112 = scmp.ne.s32.totalorder %s104, %s107
      %p113 = scmp.eq.s32.totalorder %s21, 0
      %p114 = por %p112, %p113
      %p115 = scmp.ne.s32.totalorder %s104, %s107
      %p116 = scmp.eq.s32.totalorder %s26, 1
      %p117 = por %p115, %p116
      %p118 = scmp.ne.s32.totalorder %s107, %s108
      %p119 = scmp.eq.s32.totalorder %s26, 0
      %p120 = por %p118, %p119
      %p121 = scmp.ne.s32.totalorder %s107, %s108
      %p122 = scmp.eq.s32.totalorder %s27, 1
      %p123 = por %p121, %p122
      %p125 = scmp.ne.s32.totalorder %s108, %s124
      %p126 = scmp.eq.s32.totalorder %s27, 0
      %p127 = por %p125, %p126
      %s129 = sadd.s32 %s128, 1
      %p132 = scmp.eq.s32.totalorder %s21, 1
      %p133 = scmp.ne.s32.totalorder %s128, %s130
      %p134 = scmp.eq.s32.totalorder %s21, 0
      %p135 = por %p133, %p134
      %p136 = scmp.ne.s32.totalorder %s128, %s130
      %p137 = scmp.eq.s32.totalorder %s26, 1
      %p138 = por %p136, %p137
      %p139 = scmp.ne.s32.totalorder %s130, %s131
      %p140 = scmp.eq.s32.totalorder %s26, 0
      %p141 = por %p139, %p140
      %p142 = scmp.ne.s32.totalorder %s130, %s131
      %p143 = scmp.eq.s32.totalorder %s27, 1
      %p144 = por %p142, %p143
      %p146 = scmp.ne.s32.totalorder %s131, %s145
      %p147 = scmp.eq.s32.totalorder %s27, 0
      %p148 = por %p146, %p147
      %s150 = sadd.s32 %s149, 1
      %p153 = scmp.eq.s32.totalorder %s21, 1
      %p154 = scmp.ne.s32.totalorder %s149, %s151
      %p155 = scmp.eq.s32.totalorder %s21, 0
      %p156 = por %p154, %p155
      %p157 = scmp.ne.s32.totalorder %s149, %s151
      %p158 = scmp.eq.s32.totalorder %s26, 1
      %p159 = por %p157, %p158
      %p160 = scmp.ne.s32.totalorder %s151, %s152
      %p161 = scmp.eq.s32.totalorder %s26, 0
      %p162 = por %p160, %p161
      %p163 = scmp.ne.s32.totalorder %s151, %s152
      %p164 = scmp.eq.s32.totalorder %s27, 1
      %p165 = por %p163, %p164
      %p167 = scmp.ne.s32.totalorder %s152, %s166
      %p168 = scmp.eq.s32.totalorder %s27, 0
      %p169 = por %p167, %p168
      %s171 = sadd.s32 %s170, 1
      %p174 = scmp.eq.s32.totalorder %s21, 1
      %p175 = scmp.ne.s32.totalorder %s170, %s172
      %p176 = scmp.eq.s32.totalorder %s21, 0
      %p177 = por %p175, %p176
      %p178 = scmp.ne.s32.totalorder %s170, %s172
      %p179 = scmp.eq.s32.totalorder %s26, 1
      %p180 = por %p178, %p179
      %p181 = scmp.ne.s32.totalorder %s172, %s173
      %p182 = scmp.eq.s32.totalorder %s26, 0
      %p183 = por %p181, %p182
      %p184 = scmp.ne.s32.totalorder %s172, %s173
      %p185 = scmp.eq.s32.totalorder %s27, 1
      %p186 = por %p184, %p185
      %p188 = scmp.ne.s32.totalorder %s173, %s187
      %p189 = scmp.eq.s32.totalorder %s27, 0
      %p190 = por %p188, %p189
      %s192 = sadd.s32 %s191, 1
      %p195 = scmp.eq.s32.totalorder %s21, 1
      %p196 = scmp.ne.s32.totalorder %s191, %s193
      %p197 = scmp.eq.s32.totalorder %s21, 0
      %p198 = por %p196, %p197
      %p199 = scmp.ne.s32.totalorder %s191, %s193
      %p200 = scmp.eq.s32.totalorder %s26, 1
      %p201 = por %p199, %p200
      %p202 = scmp.ne.s32.totalorder %s193, %s194
      %p203 = scmp.eq.s32.totalorder %s26, 0
      %p204 = por %p202, %p203
      %p205 = scmp.ne.s32.totalorder %s193, %s194
      %p206 = scmp.eq.s32.totalorder %s27, 1
      %p207 = por %p205, %p206
      %p209 = scmp.ne.s32.totalorder %s194, %s208
      %p210 = scmp.eq.s32.totalorder %s27, 0
      %p211 = por %p209, %p210
      %s213 = sadd.s32 %s212, 1
      %p216 = scmp.eq.s32.totalorder %s21, 1
      %p217 = scmp.ne.s32.totalorder %s212, %s214
      %p218 = scmp.eq.s32.totalorder %s21, 0
      %p219 = por %p217, %p218
      %p220 = scmp.ne.s32.totalorder %s212, %s214
      %p221 = scmp.eq.s32.totalorder %s26, 1
      %p222 = por %p220, %p221
      %p223 = scmp.ne.s32.totalorder %s214, %s215
      %p224 = scmp.eq.s32.totalorder %s26, 0
      %p225 = por %p223, %p224
      %p226 = scmp.ne.s32.totalorder %s214, %s215
      %p227 = scmp.eq.s32.totalorder %s27, 1
      %p228 = por %p226, %p227
      %p230 = scmp.ne.s32.totalorder %s215, %s229
      %p231 = scmp.eq.s32.totalorder %s27, 0
      %p232 = por %p230, %p231
      %s234 = sadd.s32 %s233, 1
      %p237 = scmp.eq.s32.totalorder %s21, 1
      %p238 = scmp.ne.s32.totalorder %s233, %s235
      %p239 = scmp.eq.s32.totalorder %s21, 0
      %p240 = por %p238, %p239
      %p241 = scmp.ne.s32.totalorder %s233, %s235
      %p242 = scmp.eq.s32.totalorder %s26, 1
      %p243 = por %p241, %p242
      %p244 = scmp.ne.s32.totalorder %s235, %s236
      %p245 = scmp.eq.s32.totalorder %s26, 0
      %p246 = por %p244, %p245
      %p247 = scmp.ne.s32.totalorder %s235, %s236
      %p248 = scmp.eq.s32.totalorder %s27, 1
      %p249 = por %p247, %p248
      %p251 = scmp.ne.s32.totalorder %s236, %s250
      %p252 = scmp.eq.s32.totalorder %s27, 0
      %p253 = por %p251, %p252
      %s255 = sadd.s32 %s254, 1
      %p258 = scmp.eq.s32.totalorder %s21, 1
      %p259 = scmp.ne.s32.totalorder %s254, %s256
      %p260 = scmp.eq.s32.totalorder %s21, 0
      %p261 = por %p259, %p260
      %p262 = scmp.ne.s32.totalorder %s254, %s256
      %p263 = scmp.eq.s32.totalorder %s26, 1
      %p264 = por %p262, %p263
      %p265 = scmp.ne.s32.totalorder %s256, %s257
      %p266 = scmp.eq.s32.totalorder %s26, 0
      %p267 = por %p265, %p266
      %p268 = scmp.ne.s32.totalorder %s256, %s257
      %p269 = scmp.eq.s32.totalorder %s27, 1
      %p270 = por %p268, %p269
      %p272 = scmp.ne.s32.totalorder %s257, %s271
      %p273 = scmp.eq.s32.totalorder %s27, 0
      %p274 = por %p272, %p273
      %s276 = sadd.s32 %s275, 1
      %p279 = scmp.eq.s32.totalorder %s21, 1
      %p280 = scmp.ne.s32.totalorder %s275, %s277
      %p281 = scmp.eq.s32.totalorder %s21, 0
      %p282 = por %p280, %p281
      %p283 = scmp.ne.s32.totalorder %s275, %s277
      %p284 = scmp.eq.s32.totalorder %s26, 1
      %p285 = por %p283, %p284
      %p286 = scmp.ne.s32.totalorder %s277, %s278
      %p287 = scmp.eq.s32.totalorder %s26, 0
      %p288 = por %p286, %p287
      %p289 = scmp.ne.s32.totalorder %s277, %s278
      %p290 = scmp.eq.s32.totalorder %s27, 1
      %p291 = por %p289, %p290
      %p293 = scmp.ne.s32.totalorder %s278, %s292
      %p294 = scmp.eq.s32.totalorder %s27, 0
      %p295 = por %p293, %p294
      %s296 = ssub.s32 %s21, %s28
      %p297 = scmp.eq.s32.totalorder %s296, 0
      %s299 = sadd.s32 %s298, 1
      %s300 = scalar_select %p297, %s298, %s299
      %p303 = pneg %p297
      %p304 = scmp.eq.s32.totalorder %s21, 1
      %p305 = por %p303, %p304
      %p306 = scmp.ne.s32.totalorder %s298, %s301
      %p307 = scmp.eq.s32.totalorder %s21, 0
      %p308 = por %p306, %p307
      %p309 = scmp.ne.s32.totalorder %s298, %s301
      %p310 = scmp.eq.s32.totalorder %s26, 1
      %p311 = por %p309, %p310
      %p312 = scmp.ne.s32.totalorder %s301, %s302
      %p313 = scmp.eq.s32.totalorder %s26, 0
      %p314 = por %p312, %p313
      %p315 = scmp.ne.s32.totalorder %s301, %s302
      %p316 = scmp.eq.s32.totalorder %s27, 1
      %p317 = por %p315, %p316
      %p319 = scmp.ne.s32.totalorder %s302, %s318
      %p320 = scmp.eq.s32.totalorder %s27, 0
      %p321 = por %p319, %p320
      %p322 = scmp.le.s32.totalorder 1, %s21
      %p323 = scmp.lt.s32.totalorder %s21, 3
      %p324 = pnand %p322, %p323
      %p325 = pneg %p324
      // Predicated region
      $region9: #{t5_decoder_forward.1} parent=5 // pred_check
        _
      $region10: #{t5_decoder_forward.1} parent=5 // pred_check_branch
        %327 = sbr.rel (%p324) target = $region12
      $region11: #{t5_decoder_forward.1} parent=5 // pred_region
        %s328 = ssub.s32 %s21, 1
        // Predicated region
        $region13: #{t5_decoder_forward.1} parent=11 // pred_check
          %p329 = pneg %p94
        $region14: #{t5_decoder_forward.1} parent=11 // pred_check_branch
          %331 = sbr.rel (%p329) target = $region16
        $region15: #{t5_decoder_forward.1} parent=11 // pred_region
          _
        $region16: #{t5_decoder_forward.1} parent=11 // pred_fallthru
          _
        // Predicated region
        $region17: #{t5_decoder_forward.1} parent=11 // pred_check
          %p332 = pneg %p141
        $region18: #{t5_decoder_forward.1} parent=11 // pred_check_branch
          %334 = sbr.rel (%p332) target = $region20
        $region19: #{t5_decoder_forward.1} parent=11 // pred_region
          _
        $region20: #{t5_decoder_forward.1} parent=11 // pred_fallthru
          _
        // Predicated region
        $region21: #{t5_decoder_forward.1} parent=11 // pred_check
          %p335 = pneg %p162
        $region22: #{t5_decoder_forward.1} parent=11 // pred_check_branch
          %337 = sbr.rel (%p335) target = $region24
        $region23: #{t5_decoder_forward.1} parent=11 // pred_region
          _
        $region24: #{t5_decoder_forward.1} parent=11 // pred_fallthru
          _
        // Predicated region
        $region25: #{t5_decoder_forward.1} parent=11 // pred_check
          %p338 = pneg %p183
        $region26: #{t5_decoder_forward.1} parent=11 // pred_check_branch
          %340 = sbr.rel (%p338) target = $region28
        $region27: #{t5_decoder_forward.1} parent=11 // pred_region
          _
        $region28: #{t5_decoder_forward.1} parent=11 // pred_fallthru
          _
        // Predicated region
        $region29: #{t5_decoder_forward.1} parent=11 // pred_check
          %p341 = pneg %p204
        $region30: #{t5_decoder_forward.1} parent=11 // pred_check_branch
          %343 = sbr.rel (%p341) target = $region32
        $region31: #{t5_decoder_forward.1} parent=11 // pred_region
          _
        $region32: #{t5_decoder_forward.1} parent=11 // pred_fallthru
          _
        // Predicated region
        $region33: #{t5_decoder_forward.1} parent=11 // pred_check
          %p344 = pneg %p225
        $region34: #{t5_decoder_forward.1} parent=11 // pred_check_branch
          %346 = sbr.rel (%p344) target = $region36
        $region35: #{t5_decoder_forward.1} parent=11 // pred_region
          _
        $region36: #{t5_decoder_forward.1} parent=11 // pred_fallthru
          _
        // Predicated region
        $region37: #{t5_decoder_forward.1} parent=11 // pred_check
          %p347 = pneg %p246
        $region38: #{t5_decoder_forward.1} parent=11 // pred_check_branch
          %349 = sbr.rel (%p347) target = $region40
        $region39: #{t5_decoder_forward.1} parent=11 // pred_region
          _
        $region40: #{t5_decoder_forward.1} parent=11 // pred_fallthru
          _
        // Predicated region
        $region41: #{t5_decoder_forward.1} parent=11 // pred_check
          %p350 = pneg %p267
        $region42: #{t5_decoder_forward.1} parent=11 // pred_check_branch
          %352 = sbr.rel (%p350) target = $region44
        $region43: #{t5_decoder_forward.1} parent=11 // pred_region
          _
        $region44: #{t5_decoder_forward.1} parent=11 // pred_fallthru
          _
        // Predicated region
        $region45: #{t5_decoder_forward.1} parent=11 // pred_check
          %p353 = pneg %p288
        $region46: #{t5_decoder_forward.1} parent=11 // pred_check_branch
          %355 = sbr.rel (%p353) target = $region48
        $region47: #{t5_decoder_forward.1} parent=11 // pred_region
          _
        $region48: #{t5_decoder_forward.1} parent=11 // pred_fallthru
          _
      $region12: #{t5_decoder_forward.1} parent=5 // pred_fallthru
        _
      %p356 = scmp.lt.s32.totalorder %s21, 2
      // Predicated region
      $region49: #{t5_decoder_forward.1} parent=5 // pred_check
        %p357 = pneg %p356
      $region50: #{t5_decoder_forward.1} parent=5 // pred_check_branch
        %359 = sbr.rel (%p357) target = $region52
      $region51: #{t5_decoder_forward.1} parent=5 // pred_region
        // Predicated region
        $region53: #{t5_decoder_forward.1} parent=51 // pred_check
          %p360 = pneg %p41
        $region54: #{t5_decoder_forward.1} parent=51 // pred_check_branch
          %362 = sbr.rel (%p360) target = $region56
        $region55: #{t5_decoder_forward.1} parent=51 // pred_region
          %p363 = scmp.lt.s32.totalorder %s21, 1
          %s364 = scalar_select %p363, %s21, 1
          %s365 = smul.addr %s364, 8
          %s366 = scalar_lea.vmem %s0, %s365
        $region56: #{t5_decoder_forward.1} parent=51 // pred_fallthru
          _
        // Predicated region
        $region57: #{t5_decoder_forward.1} parent=51 // pred_check
          %p367 = pneg %p67
        $region58: #{t5_decoder_forward.1} parent=51 // pred_check_branch
          %369 = sbr.rel (%p367) target = $region60
        $region59: #{t5_decoder_forward.1} parent=51 // pred_region
          %p370 = scmp.lt.s32.totalorder %s21, 1
          %s371 = scalar_select %p370, %s21, 1
          %s372 = smul.addr %s371, 8
          %s373 = scalar_lea.vmem %s1, %s372
        $region60: #{t5_decoder_forward.1} parent=51 // pred_fallthru
          _
        // Predicated region
        $region61: #{t5_decoder_forward.1} parent=51 // pred_check
          %p374 = pneg %p114
        $region62: #{t5_decoder_forward.1} parent=51 // pred_check_branch
          %376 = sbr.rel (%p374) target = $region64
        $region63: #{t5_decoder_forward.1} parent=51 // pred_region
          %p377 = scmp.lt.s32.totalorder %s21, 1
          %s378 = scalar_select %p377, %s21, 1
          %s379 = scalar_lea.vmem %s3, %s378
        $region64: #{t5_decoder_forward.1} parent=51 // pred_fallthru
          _
      $region52: #{t5_decoder_forward.1} parent=5 // pred_fallthru
        _
      %p380 = scmp.le.s32.totalorder 1, %s21
      %p381 = scmp.lt.s32.totalorder %s21, 3
      %p382 = pnand %p380, %p381
      %p383 = pneg %p382
      // Predicated region
      $region65: #{t5_decoder_forward.1} parent=5 // pred_check
        _
      $region66: #{t5_decoder_forward.1} parent=5 // pred_check_branch
        %385 = sbr.rel (%p382) target = $region68
      $region67: #{t5_decoder_forward.1} parent=5 // pred_region
        %s386 = ssub.s32 %s21, 1
        %p387 = scmp.lt.s32.totalorder %s26, 1
        %s388 = scalar_select %p387, %s26, 1
        %s389 = smul.addr %s388, 8
        %s390 = scalar_lea.vmem %s0, %s389
        %p391 = pneg %p47
        %p392 = pneg %p44
        %p393 = scmp.lt.s32.totalorder %s26, 1
        %s394 = scalar_select %p393, %s26, 1
        %s395 = smul.addr %s394, 8
        %s396 = scalar_lea.vmem %s1, %s395
        %p397 = pneg %p73
        %p398 = pneg %p70
        %p399 = pneg %p94
        %p400 = pneg %p91
        %p401 = scmp.lt.s32.totalorder %s26, 1
        %s402 = scalar_select %p401, %s26, 1
        %s403 = scalar_lea.vmem %s3, %s402
        %p404 = pneg %p120
        %p405 = pneg %p117
        %p406 = pneg %p141
        %p407 = pneg %p138
        %p408 = pneg %p162
        %p409 = pneg %p159
        %p410 = pneg %p183
        %p411 = pneg %p180
        %p412 = pneg %p204
        %p413 = pneg %p201
        %p414 = pneg %p225
        %p415 = pneg %p222
        %p416 = pneg %p246
        %p417 = pneg %p243
        %p418 = pneg %p267
        %p419 = pneg %p264
        %p420 = pneg %p288
        %p421 = pneg %p285
        %p422 = pneg %p314
        %p423 = pneg %p311
        %s424 = sand.u32 %s301, 1
        %s425 = scalar_lea.sflag [#allocation3], %s424
        %s426 = sand.u32 %s301, 1
        %s427 = smul.addr %s426, 8
        %s428 = scalar_lea.vmem [#allocation2], %s427
        %p429 = scmp.lt.s32.totalorder %s26, 1
        %s430 = scalar_select %p429, %s26, 1
        %s431 = smul.addr %s430, 8
        %s432 = scalar_lea.vmem %s0, %s431
        %p433 = scmp.lt.s32.totalorder %s26, 1
        %s434 = scalar_select %p433, %s26, 1
        %s435 = smul.addr %s434, 8
        %s436 = scalar_lea.vmem %s1, %s435
        %p437 = scmp.lt.s32.totalorder %s26, 1
        %s438 = scalar_select %p437, %s26, 1
        %s439 = scalar_lea.vmem %s3, %s438
        %v440 = vld [vmem:[%s432] sm:$0xff]
        %v441 = vld [vmem:[%s436] sm:$0xff]
        %v442 = vld [vmem:[%s2] sm:$0xff]
        %v443 = vld [vmem:[%s2 + $0x8] sm:$0xff]
        %v444 = vld [vmem:[%s2 + $0x10] sm:$0xff]
        %v445 = vld [vmem:[%s2 + $0x18] sm:$0xff]
        %v446 = vld [vmem:[%s439] sm:$0x1]
        %v447 = vld [vmem:[%s8] sm:$0xff]
        %v448 = vld [vmem:[%s8 + $0x8] sm:$0xff]
        %v449 = vld [vmem:[%s8 + $0x10] sm:$0xff]
        %v450 = vld [vmem:[%s8 + $0x18] sm:$0xff]
        %vm451 = vcmask 261120
        %v453 = vsel %vm451, %v441, 0
        %455 = vmatprep.subr.mxu0 0.0
        %456 = vmatpush1.msra.mxu0 0.0
        %457 = vmatprep.subr.mxu0 0.0
        %458 = vmatpush1.msra.mxu0 0.0
        %459 = vmatprep.subr.mxu0 0.0
        %460 = vmatpush1.msra.mxu0 0.0
        %461 = vmatprep.subr.mxu0 0.0
        %462 = vmatpush1.msra.mxu0 0.0
        %463 = vmatprep.subr.mxu0 0.0
        %464 = vmatpush1.msra.mxu0 0.0
        %465 = vmatprep.subr.mxu0 0.0
        %466 = vmatpush1.msra.mxu0 0.0
        %467 = vmatprep.subr.mxu0 0.0
        %468 = vmatpush1.msra.mxu0 0.0
        %469 = vmatprep.subr.mxu0 0.0
        %470 = vmatpush1.msra.mxu0 0.0
        %471 = vmatprep.subr.mxu0 0.0
        %472 = vmatpush1.msra.mxu0 0.0
        %473 = vmatprep.subr.mxu0 0.0
        %474 = vmatpush1.msra.mxu0 0.0
        %475 = vmatprep.subr.mxu0 0.0
        %476 = vmatpush1.msra.mxu0 0.0
        %477 = vmatprep.subr.mxu0 0.0
        %478 = vmatpush1.msra.mxu0 0.0
        %479 = vmatprep.subr.mxu0 0.0
        %480 = vmatpush1.msra.mxu0 %v450
        %481 = vmatprep.subr.mxu0 0.0
        %482 = vmatpush1.msra.mxu0 %v449
        %483 = vmatprep.subr.mxu0 0.0
        %484 = vmatpush1.msra.mxu0 %v448
        %485 = vmatprep.subr.mxu0 0.0
        %486 = vmatpush1.msra.mxu0 %v447
        %487 = vmatprep.subr.mxu0 0.0
        %488 = vmatpush2.msra.mxu0 0.0
        %489 = vmatprep.subr.mxu0 0.0
        %490 = vmatpush2.msra.mxu0 0.0
        %491 = vmatprep.subr.mxu0 0.0
        %492 = vmatpush2.msra.mxu0 0.0
        %493 = vmatprep.subr.mxu0 0.0
        %494 = vmatpush2.msra.mxu0 0.0
        %495 = vmatprep.subr.mxu0 0.0
        %496 = vmatpush2.msra.mxu0 0.0
        %497 = vmatprep.subr.mxu0 0.0
        %498 = vmatpush2.msra.mxu0 0.0
        %499 = vmatprep.subr.mxu0 0.0
        %500 = vmatpush2.msra.mxu0 0.0
        %501 = vmatprep.subr.mxu0 0.0
        %502 = vmatpush2.msra.mxu0 0.0
        %503 = vmatprep.subr.mxu0 0.0
        %504 = vmatpush2.msra.mxu0 0.0
        %505 = vmatprep.subr.mxu0 0.0
        %506 = vmatpush2.msra.mxu0 0.0
        %507 = vmatprep.subr.mxu0 0.0
        %508 = vmatpush2.msra.mxu0 0.0
        %509 = vmatprep.subr.mxu0 0.0
        %510 = vmatpush2.msra.mxu0 0.0
        %511 = vmatprep.subr.mxu0 0.0
        %512 = vmatpush2.msra.mxu0 0.0
        %513 = vmatprep.subr.mxu0 0.0
        %514 = vmatpush2.msra.mxu0 0.0
        %515 = vmatprep.subr.mxu0 0.0
        %516 = vmatpush2.msra.mxu0 0.0
        %517 = vmatprep.subr.mxu0 0.0
        %518 = vmatpush2.msra.mxu0 0.0
        %519 = vmatprep.mubr.f32.mxu0 0.0
        %520 = vmatmul.mubr.f32.gmra.mxu0 %v453
        %v521 = vpop.f32.mrf.mxu0
        %v522 = vadd.f32 0.0, %v521
        %v523 = vpop.f32.mrf.mxu0
        %524 = vdwg.mxu0
        %v525 = vmul.f32 %v440, %v440
        %v526 = vsel %vm451, %v525, 0.0
        %527 = vadd.xlane.f32.xlu0 %v526
        %v528 = vpop.xlane.xlu0 %527
        %v529 = vrcp.pop 32.0
        %v530 = vmul.f32 %v528, %v529
        %v531 = vadd.f32 %v530, 1e-06
        %v532 = vrsqrt.pop %v531
        %v533 = vmul.f32 %v440, %v532
        %v534 = vld [vmem:[%s5] sm:$0xff]
        %v535 = vld [vmem:[%s5 + $0x8] sm:$0xff]
        %v536 = vld [vmem:[%s5 + $0x10] sm:$0xff]
        %v537 = vld [vmem:[%s5 + $0x18] sm:$0xff]
        %v539 = vsel %vm451, %v533, 0
        %541 = vmatprep.subr.mxu0 0.0
        %542 = vmatpush1.msra.mxu0 0.0
        %543 = vmatprep.subr.mxu0 0.0
        %544 = vmatpush1.msra.mxu0 0.0
        %545 = vmatprep.subr.mxu0 0.0
        %546 = vmatpush1.msra.mxu0 0.0
        %547 = vmatprep.subr.mxu0 0.0
        %548 = vmatpush1.msra.mxu0 0.0
        %549 = vmatprep.subr.mxu0 0.0
        %550 = vmatpush1.msra.mxu0 0.0
        %551 = vmatprep.subr.mxu0 0.0
        %552 = vmatpush1.msra.mxu0 0.0
        %553 = vmatprep.subr.mxu0 0.0
        %554 = vmatpush1.msra.mxu0 0.0
        %555 = vmatprep.subr.mxu0 0.0
        %556 = vmatpush1.msra.mxu0 0.0
        %557 = vmatprep.subr.mxu0 0.0
        %558 = vmatpush1.msra.mxu0 0.0
        %559 = vmatprep.subr.mxu0 0.0
        %560 = vmatpush1.msra.mxu0 0.0
        %561 = vmatprep.subr.mxu0 0.0
        %562 = vmatpush1.msra.mxu0 0.0
        %563 = vmatprep.subr.mxu0 0.0
        %564 = vmatpush1.msra.mxu0 0.0
        %565 = vmatprep.subr.mxu0 0.0
        %566 = vmatpush1.msra.mxu0 %v537
        %567 = vmatprep.subr.mxu0 0.0
        %568 = vmatpush1.msra.mxu0 %v536
        %569 = vmatprep.subr.mxu0 0.0
        %570 = vmatpush1.msra.mxu0 %v535
        %571 = vmatprep.subr.mxu0 0.0
        %572 = vmatpush1.msra.mxu0 %v534
        %573 = vmatprep.subr.mxu0 0.0
        %574 = vmatpush2.msra.mxu0 0.0
        %575 = vmatprep.subr.mxu0 0.0
        %576 = vmatpush2.msra.mxu0 0.0
        %577 = vmatprep.subr.mxu0 0.0
        %578 = vmatpush2.msra.mxu0 0.0
        %579 = vmatprep.subr.mxu0 0.0
        %580 = vmatpush2.msra.mxu0 0.0
        %581 = vmatprep.subr.mxu0 0.0
        %582 = vmatpush2.msra.mxu0 0.0
        %583 = vmatprep.subr.mxu0 0.0
        %584 = vmatpush2.msra.mxu0 0.0
        %585 = vmatprep.subr.mxu0 0.0
        %586 = vmatpush2.msra.mxu0 0.0
        %587 = vmatprep.subr.mxu0 0.0
        %588 = vmatpush2.msra.mxu0 0.0
        %589 = vmatprep.subr.mxu0 0.0
        %590 = vmatpush2.msra.mxu0 0.0
        %591 = vmatprep.subr.mxu0 0.0
        %592 = vmatpush2.msra.mxu0 0.0
        %593 = vmatprep.subr.mxu0 0.0
        %594 = vmatpush2.msra.mxu0 0.0
        %595 = vmatprep.subr.mxu0 0.0
        %596 = vmatpush2.msra.mxu0 0.0
        %597 = vmatprep.subr.mxu0 0.0
        %598 = vmatpush2.msra.mxu0 0.0
        %599 = vmatprep.subr.mxu0 0.0
        %600 = vmatpush2.msra.mxu0 0.0
        %601 = vmatprep.subr.mxu0 0.0
        %602 = vmatpush2.msra.mxu0 0.0
        %603 = vmatprep.subr.mxu0 0.0
        %604 = vmatpush2.msra.mxu0 0.0
        %605 = vmatprep.mubr.f32.mxu0 0.0
        %606 = vmatmul.mubr.f32.gmra.mxu0 %v539
        %v607 = vpop.f32.mrf.mxu0
        %v608 = vadd.f32 0.0, %v607
        %v609 = vpop.f32.mrf.mxu0
        %610 = vdwg.mxu0
        %v611 = vld [vmem:[%s6] sm:$0xff]
        %v612 = vld [vmem:[%s6 + $0x8] sm:$0xff]
        %v613 = vld [vmem:[%s6 + $0x10] sm:$0xff]
        %v614 = vld [vmem:[%s6 + $0x18] sm:$0xff]
        %616 = vrot.lane.b32.xlu0 %v608, 96
        %v617 = vpop.permute.xlu0 %616
        %vm618 = vcmask 64512
        %v619 = vsel %vm618, %v608, 0
        %v621 = vsel %vm618, %v617, 0
        %623 = vmatprep.subr.mxu0 0.0
        %624 = vmatpush1.xpose.msra.mxu0 0.0
        %625 = vmatprep.subr.mxu0 0.0
        %626 = vmatpush1.xpose.msra.mxu0 0.0
        %627 = vmatprep.subr.mxu0 0.0
        %628 = vmatpush1.xpose.msra.mxu0 0.0
        %629 = vmatprep.subr.mxu0 0.0
        %630 = vmatpush1.xpose.msra.mxu0 0.0
        %631 = vmatprep.subr.mxu0 0.0
        %632 = vmatpush1.xpose.msra.mxu0 0.0
        %633 = vmatprep.subr.mxu0 0.0
        %634 = vmatpush1.xpose.msra.mxu0 0.0
        %635 = vmatprep.subr.mxu0 0.0
        %636 = vmatpush1.xpose.msra.mxu0 0.0
        %637 = vmatprep.subr.mxu0 0.0
        %638 = vmatpush1.xpose.msra.mxu0 0.0
        %639 = vmatprep.subr.mxu0 0.0
        %640 = vmatpush1.xpose.msra.mxu0 0.0
        %641 = vmatprep.subr.mxu0 0.0
        %642 = vmatpush1.xpose.msra.mxu0 0.0
        %643 = vmatprep.subr.mxu0 0.0
        %644 = vmatpush1.xpose.msra.mxu0 0.0
        %645 = vmatprep.subr.mxu0 0.0
        %646 = vmatpush1.xpose.msra.mxu0 0.0
        %647 = vmatprep.subr.mxu0 0.0
        %648 = vmatpush1.xpose.msra.mxu0 0.0
        %649 = vmatprep.subr.mxu0 0.0
        %650 = vmatpush1.xpose.msra.mxu0 0.0
        %651 = vmatprep.subr.mxu0 0.0
        %652 = vmatpush1.xpose.msra.mxu0 0.0
        %653 = vmatprep.subr.mxu0 0.0
        %654 = vmatpush1.xpose.msra.mxu0 %v621
        %655 = vmatprep.subr.mxu0 0.0
        %656 = vmatpush2.xpose.msra.mxu0 0.0
        %657 = vmatprep.subr.mxu0 0.0
        %658 = vmatpush2.xpose.msra.mxu0 0.0
        %659 = vmatprep.subr.mxu0 0.0
        %660 = vmatpush2.xpose.msra.mxu0 0.0
        %661 = vmatprep.subr.mxu0 0.0
        %662 = vmatpush2.xpose.msra.mxu0 0.0
        %663 = vmatprep.subr.mxu0 0.0
        %664 = vmatpush2.xpose.msra.mxu0 0.0
        %665 = vmatprep.subr.mxu0 0.0
        %666 = vmatpush2.xpose.msra.mxu0 0.0
        %667 = vmatprep.subr.mxu0 0.0
        %668 = vmatpush2.xpose.msra.mxu0 0.0
        %669 = vmatprep.subr.mxu0 0.0
        %670 = vmatpush2.xpose.msra.mxu0 0.0
        %671 = vmatprep.subr.mxu0 0.0
        %672 = vmatpush2.xpose.msra.mxu0 0.0
        %673 = vmatprep.subr.mxu0 0.0
        %674 = vmatpush2.xpose.msra.mxu0 0.0
        %675 = vmatprep.subr.mxu0 0.0
        %676 = vmatpush2.xpose.msra.mxu0 0.0
        %677 = vmatprep.subr.mxu0 0.0
        %678 = vmatpush2.xpose.msra.mxu0 0.0
        %679 = vmatprep.subr.mxu0 0.0
        %680 = vmatpush2.xpose.msra.mxu0 0.0
        %681 = vmatprep.subr.mxu0 0.0
        %682 = vmatpush2.xpose.msra.mxu0 0.0
        %683 = vmatprep.subr.mxu0 0.0
        %684 = vmatpush2.xpose.msra.mxu0 0.0
        %685 = vmatprep.subr.mxu0 0.0
        %686 = vmatpush2.xpose.msra.mxu0 0.0
        %687 = vmatprep.mubr.f32.mxu0 0.0
        %688 = vmatmul.mubr.f32.gmra.mxu0 %v619
        %v689 = vpop.f32.mrf.mxu0
        %v690 = vadd.f32 %v442, %v689
        %v691 = vpop.f32.mrf.mxu0
        %692 = vdwg.mxu0
        %v693 = vsel %vm618, %v690, -inf
        %694 = vmax.xlane.f32.xlu0 %v693
        %v695 = vpop.xlane.xlu0 %694
        %v696 = vsub.f32 %v690, %v695
        %v697 = vmul.f32 %v696, 1.442695
        %v698 = vpow.pop %v697
        %v699 = vsel %vm618, %v698, 0.0
        %700 = vadd.xlane.f32.xlu0 %v699
        %v701 = vpop.xlane.xlu0 %700
        %v702 = vrcp.pop %v701
        %v703 = vmul.f32 %v698, %v702
        %704 = vrot.lane.b32.xlu0 %v608, 64
        %v705 = vpop.permute.xlu0 %704
        %v708 = vsel %vm618, %v703, 0
        %710 = vmatprep.subr.mxu0 0.0
        %711 = vmatpush1.msra.mxu0 0.0
        %712 = vmatprep.subr.mxu0 0.0
        %713 = vmatpush1.msra.mxu0 0.0
        %714 = vmatprep.subr.mxu0 0.0
        %715 = vmatpush1.msra.mxu0 0.0
        %716 = vmatprep.subr.mxu0 0.0
        %717 = vmatpush1.msra.mxu0 0.0
        %718 = vmatprep.subr.mxu0 0.0
        %719 = vmatpush1.msra.mxu0 0.0
        %720 = vmatprep.subr.mxu0 0.0
        %721 = vmatpush1.msra.mxu0 0.0
        %722 = vmatprep.subr.mxu0 0.0
        %723 = vmatpush1.msra.mxu0 0.0
        %724 = vmatprep.subr.mxu0 0.0
        %725 = vmatpush1.msra.mxu0 0.0
        %726 = vmatprep.subr.mxu0 0.0
        %727 = vmatpush1.msra.mxu0 0.0
        %728 = vmatprep.subr.mxu0 0.0
        %729 = vmatpush1.msra.mxu0 0.0
        %730 = vmatprep.subr.mxu0 0.0
        %731 = vmatpush1.msra.mxu0 0.0
        %732 = vmatprep.subr.mxu0 0.0
        %733 = vmatpush1.msra.mxu0 0.0
        %734 = vmatprep.subr.mxu0 0.0
        %735 = vmatpush1.msra.mxu0 0.0
        %736 = vmatprep.subr.mxu0 0.0
        %737 = vmatpush1.msra.mxu0 0.0
        %738 = vmatprep.subr.mxu0 0.0
        %739 = vmatpush1.msra.mxu0 0.0
        %740 = vmatprep.subr.mxu0 0.0
        %741 = vmatpush1.msra.mxu0 %v705
        %742 = vmatprep.subr.mxu0 0.0
        %743 = vmatpush2.msra.mxu0 0.0
        %744 = vmatprep.subr.mxu0 0.0
        %745 = vmatpush2.msra.mxu0 0.0
        %746 = vmatprep.subr.mxu0 0.0
        %747 = vmatpush2.msra.mxu0 0.0
        %748 = vmatprep.subr.mxu0 0.0
        %749 = vmatpush2.msra.mxu0 0.0
        %750 = vmatprep.subr.mxu0 0.0
        %751 = vmatpush2.msra.mxu0 0.0
        %752 = vmatprep.subr.mxu0 0.0
        %753 = vmatpush2.msra.mxu0 0.0
        %754 = vmatprep.subr.mxu0 0.0
        %755 = vmatpush2.msra.mxu0 0.0
        %756 = vmatprep.subr.mxu0 0.0
        %757 = vmatpush2.msra.mxu0 0.0
        %758 = vmatprep.subr.mxu0 0.0
        %759 = vmatpush2.msra.mxu0 0.0
        %760 = vmatprep.subr.mxu0 0.0
        %761 = vmatpush2.msra.mxu0 0.0
        %762 = vmatprep.subr.mxu0 0.0
        %763 = vmatpush2.msra.mxu0 0.0
        %764 = vmatprep.subr.mxu0 0.0
        %765 = vmatpush2.msra.mxu0 0.0
        %766 = vmatprep.subr.mxu0 0.0
        %767 = vmatpush2.msra.mxu0 0.0
        %768 = vmatprep.subr.mxu0 0.0
        %769 = vmatpush2.msra.mxu0 0.0
        %770 = vmatprep.subr.mxu0 0.0
        %771 = vmatpush2.msra.mxu0 0.0
        %772 = vmatprep.subr.mxu0 0.0
        %773 = vmatpush2.msra.mxu0 0.0
        %774 = vmatprep.mubr.f32.mxu0 0.0
        %775 = vmatmul.mubr.f32.gmra.mxu0 %v708
        %v776 = vpop.f32.mrf.mxu0
        %v777 = vadd.f32 0.0, %v776
        %v778 = vpop.f32.mrf.mxu0
        %779 = vdwg.mxu0
        %780 = vrot.lane.b32.xlu0 %v608, 120
        %v781 = vpop.permute.xlu0 %780
        %782 = vrot.lane.b32.xlu0 %v608, 88
        %v783 = vpop.permute.xlu0 %782
        %v784 = vsel %vm618, %v781, 0
        %v786 = vsel %vm618, %v783, 0
        %788 = vmatprep.subr.mxu0 0.0
        %789 = vmatpush1.xpose.msra.mxu0 0.0
        %790 = vmatprep.subr.mxu0 0.0
        %791 = vmatpush1.xpose.msra.mxu0 0.0
        %792 = vmatprep.subr.mxu0 0.0
        %793 = vmatpush1.xpose.msra.mxu0 0.0
        %794 = vmatprep.subr.mxu0 0.0
        %795 = vmatpush1.xpose.msra.mxu0 0.0
        %796 = vmatprep.subr.mxu0 0.0
        %797 = vmatpush1.xpose.msra.mxu0 0.0
        %798 = vmatprep.subr.mxu0 0.0
        %799 = vmatpush1.xpose.msra.mxu0 0.0
        %800 = vmatprep.subr.mxu0 0.0
        %801 = vmatpush1.xpose.msra.mxu0 0.0
        %802 = vmatprep.subr.mxu0 0.0
        %803 = vmatpush1.xpose.msra.mxu0 0.0
        %804 = vmatprep.subr.mxu0 0.0
        %805 = vmatpush1.xpose.msra.mxu0 0.0
        %806 = vmatprep.subr.mxu0 0.0
        %807 = vmatpush1.xpose.msra.mxu0 0.0
        %808 = vmatprep.subr.mxu0 0.0
        %809 = vmatpush1.xpose.msra.mxu0 0.0
        %810 = vmatprep.subr.mxu0 0.0
        %811 = vmatpush1.xpose.msra.mxu0 0.0
        %812 = vmatprep.subr.mxu0 0.0
        %813 = vmatpush1.xpose.msra.mxu0 0.0
        %814 = vmatprep.subr.mxu0 0.0
        %815 = vmatpush1.xpose.msra.mxu0 0.0
        %816 = vmatprep.subr.mxu0 0.0
        %817 = vmatpush1.xpose.msra.mxu0 0.0
        %818 = vmatprep.subr.mxu0 0.0
        %819 = vmatpush1.xpose.msra.mxu0 %v786
        %820 = vmatprep.subr.mxu0 0.0
        %821 = vmatpush2.xpose.msra.mxu0 0.0
        %822 = vmatprep.subr.mxu0 0.0
        %823 = vmatpush2.xpose.msra.mxu0 0.0
        %824 = vmatprep.subr.mxu0 0.0
        %825 = vmatpush2.xpose.msra.mxu0 0.0
        %826 = vmatprep.subr.mxu0 0.0
        %827 = vmatpush2.xpose.msra.mxu0 0.0
        %828 = vmatprep.subr.mxu0 0.0
        %829 = vmatpush2.xpose.msra.mxu0 0.0
        %830 = vmatprep.subr.mxu0 0.0
        %831 = vmatpush2.xpose.msra.mxu0 0.0
        %832 = vmatprep.subr.mxu0 0.0
        %833 = vmatpush2.xpose.msra.mxu0 0.0
        %834 = vmatprep.subr.mxu0 0.0
        %835 = vmatpush2.xpose.msra.mxu0 0.0
        %836 = vmatprep.subr.mxu0 0.0
        %837 = vmatpush2.xpose.msra.mxu0 0.0
        %838 = vmatprep.subr.mxu0 0.0
        %839 = vmatpush2.xpose.msra.mxu0 0.0
        %840 = vmatprep.subr.mxu0 0.0
        %841 = vmatpush2.xpose.msra.mxu0 0.0
        %842 = vmatprep.subr.mxu0 0.0
        %843 = vmatpush2.xpose.msra.mxu0 0.0
        %844 = vmatprep.subr.mxu0 0.0
        %845 = vmatpush2.xpose.msra.mxu0 0.0
        %846 = vmatprep.subr.mxu0 0.0
        %847 = vmatpush2.xpose.msra.mxu0 0.0
        %848 = vmatprep.subr.mxu0 0.0
        %849 = vmatpush2.xpose.msra.mxu0 0.0
        %850 = vmatprep.subr.mxu0 0.0
        %851 = vmatpush2.xpose.msra.mxu0 0.0
        %852 = vmatprep.mubr.f32.mxu0 0.0
        %853 = vmatmul.mubr.f32.gmra.mxu0 %v784
        %v854 = vpop.f32.mrf.mxu0
        %v855 = vadd.f32 %v443, %v854
        %v856 = vpop.f32.mrf.mxu0
        %857 = vdwg.mxu0
        %v858 = vsel %vm618, %v855, -inf
        %859 = vmax.xlane.f32.xlu0 %v858
        %v860 = vpop.xlane.xlu0 %859
        %v861 = vsub.f32 %v855, %v860
        %v862 = vmul.f32 %v861, 1.442695
        %v863 = vpow.pop %v862
        %v864 = vsel %vm618, %v863, 0.0
        %865 = vadd.xlane.f32.xlu0 %v864
        %v866 = vpop.xlane.xlu0 %865
        %v867 = vrcp.pop %v866
        %v868 = vmul.f32 %v863, %v867
        %869 = vrot.lane.b32.xlu0 %v608, 56
        %v870 = vpop.permute.xlu0 %869
        %v873 = vsel %vm618, %v868, 0
        %875 = vmatprep.subr.mxu0 0.0
        %876 = vmatpush1.msra.mxu0 0.0
        %877 = vmatprep.subr.mxu0 0.0
        %878 = vmatpush1.msra.mxu0 0.0
        %879 = vmatprep.subr.mxu0 0.0
        %880 = vmatpush1.msra.mxu0 0.0
        %881 = vmatprep.subr.mxu0 0.0
        %882 = vmatpush1.msra.mxu0 0.0
        %883 = vmatprep.subr.mxu0 0.0
        %884 = vmatpush1.msra.mxu0 0.0
        %885 = vmatprep.subr.mxu0 0.0
        %886 = vmatpush1.msra.mxu0 0.0
        %887 = vmatprep.subr.mxu0 0.0
        %888 = vmatpush1.msra.mxu0 0.0
        %889 = vmatprep.subr.mxu0 0.0
        %890 = vmatpush1.msra.mxu0 0.0
        %891 = vmatprep.subr.mxu0 0.0
        %892 = vmatpush1.msra.mxu0 0.0
        %893 = vmatprep.subr.mxu0 0.0
        %894 = vmatpush1.msra.mxu0 0.0
        %895 = vmatprep.subr.mxu0 0.0
        %896 = vmatpush1.msra.mxu0 0.0
        %897 = vmatprep.subr.mxu0 0.0
        %898 = vmatpush1.msra.mxu0 0.0
        %899 = vmatprep.subr.mxu0 0.0
        %900 = vmatpush1.msra.mxu0 0.0
        %901 = vmatprep.subr.mxu0 0.0
        %902 = vmatpush1.msra.mxu0 0.0
        %903 = vmatprep.subr.mxu0 0.0
        %904 = vmatpush1.msra.mxu0 0.0
        %905 = vmatprep.subr.mxu0 0.0
        %906 = vmatpush1.msra.mxu0 %v870
        %907 = vmatprep.subr.mxu0 0.0
        %908 = vmatpush2.msra.mxu0 0.0
        %909 = vmatprep.subr.mxu0 0.0
        %910 = vmatpush2.msra.mxu0 0.0
        %911 = vmatprep.subr.mxu0 0.0
        %912 = vmatpush2.msra.mxu0 0.0
        %913 = vmatprep.subr.mxu0 0.0
        %914 = vmatpush2.msra.mxu0 0.0
        %915 = vmatprep.subr.mxu0 0.0
        %916 = vmatpush2.msra.mxu0 0.0
        %917 = vmatprep.subr.mxu0 0.0
        %918 = vmatpush2.msra.mxu0 0.0
        %919 = vmatprep.subr.mxu0 0.0
        %920 = vmatpush2.msra.mxu0 0.0
        %921 = vmatprep.subr.mxu0 0.0
        %922 = vmatpush2.msra.mxu0 0.0
        %923 = vmatprep.subr.mxu0 0.0
        %924 = vmatpush2.msra.mxu0 0.0
        %925 = vmatprep.subr.mxu0 0.0
        %926 = vmatpush2.msra.mxu0 0.0
        %927 = vmatprep.subr.mxu0 0.0
        %928 = vmatpush2.msra.mxu0 0.0
        %929 = vmatprep.subr.mxu0 0.0
        %930 = vmatpush2.msra.mxu0 0.0
        %931 = vmatprep.subr.mxu0 0.0
        %932 = vmatpush2.msra.mxu0 0.0
        %933 = vmatprep.subr.mxu0 0.0
        %934 = vmatpush2.msra.mxu0 0.0
        %935 = vmatprep.subr.mxu0 0.0
        %936 = vmatpush2.msra.mxu0 0.0
        %937 = vmatprep.subr.mxu0 0.0
        %938 = vmatpush2.msra.mxu0 0.0
        %939 = vmatprep.mubr.f32.mxu0 0.0
        %940 = vmatmul.mubr.f32.gmra.mxu0 %v873
        %v941 = vpop.f32.mrf.mxu0
        %v942 = vadd.f32 0.0, %v941
        %v943 = vpop.f32.mrf.mxu0
        %944 = vdwg.mxu0
        %945 = vrot.lane.b32.xlu0 %v608, 112
        %v946 = vpop.permute.xlu0 %945
        %947 = vrot.lane.b32.xlu0 %v608, 80
        %v948 = vpop.permute.xlu0 %947
        %v949 = vsel %vm618, %v946, 0
        %v951 = vsel %vm618, %v948, 0
        %953 = vmatprep.subr.mxu0 0.0
        %954 = vmatpush1.xpose.msra.mxu0 0.0
        %955 = vmatprep.subr.mxu0 0.0
        %956 = vmatpush1.xpose.msra.mxu0 0.0
        %957 = vmatprep.subr.mxu0 0.0
        %958 = vmatpush1.xpose.msra.mxu0 0.0
        %959 = vmatprep.subr.mxu0 0.0
        %960 = vmatpush1.xpose.msra.mxu0 0.0
        %961 = vmatprep.subr.mxu0 0.0
        %962 = vmatpush1.xpose.msra.mxu0 0.0
        %963 = vmatprep.subr.mxu0 0.0
        %964 = vmatpush1.xpose.msra.mxu0 0.0
        %965 = vmatprep.subr.mxu0 0.0
        %966 = vmatpush1.xpose.msra.mxu0 0.0
        %967 = vmatprep.subr.mxu0 0.0
        %968 = vmatpush1.xpose.msra.mxu0 0.0
        %969 = vmatprep.subr.mxu0 0.0
        %970 = vmatpush1.xpose.msra.mxu0 0.0
        %971 = vmatprep.subr.mxu0 0.0
        %972 = vmatpush1.xpose.msra.mxu0 0.0
        %973 = vmatprep.subr.mxu0 0.0
        %974 = vmatpush1.xpose.msra.mxu0 0.0
        %975 = vmatprep.subr.mxu0 0.0
        %976 = vmatpush1.xpose.msra.mxu0 0.0
        %977 = vmatprep.subr.mxu0 0.0
        %978 = vmatpush1.xpose.msra.mxu0 0.0
        %979 = vmatprep.subr.mxu0 0.0
        %980 = vmatpush1.xpose.msra.mxu0 0.0
        %981 = vmatprep.subr.mxu0 0.0
        %982 = vmatpush1.xpose.msra.mxu0 0.0
        %983 = vmatprep.subr.mxu0 0.0
        %984 = vmatpush1.xpose.msra.mxu0 %v951
        %985 = vmatprep.subr.mxu0 0.0
        %986 = vmatpush2.xpose.msra.mxu0 0.0
        %987 = vmatprep.subr.mxu0 0.0
        %988 = vmatpush2.xpose.msra.mxu0 0.0
        %989 = vmatprep.subr.mxu0 0.0
        %990 = vmatpush2.xpose.msra.mxu0 0.0
        %991 = vmatprep.subr.mxu0 0.0
        %992 = vmatpush2.xpose.msra.mxu0 0.0
        %993 = vmatprep.subr.mxu0 0.0
        %994 = vmatpush2.xpose.msra.mxu0 0.0
        %995 = vmatprep.subr.mxu0 0.0
        %996 = vmatpush2.xpose.msra.mxu0 0.0
        %997 = vmatprep.subr.mxu0 0.0
        %998 = vmatpush2.xpose.msra.mxu0 0.0
        %999 = vmatprep.subr.mxu0 0.0
        %1000 = vmatpush2.xpose.msra.mxu0 0.0
        %1001 = vmatprep.subr.mxu0 0.0
        %1002 = vmatpush2.xpose.msra.mxu0 0.0
        %1003 = vmatprep.subr.mxu0 0.0
        %1004 = vmatpush2.xpose.msra.mxu0 0.0
        %1005 = vmatprep.subr.mxu0 0.0
        %1006 = vmatpush2.xpose.msra.mxu0 0.0
        %1007 = vmatprep.subr.mxu0 0.0
        %1008 = vmatpush2.xpose.msra.mxu0 0.0
        %1009 = vmatprep.subr.mxu0 0.0
        %1010 = vmatpush2.xpose.msra.mxu0 0.0
        %1011 = vmatprep.subr.mxu0 0.0
        %1012 = vmatpush2.xpose.msra.mxu0 0.0
        %1013 = vmatprep.subr.mxu0 0.0
        %1014 = vmatpush2.xpose.msra.mxu0 0.0
        %1015 = vmatprep.subr.mxu0 0.0
        %1016 = vmatpush2.xpose.msra.mxu0 0.0
        %1017 = vmatprep.mubr.f32.mxu0 0.0
        %1018 = vmatmul.mubr.f32.gmra.mxu0 %v949
        %v1019 = vpop.f32.mrf.mxu0
        %v1020 = vadd.f32 %v444, %v1019
        %v1021 = vpop.f32.mrf.mxu0
        %1022 = vdwg.mxu0
        %v1023 = vsel %vm618, %v1020, -inf
        %1024 = vmax.xlane.f32.xlu0 %v1023
        %v1025 = vpop.xlane.xlu0 %1024
        %v1026 = vsub.f32 %v1020, %v1025
        %v1027 = vmul.f32 %v1026, 1.442695
        %v1028 = vpow.pop %v1027
        %v1029 = vsel %vm618, %v1028, 0.0
        %1030 = vadd.xlane.f32.xlu0 %v1029
        %v1031 = vpop.xlane.xlu0 %1030
        %v1032 = vrcp.pop %v1031
        %v1033 = vmul.f32 %v1028, %v1032
        %1034 = vrot.lane.b32.xlu0 %v608, 48
        %v1035 = vpop.permute.xlu0 %1034
        %v1038 = vsel %vm618, %v1033, 0
        %1040 = vmatprep.subr.mxu0 0.0
        %1041 = vmatpush1.msra.mxu0 0.0
        %1042 = vmatprep.subr.mxu0 0.0
        %1043 = vmatpush1.msra.mxu0 0.0
        %1044 = vmatprep.subr.mxu0 0.0
        %1045 = vmatpush1.msra.mxu0 0.0
        %1046 = vmatprep.subr.mxu0 0.0
        %1047 = vmatpush1.msra.mxu0 0.0
        %1048 = vmatprep.subr.mxu0 0.0
        %1049 = vmatpush1.msra.mxu0 0.0
        %1050 = vmatprep.subr.mxu0 0.0
        %1051 = vmatpush1.msra.mxu0 0.0
        %1052 = vmatprep.subr.mxu0 0.0
        %1053 = vmatpush1.msra.mxu0 0.0
        %1054 = vmatprep.subr.mxu0 0.0
        %1055 = vmatpush1.msra.mxu0 0.0
        %1056 = vmatprep.subr.mxu0 0.0
        %1057 = vmatpush1.msra.mxu0 0.0
        %1058 = vmatprep.subr.mxu0 0.0
        %1059 = vmatpush1.msra.mxu0 0.0
        %1060 = vmatprep.subr.mxu0 0.0
        %1061 = vmatpush1.msra.mxu0 0.0
        %1062 = vmatprep.subr.mxu0 0.0
        %1063 = vmatpush1.msra.mxu0 0.0
        %1064 = vmatprep.subr.mxu0 0.0
        %1065 = vmatpush1.msra.mxu0 0.0
        %1066 = vmatprep.subr.mxu0 0.0
        %1067 = vmatpush1.msra.mxu0 0.0
        %1068 = vmatprep.subr.mxu0 0.0
        %1069 = vmatpush1.msra.mxu0 0.0
        %1070 = vmatprep.subr.mxu0 0.0
        %1071 = vmatpush1.msra.mxu0 %v1035
        %1072 = vmatprep.subr.mxu0 0.0
        %1073 = vmatpush2.msra.mxu0 0.0
        %1074 = vmatprep.subr.mxu0 0.0
        %1075 = vmatpush2.msra.mxu0 0.0
        %1076 = vmatprep.subr.mxu0 0.0
        %1077 = vmatpush2.msra.mxu0 0.0
        %1078 = vmatprep.subr.mxu0 0.0
        %1079 = vmatpush2.msra.mxu0 0.0
        %1080 = vmatprep.subr.mxu0 0.0
        %1081 = vmatpush2.msra.mxu0 0.0
        %1082 = vmatprep.subr.mxu0 0.0
        %1083 = vmatpush2.msra.mxu0 0.0
        %1084 = vmatprep.subr.mxu0 0.0
        %1085 = vmatpush2.msra.mxu0 0.0
        %1086 = vmatprep.subr.mxu0 0.0
        %1087 = vmatpush2.msra.mxu0 0.0
        %1088 = vmatprep.subr.mxu0 0.0
        %1089 = vmatpush2.msra.mxu0 0.0
        %1090 = vmatprep.subr.mxu0 0.0
        %1091 = vmatpush2.msra.mxu0 0.0
        %1092 = vmatprep.subr.mxu0 0.0
        %1093 = vmatpush2.msra.mxu0 0.0
        %1094 = vmatprep.subr.mxu0 0.0
        %1095 = vmatpush2.msra.mxu0 0.0
        %1096 = vmatprep.subr.mxu0 0.0
        %1097 = vmatpush2.msra.mxu0 0.0
        %1098 = vmatprep.subr.mxu0 0.0
        %1099 = vmatpush2.msra.mxu0 0.0
        %1100 = vmatprep.subr.mxu0 0.0
        %1101 = vmatpush2.msra.mxu0 0.0
        %1102 = vmatprep.subr.mxu0 0.0
        %1103 = vmatpush2.msra.mxu0 0.0
        %1104 = vmatprep.mubr.f32.mxu0 0.0
        %1105 = vmatmul.mubr.f32.gmra.mxu0 %v1038
        %v1106 = vpop.f32.mrf.mxu0
        %v1107 = vadd.f32 0.0, %v1106
        %v1108 = vpop.f32.mrf.mxu0
        %1109 = vdwg.mxu0
        %1110 = vrot.lane.b32.xlu0 %v608, 104
        %v1111 = vpop.permute.xlu0 %1110
        %1112 = vrot.lane.b32.xlu0 %v608, 72
        %v1113 = vpop.permute.xlu0 %1112
        %v1114 = vsel %vm618, %v1111, 0
        %v1116 = vsel %vm618, %v1113, 0
        %1118 = vmatprep.subr.mxu0 0.0
        %1119 = vmatpush1.xpose.msra.mxu0 0.0
        %1120 = vmatprep.subr.mxu0 0.0
        %1121 = vmatpush1.xpose.msra.mxu0 0.0
        %1122 = vmatprep.subr.mxu0 0.0
        %1123 = vmatpush1.xpose.msra.mxu0 0.0
        %1124 = vmatprep.subr.mxu0 0.0
        %1125 = vmatpush1.xpose.msra.mxu0 0.0
        %1126 = vmatprep.subr.mxu0 0.0
        %1127 = vmatpush1.xpose.msra.mxu0 0.0
        %1128 = vmatprep.subr.mxu0 0.0
        %1129 = vmatpush1.xpose.msra.mxu0 0.0
        %1130 = vmatprep.subr.mxu0 0.0
        %1131 = vmatpush1.xpose.msra.mxu0 0.0
        %1132 = vmatprep.subr.mxu0 0.0
        %1133 = vmatpush1.xpose.msra.mxu0 0.0
        %1134 = vmatprep.subr.mxu0 0.0
        %1135 = vmatpush1.xpose.msra.mxu0 0.0
        %1136 = vmatprep.subr.mxu0 0.0
        %1137 = vmatpush1.xpose.msra.mxu0 0.0
        %1138 = vmatprep.subr.mxu0 0.0
        %1139 = vmatpush1.xpose.msra.mxu0 0.0
        %1140 = vmatprep.subr.mxu0 0.0
        %1141 = vmatpush1.xpose.msra.mxu0 0.0
        %1142 = vmatprep.subr.mxu0 0.0
        %1143 = vmatpush1.xpose.msra.mxu0 0.0
        %1144 = vmatprep.subr.mxu0 0.0
        %1145 = vmatpush1.xpose.msra.mxu0 0.0
        %1146 = vmatprep.subr.mxu0 0.0
        %1147 = vmatpush1.xpose.msra.mxu0 0.0
        %1148 = vmatprep.subr.mxu0 0.0
        %1149 = vmatpush1.xpose.msra.mxu0 %v1116
        %1150 = vmatprep.subr.mxu0 0.0
        %1151 = vmatpush2.xpose.msra.mxu0 0.0
        %1152 = vmatprep.subr.mxu0 0.0
        %1153 = vmatpush2.xpose.msra.mxu0 0.0
        %1154 = vmatprep.subr.mxu0 0.0
        %1155 = vmatpush2.xpose.msra.mxu0 0.0
        %1156 = vmatprep.subr.mxu0 0.0
        %1157 = vmatpush2.xpose.msra.mxu0 0.0
        %1158 = vmatprep.subr.mxu0 0.0
        %1159 = vmatpush2.xpose.msra.mxu0 0.0
        %1160 = vmatprep.subr.mxu0 0.0
        %1161 = vmatpush2.xpose.msra.mxu0 0.0
        %1162 = vmatprep.subr.mxu0 0.0
        %1163 = vmatpush2.xpose.msra.mxu0 0.0
        %1164 = vmatprep.subr.mxu0 0.0
        %1165 = vmatpush2.xpose.msra.mxu0 0.0
        %1166 = vmatprep.subr.mxu0 0.0
        %1167 = vmatpush2.xpose.msra.mxu0 0.0
        %1168 = vmatprep.subr.mxu0 0.0
        %1169 = vmatpush2.xpose.msra.mxu0 0.0
        %1170 = vmatprep.subr.mxu0 0.0
        %1171 = vmatpush2.xpose.msra.mxu0 0.0
        %1172 = vmatprep.subr.mxu0 0.0
        %1173 = vmatpush2.xpose.msra.mxu0 0.0
        %1174 = vmatprep.subr.mxu0 0.0
        %1175 = vmatpush2.xpose.msra.mxu0 0.0
        %1176 = vmatprep.subr.mxu0 0.0
        %1177 = vmatpush2.xpose.msra.mxu0 0.0
        %1178 = vmatprep.subr.mxu0 0.0
        %1179 = vmatpush2.xpose.msra.mxu0 0.0
        %1180 = vmatprep.subr.mxu0 0.0
        %1181 = vmatpush2.xpose.msra.mxu0 0.0
        %1182 = vmatprep.mubr.f32.mxu0 0.0
        %1183 = vmatmul.mubr.f32.gmra.mxu0 %v1114
        %v1184 = vpop.f32.mrf.mxu0
        %v1185 = vadd.f32 %v445, %v1184
        %v1186 = vpop.f32.mrf.mxu0
        %1187 = vdwg.mxu0
        %v1188 = vsel %vm618, %v1185, -inf
        %1189 = vmax.xlane.f32.xlu0 %v1188
        %v1190 = vpop.xlane.xlu0 %1189
        %v1191 = vsub.f32 %v1185, %v1190
        %v1192 = vmul.f32 %v1191, 1.442695
        %v1193 = vpow.pop %v1192
        %v1194 = vsel %vm618, %v1193, 0.0
        %1195 = vadd.xlane.f32.xlu0 %v1194
        %v1196 = vpop.xlane.xlu0 %1195
        %v1197 = vrcp.pop %v1196
        %v1198 = vmul.f32 %v1193, %v1197
        %1199 = vrot.lane.b32.xlu0 %v608, 40
        %v1200 = vpop.permute.xlu0 %1199
        %v1203 = vsel %vm618, %v1198, 0
        %1205 = vmatprep.subr.mxu0 0.0
        %1206 = vmatpush1.msra.mxu0 0.0
        %1207 = vmatprep.subr.mxu0 0.0
        %1208 = vmatpush1.msra.mxu0 0.0
        %1209 = vmatprep.subr.mxu0 0.0
        %1210 = vmatpush1.msra.mxu0 0.0
        %1211 = vmatprep.subr.mxu0 0.0
        %1212 = vmatpush1.msra.mxu0 0.0
        %1213 = vmatprep.subr.mxu0 0.0
        %1214 = vmatpush1.msra.mxu0 0.0
        %1215 = vmatprep.subr.mxu0 0.0
        %1216 = vmatpush1.msra.mxu0 0.0
        %1217 = vmatprep.subr.mxu0 0.0
        %1218 = vmatpush1.msra.mxu0 0.0
        %1219 = vmatprep.subr.mxu0 0.0
        %1220 = vmatpush1.msra.mxu0 0.0
        %1221 = vmatprep.subr.mxu0 0.0
        %1222 = vmatpush1.msra.mxu0 0.0
        %1223 = vmatprep.subr.mxu0 0.0
        %1224 = vmatpush1.msra.mxu0 0.0
        %1225 = vmatprep.subr.mxu0 0.0
        %1226 = vmatpush1.msra.mxu0 0.0
        %1227 = vmatprep.subr.mxu0 0.0
        %1228 = vmatpush1.msra.mxu0 0.0
        %1229 = vmatprep.subr.mxu0 0.0
        %1230 = vmatpush1.msra.mxu0 0.0
        %1231 = vmatprep.subr.mxu0 0.0
        %1232 = vmatpush1.msra.mxu0 0.0
        %1233 = vmatprep.subr.mxu0 0.0
        %1234 = vmatpush1.msra.mxu0 0.0
        %1235 = vmatprep.subr.mxu0 0.0
        %1236 = vmatpush1.msra.mxu0 %v1200
        %1237 = vmatprep.subr.mxu0 0.0
        %1238 = vmatpush2.msra.mxu0 0.0
        %1239 = vmatprep.subr.mxu0 0.0
        %1240 = vmatpush2.msra.mxu0 0.0
        %1241 = vmatprep.subr.mxu0 0.0
        %1242 = vmatpush2.msra.mxu0 0.0
        %1243 = vmatprep.subr.mxu0 0.0
        %1244 = vmatpush2.msra.mxu0 0.0
        %1245 = vmatprep.subr.mxu0 0.0
        %1246 = vmatpush2.msra.mxu0 0.0
        %1247 = vmatprep.subr.mxu0 0.0
        %1248 = vmatpush2.msra.mxu0 0.0
        %1249 = vmatprep.subr.mxu0 0.0
        %1250 = vmatpush2.msra.mxu0 0.0
        %1251 = vmatprep.subr.mxu0 0.0
        %1252 = vmatpush2.msra.mxu0 0.0
        %1253 = vmatprep.subr.mxu0 0.0
        %1254 = vmatpush2.msra.mxu0 0.0
        %1255 = vmatprep.subr.mxu0 0.0
        %1256 = vmatpush2.msra.mxu0 0.0
        %1257 = vmatprep.subr.mxu0 0.0
        %1258 = vmatpush2.msra.mxu0 0.0
        %1259 = vmatprep.subr.mxu0 0.0
        %1260 = vmatpush2.msra.mxu0 0.0
        %1261 = vmatprep.subr.mxu0 0.0
        %1262 = vmatpush2.msra.mxu0 0.0
        %1263 = vmatprep.subr.mxu0 0.0
        %1264 = vmatpush2.msra.mxu0 0.0
        %1265 = vmatprep.subr.mxu0 0.0
        %1266 = vmatpush2.msra.mxu0 0.0
        %1267 = vmatprep.subr.mxu0 0.0
        %1268 = vmatpush2.msra.mxu0 0.0
        %1269 = vmatprep.mubr.f32.mxu0 0.0
        %1270 = vmatmul.mubr.f32.gmra.mxu0 %v1203
        %v1271 = vpop.f32.mrf.mxu0
        %v1272 = vadd.f32 0.0, %v1271
        %v1273 = vpop.f32.mrf.mxu0
        %1274 = vdwg.mxu0
        %1276 = vrot.lane.b32.xlu0 %v942, 8
        %v1277 = vpop.permute.xlu0 %1276
        %1280 = vrot.lane.b32.xlu0 %v1107, 16
        %v1281 = vpop.permute.xlu0 %1280
        %1284 = vrot.lane.b32.xlu0 %v1272, 24
        %v1285 = vpop.permute.xlu0 %1284
        %v1287 = vsel %vm618, %v777, %v1277
        %vm1288 = vcmask 130048
        %v1289 = vsel %vm1288, %v1287, %v1281
        %vm1290 = vcmask 195584
        %v1291 = vsel %vm1290, %v1289, %v1285
        %v1293 = vsel %vm451, %v1291, 0
        %1295 = vmatprep.subr.mxu0 0.0
        %1296 = vmatpush1.msra.mxu0 0.0
        %1297 = vmatprep.subr.mxu0 0.0
        %1298 = vmatpush1.msra.mxu0 0.0
        %1299 = vmatprep.subr.mxu0 0.0
        %1300 = vmatpush1.msra.mxu0 0.0
        %1301 = vmatprep.subr.mxu0 0.0
        %1302 = vmatpush1.msra.mxu0 0.0
        %1303 = vmatprep.subr.mxu0 0.0
        %1304 = vmatpush1.msra.mxu0 0.0
        %1305 = vmatprep.subr.mxu0 0.0
        %1306 = vmatpush1.msra.mxu0 0.0
        %1307 = vmatprep.subr.mxu0 0.0
        %1308 = vmatpush1.msra.mxu0 0.0
        %1309 = vmatprep.subr.mxu0 0.0
        %1310 = vmatpush1.msra.mxu0 0.0
        %1311 = vmatprep.subr.mxu0 0.0
        %1312 = vmatpush1.msra.mxu0 0.0
        %1313 = vmatprep.subr.mxu0 0.0
        %1314 = vmatpush1.msra.mxu0 0.0
        %1315 = vmatprep.subr.mxu0 0.0
        %1316 = vmatpush1.msra.mxu0 0.0
        %1317 = vmatprep.subr.mxu0 0.0
        %1318 = vmatpush1.msra.mxu0 0.0
        %1319 = vmatprep.subr.mxu0 0.0
        %1320 = vmatpush1.msra.mxu0 %v614
        %1321 = vmatprep.subr.mxu0 0.0
        %1322 = vmatpush1.msra.mxu0 %v613
        %1323 = vmatprep.subr.mxu0 0.0
        %1324 = vmatpush1.msra.mxu0 %v612
        %1325 = vmatprep.subr.mxu0 0.0
        %1326 = vmatpush1.msra.mxu0 %v611
        %1327 = vmatprep.subr.mxu0 0.0
        %1328 = vmatpush2.msra.mxu0 0.0
        %1329 = vmatprep.subr.mxu0 0.0
        %1330 = vmatpush2.msra.mxu0 0.0
        %1331 = vmatprep.subr.mxu0 0.0
        %1332 = vmatpush2.msra.mxu0 0.0
        %1333 = vmatprep.subr.mxu0 0.0
        %1334 = vmatpush2.msra.mxu0 0.0
        %1335 = vmatprep.subr.mxu0 0.0
        %1336 = vmatpush2.msra.mxu0 0.0
        %1337 = vmatprep.subr.mxu0 0.0
        %1338 = vmatpush2.msra.mxu0 0.0
        %1339 = vmatprep.subr.mxu0 0.0
        %1340 = vmatpush2.msra.mxu0 0.0
        %1341 = vmatprep.subr.mxu0 0.0
        %1342 = vmatpush2.msra.mxu0 0.0
        %1343 = vmatprep.subr.mxu0 0.0
        %1344 = vmatpush2.msra.mxu0 0.0
        %1345 = vmatprep.subr.mxu0 0.0
        %1346 = vmatpush2.msra.mxu0 0.0
        %1347 = vmatprep.subr.mxu0 0.0
        %1348 = vmatpush2.msra.mxu0 0.0
        %1349 = vmatprep.subr.mxu0 0.0
        %1350 = vmatpush2.msra.mxu0 0.0
        %1351 = vmatprep.subr.mxu0 0.0
        %1352 = vmatpush2.msra.mxu0 0.0
        %1353 = vmatprep.subr.mxu0 0.0
        %1354 = vmatpush2.msra.mxu0 0.0
        %1355 = vmatprep.subr.mxu0 0.0
        %1356 = vmatpush2.msra.mxu0 0.0
        %1357 = vmatprep.subr.mxu0 0.0
        %1358 = vmatpush2.msra.mxu0 0.0
        %1359 = vmatprep.mubr.f32.mxu0 0.0
        %1360 = vmatmul.mubr.f32.gmra.mxu0 %v1293
        %v1361 = vpop.f32.mrf.mxu0
        %v1362 = vadd.f32 0.0, %v1361
        %v1363 = vpop.f32.mrf.mxu0
        %1364 = vdwg.mxu0
        %v1365 = vadd.f32 %v440, %v1362
        %v1366 = vmul.f32 %v1365, %v1365
        %v1367 = vsel %vm451, %v1366, 0.0
        %1368 = vadd.xlane.f32.xlu0 %v1367
        %v1369 = vpop.xlane.xlu0 %1368
        %v1370 = vmul.f32 %v1369, %v529
        %v1371 = vadd.f32 %v1370, 1e-06
        %v1372 = vrsqrt.pop %v1371
        %v1373 = vmul.f32 %v1365, %v1372
        %v1374 = vld [vmem:[%s7] sm:$0xff]
        %v1375 = vld [vmem:[%s7 + $0x8] sm:$0xff]
        %v1376 = vld [vmem:[%s7 + $0x10] sm:$0xff]
        %v1377 = vld [vmem:[%s7 + $0x18] sm:$0xff]
        %v1379 = vsel %vm451, %v1373, 0
        %1381 = vmatprep.subr.mxu0 0.0
        %1382 = vmatpush1.msra.mxu0 0.0
        %1383 = vmatprep.subr.mxu0 0.0
        %1384 = vmatpush1.msra.mxu0 0.0
        %1385 = vmatprep.subr.mxu0 0.0
        %1386 = vmatpush1.msra.mxu0 0.0
        %1387 = vmatprep.subr.mxu0 0.0
        %1388 = vmatpush1.msra.mxu0 0.0
        %1389 = vmatprep.subr.mxu0 0.0
        %1390 = vmatpush1.msra.mxu0 0.0
        %1391 = vmatprep.subr.mxu0 0.0
        %1392 = vmatpush1.msra.mxu0 0.0
        %1393 = vmatprep.subr.mxu0 0.0
        %1394 = vmatpush1.msra.mxu0 0.0
        %1395 = vmatprep.subr.mxu0 0.0
        %1396 = vmatpush1.msra.mxu0 0.0
        %1397 = vmatprep.subr.mxu0 0.0
        %1398 = vmatpush1.msra.mxu0 0.0
        %1399 = vmatprep.subr.mxu0 0.0
        %1400 = vmatpush1.msra.mxu0 0.0
        %1401 = vmatprep.subr.mxu0 0.0
        %1402 = vmatpush1.msra.mxu0 0.0
        %1403 = vmatprep.subr.mxu0 0.0
        %1404 = vmatpush1.msra.mxu0 0.0
        %1405 = vmatprep.subr.mxu0 0.0
        %1406 = vmatpush1.msra.mxu0 %v1377
        %1407 = vmatprep.subr.mxu0 0.0
        %1408 = vmatpush1.msra.mxu0 %v1376
        %1409 = vmatprep.subr.mxu0 0.0
        %1410 = vmatpush1.msra.mxu0 %v1375
        %1411 = vmatprep.subr.mxu0 0.0
        %1412 = vmatpush1.msra.mxu0 %v1374
        %1413 = vmatprep.subr.mxu0 0.0
        %1414 = vmatpush2.msra.mxu0 0.0
        %1415 = vmatprep.subr.mxu0 0.0
        %1416 = vmatpush2.msra.mxu0 0.0
        %1417 = vmatprep.subr.mxu0 0.0
        %1418 = vmatpush2.msra.mxu0 0.0
        %1419 = vmatprep.subr.mxu0 0.0
        %1420 = vmatpush2.msra.mxu0 0.0
        %1421 = vmatprep.subr.mxu0 0.0
        %1422 = vmatpush2.msra.mxu0 0.0
        %1423 = vmatprep.subr.mxu0 0.0
        %1424 = vmatpush2.msra.mxu0 0.0
        %1425 = vmatprep.subr.mxu0 0.0
        %1426 = vmatpush2.msra.mxu0 0.0
        %1427 = vmatprep.subr.mxu0 0.0
        %1428 = vmatpush2.msra.mxu0 0.0
        %1429 = vmatprep.subr.mxu0 0.0
        %1430 = vmatpush2.msra.mxu0 0.0
        %1431 = vmatprep.subr.mxu0 0.0
        %1432 = vmatpush2.msra.mxu0 0.0
        %1433 = vmatprep.subr.mxu0 0.0
        %1434 = vmatpush2.msra.mxu0 0.0
        %1435 = vmatprep.subr.mxu0 0.0
        %1436 = vmatpush2.msra.mxu0 0.0
        %1437 = vmatprep.subr.mxu0 0.0
        %1438 = vmatpush2.msra.mxu0 0.0
        %1439 = vmatprep.subr.mxu0 0.0
        %1440 = vmatpush2.msra.mxu0 0.0
        %1441 = vmatprep.subr.mxu0 0.0
        %1442 = vmatpush2.msra.mxu0 0.0
        %1443 = vmatprep.subr.mxu0 0.0
        %1444 = vmatpush2.msra.mxu0 0.0
        %1445 = vmatprep.mubr.f32.mxu0 0.0
        %1446 = vmatmul.mubr.f32.gmra.mxu0 %v1379
        %v1447 = vpop.f32.mrf.mxu0
        %v1448 = vadd.f32 0.0, %v1447
        %v1449 = vpop.f32.mrf.mxu0
        %1450 = vdwg.mxu0
        %v1451 = vld [vmem:[%s9] sm:$0xff]
        %v1452 = vld [vmem:[%s9 + $0x8] sm:$0xff]
        %v1453 = vld [vmem:[%s9 + $0x10] sm:$0xff]
        %v1454 = vld [vmem:[%s9 + $0x18] sm:$0xff]
        %v1456 = vlaneseq
        %v1457 = vshrl.u32 %v1456, 7
        %v1458 = vsub.s32 0, %v1457
        %v1459 = vrot.slane %v446, %v1458
        %v1462 = vsel %vm618, %v1448, 0
        %v1465 = vsel %vm618, %v522, 0
        %1467 = vmatprep.subr.mxu0 0.0
        %1468 = vmatpush1.xpose.msra.mxu0 0.0
        %1469 = vmatprep.subr.mxu0 0.0
        %1470 = vmatpush1.xpose.msra.mxu0 0.0
        %1471 = vmatprep.subr.mxu0 0.0
        %1472 = vmatpush1.xpose.msra.mxu0 0.0
        %1473 = vmatprep.subr.mxu0 0.0
        %1474 = vmatpush1.xpose.msra.mxu0 0.0
        %1475 = vmatprep.subr.mxu0 0.0
        %1476 = vmatpush1.xpose.msra.mxu0 0.0
        %1477 = vmatprep.subr.mxu0 0.0
        %1478 = vmatpush1.xpose.msra.mxu0 0.0
        %1479 = vmatprep.subr.mxu0 0.0
        %1480 = vmatpush1.xpose.msra.mxu0 0.0
        %1481 = vmatprep.subr.mxu0 0.0
        %1482 = vmatpush1.xpose.msra.mxu0 0.0
        %1483 = vmatprep.subr.mxu0 0.0
        %1484 = vmatpush1.xpose.msra.mxu0 0.0
        %1485 = vmatprep.subr.mxu0 0.0
        %1486 = vmatpush1.xpose.msra.mxu0 0.0
        %1487 = vmatprep.subr.mxu0 0.0
        %1488 = vmatpush1.xpose.msra.mxu0 0.0
        %1489 = vmatprep.subr.mxu0 0.0
        %1490 = vmatpush1.xpose.msra.mxu0 0.0
        %1491 = vmatprep.subr.mxu0 0.0
        %1492 = vmatpush1.xpose.msra.mxu0 0.0
        %1493 = vmatprep.subr.mxu0 0.0
        %1494 = vmatpush1.xpose.msra.mxu0 0.0
        %1495 = vmatprep.subr.mxu0 0.0
        %1496 = vmatpush1.xpose.msra.mxu0 0.0
        %1497 = vmatprep.subr.mxu0 0.0
        %1498 = vmatpush1.xpose.msra.mxu0 %v1465
        %1499 = vmatprep.subr.mxu0 0.0
        %1500 = vmatpush2.xpose.msra.mxu0 0.0
        %1501 = vmatprep.subr.mxu0 0.0
        %1502 = vmatpush2.xpose.msra.mxu0 0.0
        %1503 = vmatprep.subr.mxu0 0.0
        %1504 = vmatpush2.xpose.msra.mxu0 0.0
        %1505 = vmatprep.subr.mxu0 0.0
        %1506 = vmatpush2.xpose.msra.mxu0 0.0
        %1507 = vmatprep.subr.mxu0 0.0
        %1508 = vmatpush2.xpose.msra.mxu0 0.0
        %1509 = vmatprep.subr.mxu0 0.0
        %1510 = vmatpush2.xpose.msra.mxu0 0.0
        %1511 = vmatprep.subr.mxu0 0.0
        %1512 = vmatpush2.xpose.msra.mxu0 0.0
        %1513 = vmatprep.subr.mxu0 0.0
        %1514 = vmatpush2.xpose.msra.mxu0 0.0
        %1515 = vmatprep.subr.mxu0 0.0
        %1516 = vmatpush2.xpose.msra.mxu0 0.0
        %1517 = vmatprep.subr.mxu0 0.0
        %1518 = vmatpush2.xpose.msra.mxu0 0.0
        %1519 = vmatprep.subr.mxu0 0.0
        %1520 = vmatpush2.xpose.msra.mxu0 0.0
        %1521 = vmatprep.subr.mxu0 0.0
        %1522 = vmatpush2.xpose.msra.mxu0 0.0
        %1523 = vmatprep.subr.mxu0 0.0
        %1524 = vmatpush2.xpose.msra.mxu0 0.0
        %1525 = vmatprep.subr.mxu0 0.0
        %1526 = vmatpush2.xpose.msra.mxu0 0.0
        %1527 = vmatprep.subr.mxu0 0.0
        %1528 = vmatpush2.xpose.msra.mxu0 0.0
        %1529 = vmatprep.subr.mxu0 0.0
        %1530 = vmatpush2.xpose.msra.mxu0 0.0
        %1531 = vmatprep.mubr.f32.mxu0 0.0
        %1532 = vmatmul.mubr.f32.gmra.mxu0 %v1462
        %v1533 = vpop.f32.mrf.mxu0
        %v1534 = vadd.f32 %v1459, %v1533
        %v1535 = vpop.f32.mrf.mxu0
        %1536 = vdwg.mxu0
        %v1537 = vsel %vm618, %v1534, -inf
        %1538 = vmax.xlane.f32.xlu0 %v1537
        %v1539 = vpop.xlane.xlu0 %1538
        %v1540 = vsub.f32 %v1534, %v1539
        %v1541 = vmul.f32 %v1540, 1.442695
        %v1542 = vpow.pop %v1541
        %v1543 = vsel %vm618, %v1542, 0.0
        %1544 = vadd.xlane.f32.xlu0 %v1543
        %v1545 = vpop.xlane.xlu0 %1544
        %v1546 = vrcp.pop %v1545
        %v1547 = vmul.f32 %v1542, %v1546
        %1548 = vrot.lane.b32.xlu0 %v522, 96
        %v1549 = vpop.permute.xlu0 %1548
        %v1552 = vsel %vm618, %v1547, 0
        %1554 = vmatprep.subr.mxu0 0.0
        %1555 = vmatpush1.msra.mxu0 0.0
        %1556 = vmatprep.subr.mxu0 0.0
        %1557 = vmatpush1.msra.mxu0 0.0
        %1558 = vmatprep.subr.mxu0 0.0
        %1559 = vmatpush1.msra.mxu0 0.0
        %1560 = vmatprep.subr.mxu0 0.0
        %1561 = vmatpush1.msra.mxu0 0.0
        %1562 = vmatprep.subr.mxu0 0.0
        %1563 = vmatpush1.msra.mxu0 0.0
        %1564 = vmatprep.subr.mxu0 0.0
        %1565 = vmatpush1.msra.mxu0 0.0
        %1566 = vmatprep.subr.mxu0 0.0
        %1567 = vmatpush1.msra.mxu0 0.0
        %1568 = vmatprep.subr.mxu0 0.0
        %1569 = vmatpush1.msra.mxu0 0.0
        %1570 = vmatprep.subr.mxu0 0.0
        %1571 = vmatpush1.msra.mxu0 0.0
        %1572 = vmatprep.subr.mxu0 0.0
        %1573 = vmatpush1.msra.mxu0 0.0
        %1574 = vmatprep.subr.mxu0 0.0
        %1575 = vmatpush1.msra.mxu0 0.0
        %1576 = vmatprep.subr.mxu0 0.0
        %1577 = vmatpush1.msra.mxu0 0.0
        %1578 = vmatprep.subr.mxu0 0.0
        %1579 = vmatpush1.msra.mxu0 0.0
        %1580 = vmatprep.subr.mxu0 0.0
        %1581 = vmatpush1.msra.mxu0 0.0
        %1582 = vmatprep.subr.mxu0 0.0
        %1583 = vmatpush1.msra.mxu0 0.0
        %1584 = vmatprep.subr.mxu0 0.0
        %1585 = vmatpush1.msra.mxu0 %v1549
        %1586 = vmatprep.subr.mxu0 0.0
        %1587 = vmatpush2.msra.mxu0 0.0
        %1588 = vmatprep.subr.mxu0 0.0
        %1589 = vmatpush2.msra.mxu0 0.0
        %1590 = vmatprep.subr.mxu0 0.0
        %1591 = vmatpush2.msra.mxu0 0.0
        %1592 = vmatprep.subr.mxu0 0.0
        %1593 = vmatpush2.msra.mxu0 0.0
        %1594 = vmatprep.subr.mxu0 0.0
        %1595 = vmatpush2.msra.mxu0 0.0
        %1596 = vmatprep.subr.mxu0 0.0
        %1597 = vmatpush2.msra.mxu0 0.0
        %1598 = vmatprep.subr.mxu0 0.0
        %1599 = vmatpush2.msra.mxu0 0.0
        %1600 = vmatprep.subr.mxu0 0.0
        %1601 = vmatpush2.msra.mxu0 0.0
        %1602 = vmatprep.subr.mxu0 0.0
        %1603 = vmatpush2.msra.mxu0 0.0
        %1604 = vmatprep.subr.mxu0 0.0
        %1605 = vmatpush2.msra.mxu0 0.0
        %1606 = vmatprep.subr.mxu0 0.0
        %1607 = vmatpush2.msra.mxu0 0.0
        %1608 = vmatprep.subr.mxu0 0.0
        %1609 = vmatpush2.msra.mxu0 0.0
        %1610 = vmatprep.subr.mxu0 0.0
        %1611 = vmatpush2.msra.mxu0 0.0
        %1612 = vmatprep.subr.mxu0 0.0
        %1613 = vmatpush2.msra.mxu0 0.0
        %1614 = vmatprep.subr.mxu0 0.0
        %1615 = vmatpush2.msra.mxu0 0.0
        %1616 = vmatprep.subr.mxu0 0.0
        %1617 = vmatpush2.msra.mxu0 0.0
        %1618 = vmatprep.mubr.f32.mxu0 0.0
        %1619 = vmatmul.mubr.f32.gmra.mxu0 %v1552
        %v1620 = vpop.f32.mrf.mxu0
        %v1621 = vadd.f32 0.0, %v1620
        %v1622 = vpop.f32.mrf.mxu0
        %1623 = vdwg.mxu0
        %1624 = vrot.lane.b32.xlu0 %v1448, 120
        %v1625 = vpop.permute.xlu0 %1624
        %1626 = vrot.lane.b32.xlu0 %v522, 120
        %v1627 = vpop.permute.xlu0 %1626
        %v1628 = vsel %vm618, %v1625, 0
        %v1630 = vsel %vm618, %v1627, 0
        %1632 = vmatprep.subr.mxu0 0.0
        %1633 = vmatpush1.xpose.msra.mxu0 0.0
        %1634 = vmatprep.subr.mxu0 0.0
        %1635 = vmatpush1.xpose.msra.mxu0 0.0
        %1636 = vmatprep.subr.mxu0 0.0
        %1637 = vmatpush1.xpose.msra.mxu0 0.0
        %1638 = vmatprep.subr.mxu0 0.0
        %1639 = vmatpush1.xpose.msra.mxu0 0.0
        %1640 = vmatprep.subr.mxu0 0.0
        %1641 = vmatpush1.xpose.msra.mxu0 0.0
        %1642 = vmatprep.subr.mxu0 0.0
        %1643 = vmatpush1.xpose.msra.mxu0 0.0
        %1644 = vmatprep.subr.mxu0 0.0
        %1645 = vmatpush1.xpose.msra.mxu0 0.0
        %1646 = vmatprep.subr.mxu0 0.0
        %1647 = vmatpush1.xpose.msra.mxu0 0.0
        %1648 = vmatprep.subr.mxu0 0.0
        %1649 = vmatpush1.xpose.msra.mxu0 0.0
        %1650 = vmatprep.subr.mxu0 0.0
        %1651 = vmatpush1.xpose.msra.mxu0 0.0
        %1652 = vmatprep.subr.mxu0 0.0
        %1653 = vmatpush1.xpose.msra.mxu0 0.0
        %1654 = vmatprep.subr.mxu0 0.0
        %1655 = vmatpush1.xpose.msra.mxu0 0.0
        %1656 = vmatprep.subr.mxu0 0.0
        %1657 = vmatpush1.xpose.msra.mxu0 0.0
        %1658 = vmatprep.subr.mxu0 0.0
        %1659 = vmatpush1.xpose.msra.mxu0 0.0
        %1660 = vmatprep.subr.mxu0 0.0
        %1661 = vmatpush1.xpose.msra.mxu0 0.0
        %1662 = vmatprep.subr.mxu0 0.0
        %1663 = vmatpush1.xpose.msra.mxu0 %v1630
        %1664 = vmatprep.subr.mxu0 0.0
        %1665 = vmatpush2.xpose.msra.mxu0 0.0
        %1666 = vmatprep.subr.mxu0 0.0
        %1667 = vmatpush2.xpose.msra.mxu0 0.0
        %1668 = vmatprep.subr.mxu0 0.0
        %1669 = vmatpush2.xpose.msra.mxu0 0.0
        %1670 = vmatprep.subr.mxu0 0.0
        %1671 = vmatpush2.xpose.msra.mxu0 0.0
        %1672 = vmatprep.subr.mxu0 0.0
        %1673 = vmatpush2.xpose.msra.mxu0 0.0
        %1674 = vmatprep.subr.mxu0 0.0
        %1675 = vmatpush2.xpose.msra.mxu0 0.0
        %1676 = vmatprep.subr.mxu0 0.0
        %1677 = vmatpush2.xpose.msra.mxu0 0.0
        %1678 = vmatprep.subr.mxu0 0.0
        %1679 = vmatpush2.xpose.msra.mxu0 0.0
        %1680 = vmatprep.subr.mxu0 0.0
        %1681 = vmatpush2.xpose.msra.mxu0 0.0
        %1682 = vmatprep.subr.mxu0 0.0
        %1683 = vmatpush2.xpose.msra.mxu0 0.0
        %1684 = vmatprep.subr.mxu0 0.0
        %1685 = vmatpush2.xpose.msra.mxu0 0.0
        %1686 = vmatprep.subr.mxu0 0.0
        %1687 = vmatpush2.xpose.msra.mxu0 0.0
        %1688 = vmatprep.subr.mxu0 0.0
        %1689 = vmatpush2.xpose.msra.mxu0 0.0
        %1690 = vmatprep.subr.mxu0 0.0
        %1691 = vmatpush2.xpose.msra.mxu0 0.0
        %1692 = vmatprep.subr.mxu0 0.0
        %1693 = vmatpush2.xpose.msra.mxu0 0.0
        %1694 = vmatprep.subr.mxu0 0.0
        %1695 = vmatpush2.xpose.msra.mxu0 0.0
        %1696 = vmatprep.mubr.f32.mxu0 0.0
        %1697 = vmatmul.mubr.f32.gmra.mxu0 %v1628
        %v1698 = vpop.f32.mrf.mxu0
        %v1699 = vadd.f32 %v1459, %v1698
        %v1700 = vpop.f32.mrf.mxu0
        %1701 = vdwg.mxu0
        %v1702 = vsel %vm618, %v1699, -inf
        %1703 = vmax.xlane.f32.xlu0 %v1702
        %v1704 = vpop.xlane.xlu0 %1703
        %v1705 = vsub.f32 %v1699, %v1704
        %v1706 = vmul.f32 %v1705, 1.442695
        %v1707 = vpow.pop %v1706
        %v1708 = vsel %vm618, %v1707, 0.0
        %1709 = vadd.xlane.f32.xlu0 %v1708
        %v1710 = vpop.xlane.xlu0 %1709
        %v1711 = vrcp.pop %v1710
        %v1712 = vmul.f32 %v1707, %v1711
        %1713 = vrot.lane.b32.xlu0 %v522, 88
        %v1714 = vpop.permute.xlu0 %1713
        %v1717 = vsel %vm618, %v1712, 0
        %1719 = vmatprep.subr.mxu0 0.0
        %1720 = vmatpush1.msra.mxu0 0.0
        %1721 = vmatprep.subr.mxu0 0.0
        %1722 = vmatpush1.msra.mxu0 0.0
        %1723 = vmatprep.subr.mxu0 0.0
        %1724 = vmatpush1.msra.mxu0 0.0
        %1725 = vmatprep.subr.mxu0 0.0
        %1726 = vmatpush1.msra.mxu0 0.0
        %1727 = vmatprep.subr.mxu0 0.0
        %1728 = vmatpush1.msra.mxu0 0.0
        %1729 = vmatprep.subr.mxu0 0.0
        %1730 = vmatpush1.msra.mxu0 0.0
        %1731 = vmatprep.subr.mxu0 0.0
        %1732 = vmatpush1.msra.mxu0 0.0
        %1733 = vmatprep.subr.mxu0 0.0
        %1734 = vmatpush1.msra.mxu0 0.0
        %1735 = vmatprep.subr.mxu0 0.0
        %1736 = vmatpush1.msra.mxu0 0.0
        %1737 = vmatprep.subr.mxu0 0.0
        %1738 = vmatpush1.msra.mxu0 0.0
        %1739 = vmatprep.subr.mxu0 0.0
        %1740 = vmatpush1.msra.mxu0 0.0
        %1741 = vmatprep.subr.mxu0 0.0
        %1742 = vmatpush1.msra.mxu0 0.0
        %1743 = vmatprep.subr.mxu0 0.0
        %1744 = vmatpush1.msra.mxu0 0.0
        %1745 = vmatprep.subr.mxu0 0.0
        %1746 = vmatpush1.msra.mxu0 0.0
        %1747 = vmatprep.subr.mxu0 0.0
        %1748 = vmatpush1.msra.mxu0 0.0
        %1749 = vmatprep.subr.mxu0 0.0
        %1750 = vmatpush1.msra.mxu0 %v1714
        %1751 = vmatprep.subr.mxu0 0.0
        %1752 = vmatpush2.msra.mxu0 0.0
        %1753 = vmatprep.subr.mxu0 0.0
        %1754 = vmatpush2.msra.mxu0 0.0
        %1755 = vmatprep.subr.mxu0 0.0
        %1756 = vmatpush2.msra.mxu0 0.0
        %1757 = vmatprep.subr.mxu0 0.0
        %1758 = vmatpush2.msra.mxu0 0.0
        %1759 = vmatprep.subr.mxu0 0.0
        %1760 = vmatpush2.msra.mxu0 0.0
        %1761 = vmatprep.subr.mxu0 0.0
        %1762 = vmatpush2.msra.mxu0 0.0
        %1763 = vmatprep.subr.mxu0 0.0
        %1764 = vmatpush2.msra.mxu0 0.0
        %1765 = vmatprep.subr.mxu0 0.0
        %1766 = vmatpush2.msra.mxu0 0.0
        %1767 = vmatprep.subr.mxu0 0.0
        %1768 = vmatpush2.msra.mxu0 0.0
        %1769 = vmatprep.subr.mxu0 0.0
        %1770 = vmatpush2.msra.mxu0 0.0
        %1771 = vmatprep.subr.mxu0 0.0
        %1772 = vmatpush2.msra.mxu0 0.0
        %1773 = vmatprep.subr.mxu0 0.0
        %1774 = vmatpush2.msra.mxu0 0.0
        %1775 = vmatprep.subr.mxu0 0.0
        %1776 = vmatpush2.msra.mxu0 0.0
        %1777 = vmatprep.subr.mxu0 0.0
        %1778 = vmatpush2.msra.mxu0 0.0
        %1779 = vmatprep.subr.mxu0 0.0
        %1780 = vmatpush2.msra.mxu0 0.0
        %1781 = vmatprep.subr.mxu0 0.0
        %1782 = vmatpush2.msra.mxu0 0.0
        %1783 = vmatprep.mubr.f32.mxu0 0.0
        %1784 = vmatmul.mubr.f32.gmra.mxu0 %v1717
        %v1785 = vpop.f32.mrf.mxu0
        %v1786 = vadd.f32 0.0, %v1785
        %v1787 = vpop.f32.mrf.mxu0
        %1788 = vdwg.mxu0
        %1789 = vrot.lane.b32.xlu0 %v1448, 112
        %v1790 = vpop.permute.xlu0 %1789
        %1791 = vrot.lane.b32.xlu0 %v522, 112
        %v1792 = vpop.permute.xlu0 %1791
        %v1793 = vsel %vm618, %v1790, 0
        %v1795 = vsel %vm618, %v1792, 0
        %1797 = vmatprep.subr.mxu0 0.0
        %1798 = vmatpush1.xpose.msra.mxu0 0.0
        %1799 = vmatprep.subr.mxu0 0.0
        %1800 = vmatpush1.xpose.msra.mxu0 0.0
        %1801 = vmatprep.subr.mxu0 0.0
        %1802 = vmatpush1.xpose.msra.mxu0 0.0
        %1803 = vmatprep.subr.mxu0 0.0
        %1804 = vmatpush1.xpose.msra.mxu0 0.0
        %1805 = vmatprep.subr.mxu0 0.0
        %1806 = vmatpush1.xpose.msra.mxu0 0.0
        %1807 = vmatprep.subr.mxu0 0.0
        %1808 = vmatpush1.xpose.msra.mxu0 0.0
        %1809 = vmatprep.subr.mxu0 0.0
        %1810 = vmatpush1.xpose.msra.mxu0 0.0
        %1811 = vmatprep.subr.mxu0 0.0
        %1812 = vmatpush1.xpose.msra.mxu0 0.0
        %1813 = vmatprep.subr.mxu0 0.0
        %1814 = vmatpush1.xpose.msra.mxu0 0.0
        %1815 = vmatprep.subr.mxu0 0.0
        %1816 = vmatpush1.xpose.msra.mxu0 0.0
        %1817 = vmatprep.subr.mxu0 0.0
        %1818 = vmatpush1.xpose.msra.mxu0 0.0
        %1819 = vmatprep.subr.mxu0 0.0
        %1820 = vmatpush1.xpose.msra.mxu0 0.0
        %1821 = vmatprep.subr.mxu0 0.0
        %1822 = vmatpush1.xpose.msra.mxu0 0.0
        %1823 = vmatprep.subr.mxu0 0.0
        %1824 = vmatpush1.xpose.msra.mxu0 0.0
        %1825 = vmatprep.subr.mxu0 0.0
        %1826 = vmatpush1.xpose.msra.mxu0 0.0
        %1827 = vmatprep.subr.mxu0 0.0
        %1828 = vmatpush1.xpose.msra.mxu0 %v1795
        %1829 = vmatprep.subr.mxu0 0.0
        %1830 = vmatpush2.xpose.msra.mxu0 0.0
        %1831 = vmatprep.subr.mxu0 0.0
        %1832 = vmatpush2.xpose.msra.mxu0 0.0
        %1833 = vmatprep.subr.mxu0 0.0
        %1834 = vmatpush2.xpose.msra.mxu0 0.0
        %1835 = vmatprep.subr.mxu0 0.0
        %1836 = vmatpush2.xpose.msra.mxu0 0.0
        %1837 = vmatprep.subr.mxu0 0.0
        %1838 = vmatpush2.xpose.msra.mxu0 0.0
        %1839 = vmatprep.subr.mxu0 0.0
        %1840 = vmatpush2.xpose.msra.mxu0 0.0
        %1841 = vmatprep.subr.mxu0 0.0
        %1842 = vmatpush2.xpose.msra.mxu0 0.0
        %1843 = vmatprep.subr.mxu0 0.0
        %1844 = vmatpush2.xpose.msra.mxu0 0.0
        %1845 = vmatprep.subr.mxu0 0.0
        %1846 = vmatpush2.xpose.msra.mxu0 0.0
        %1847 = vmatprep.subr.mxu0 0.0
        %1848 = vmatpush2.xpose.msra.mxu0 0.0
        %1849 = vmatprep.subr.mxu0 0.0
        %1850 = vmatpush2.xpose.msra.mxu0 0.0
        %1851 = vmatprep.subr.mxu0 0.0
        %1852 = vmatpush2.xpose.msra.mxu0 0.0
        %1853 = vmatprep.subr.mxu0 0.0
        %1854 = vmatpush2.xpose.msra.mxu0 0.0
        %1855 = vmatprep.subr.mxu0 0.0
        %1856 = vmatpush2.xpose.msra.mxu0 0.0
        %1857 = vmatprep.subr.mxu0 0.0
        %1858 = vmatpush2.xpose.msra.mxu0 0.0
        %1859 = vmatprep.subr.mxu0 0.0
        %1860 = vmatpush2.xpose.msra.mxu0 0.0
        %1861 = vmatprep.mubr.f32.mxu0 0.0
        %1862 = vmatmul.mubr.f32.gmra.mxu0 %v1793
        %v1863 = vpop.f32.mrf.mxu0
        %v1864 = vadd.f32 %v1459, %v1863
        %v1865 = vpop.f32.mrf.mxu0
        %1866 = vdwg.mxu0
        %v1867 = vsel %vm618, %v1864, -inf
        %1868 = vmax.xlane.f32.xlu0 %v1867
        %v1869 = vpop.xlane.xlu0 %1868
        %v1870 = vsub.f32 %v1864, %v1869
        %v1871 = vmul.f32 %v1870, 1.442695
        %v1872 = vpow.pop %v1871
        %v1873 = vsel %vm618, %v1872, 0.0
        %1874 = vadd.xlane.f32.xlu0 %v1873
        %v1875 = vpop.xlane.xlu0 %1874
        %v1876 = vrcp.pop %v1875
        %v1877 = vmul.f32 %v1872, %v1876
        %1878 = vrot.lane.b32.xlu0 %v522, 80
        %v1879 = vpop.permute.xlu0 %1878
        %v1882 = vsel %vm618, %v1877, 0
        %1884 = vmatprep.subr.mxu0 0.0
        %1885 = vmatpush1.msra.mxu0 0.0
        %1886 = vmatprep.subr.mxu0 0.0
        %1887 = vmatpush1.msra.mxu0 0.0
        %1888 = vmatprep.subr.mxu0 0.0
        %1889 = vmatpush1.msra.mxu0 0.0
        %1890 = vmatprep.subr.mxu0 0.0
        %1891 = vmatpush1.msra.mxu0 0.0
        %1892 = vmatprep.subr.mxu0 0.0
        %1893 = vmatpush1.msra.mxu0 0.0
        %1894 = vmatprep.subr.mxu0 0.0
        %1895 = vmatpush1.msra.mxu0 0.0
        %1896 = vmatprep.subr.mxu0 0.0
        %1897 = vmatpush1.msra.mxu0 0.0
        %1898 = vmatprep.subr.mxu0 0.0
        %1899 = vmatpush1.msra.mxu0 0.0
        %1900 = vmatprep.subr.mxu0 0.0
        %1901 = vmatpush1.msra.mxu0 0.0
        %1902 = vmatprep.subr.mxu0 0.0
        %1903 = vmatpush1.msra.mxu0 0.0
        %1904 = vmatprep.subr.mxu0 0.0
        %1905 = vmatpush1.msra.mxu0 0.0
        %1906 = vmatprep.subr.mxu0 0.0
        %1907 = vmatpush1.msra.mxu0 0.0
        %1908 = vmatprep.subr.mxu0 0.0
        %1909 = vmatpush1.msra.mxu0 0.0
        %1910 = vmatprep.subr.mxu0 0.0
        %1911 = vmatpush1.msra.mxu0 0.0
        %1912 = vmatprep.subr.mxu0 0.0
        %1913 = vmatpush1.msra.mxu0 0.0
        %1914 = vmatprep.subr.mxu0 0.0
        %1915 = vmatpush1.msra.mxu0 %v1879
        %1916 = vmatprep.subr.mxu0 0.0
        %1917 = vmatpush2.msra.mxu0 0.0
        %1918 = vmatprep.subr.mxu0 0.0
        %1919 = vmatpush2.msra.mxu0 0.0
        %1920 = vmatprep.subr.mxu0 0.0
        %1921 = vmatpush2.msra.mxu0 0.0
        %1922 = vmatprep.subr.mxu0 0.0
        %1923 = vmatpush2.msra.mxu0 0.0
        %1924 = vmatprep.subr.mxu0 0.0
        %1925 = vmatpush2.msra.mxu0 0.0
        %1926 = vmatprep.subr.mxu0 0.0
        %1927 = vmatpush2.msra.mxu0 0.0
        %1928 = vmatprep.subr.mxu0 0.0
        %1929 = vmatpush2.msra.mxu0 0.0
        %1930 = vmatprep.subr.mxu0 0.0
        %1931 = vmatpush2.msra.mxu0 0.0
        %1932 = vmatprep.subr.mxu0 0.0
        %1933 = vmatpush2.msra.mxu0 0.0
        %1934 = vmatprep.subr.mxu0 0.0
        %1935 = vmatpush2.msra.mxu0 0.0
        %1936 = vmatprep.subr.mxu0 0.0
        %1937 = vmatpush2.msra.mxu0 0.0
        %1938 = vmatprep.subr.mxu0 0.0
        %1939 = vmatpush2.msra.mxu0 0.0
        %1940 = vmatprep.subr.mxu0 0.0
        %1941 = vmatpush2.msra.mxu0 0.0
        %1942 = vmatprep.subr.mxu0 0.0
        %1943 = vmatpush2.msra.mxu0 0.0
        %1944 = vmatprep.subr.mxu0 0.0
        %1945 = vmatpush2.msra.mxu0 0.0
        %1946 = vmatprep.subr.mxu0 0.0
        %1947 = vmatpush2.msra.mxu0 0.0
        %1948 = vmatprep.mubr.f32.mxu0 0.0
        %1949 = vmatmul.mubr.f32.gmra.mxu0 %v1882
        %v1950 = vpop.f32.mrf.mxu0
        %v1951 = vadd.f32 0.0, %v1950
        %v1952 = vpop.f32.mrf.mxu0
        %1953 = vdwg.mxu0
        %1954 = vrot.lane.b32.xlu0 %v1448, 104
        %v1955 = vpop.permute.xlu0 %1954
        %1956 = vrot.lane.b32.xlu0 %v522, 104
        %v1957 = vpop.permute.xlu0 %1956
        %v1958 = vsel %vm618, %v1955, 0
        %v1960 = vsel %vm618, %v1957, 0
        %1962 = vmatprep.subr.mxu0 0.0
        %1963 = vmatpush1.xpose.msra.mxu0 0.0
        %1964 = vmatprep.subr.mxu0 0.0
        %1965 = vmatpush1.xpose.msra.mxu0 0.0
        %1966 = vmatprep.subr.mxu0 0.0
        %1967 = vmatpush1.xpose.msra.mxu0 0.0
        %1968 = vmatprep.subr.mxu0 0.0
        %1969 = vmatpush1.xpose.msra.mxu0 0.0
        %1970 = vmatprep.subr.mxu0 0.0
        %1971 = vmatpush1.xpose.msra.mxu0 0.0
        %1972 = vmatprep.subr.mxu0 0.0
        %1973 = vmatpush1.xpose.msra.mxu0 0.0
        %1974 = vmatprep.subr.mxu0 0.0
        %1975 = vmatpush1.xpose.msra.mxu0 0.0
        %1976 = vmatprep.subr.mxu0 0.0
        %1977 = vmatpush1.xpose.msra.mxu0 0.0
        %1978 = vmatprep.subr.mxu0 0.0
        %1979 = vmatpush1.xpose.msra.mxu0 0.0
        %1980 = vmatprep.subr.mxu0 0.0
        %1981 = vmatpush1.xpose.msra.mxu0 0.0
        %1982 = vmatprep.subr.mxu0 0.0
        %1983 = vmatpush1.xpose.msra.mxu0 0.0
        %1984 = vmatprep.subr.mxu0 0.0
        %1985 = vmatpush1.xpose.msra.mxu0 0.0
        %1986 = vmatprep.subr.mxu0 0.0
        %1987 = vmatpush1.xpose.msra.mxu0 0.0
        %1988 = vmatprep.subr.mxu0 0.0
        %1989 = vmatpush1.xpose.msra.mxu0 0.0
        %1990 = vmatprep.subr.mxu0 0.0
        %1991 = vmatpush1.xpose.msra.mxu0 0.0
        %1992 = vmatprep.subr.mxu0 0.0
        %1993 = vmatpush1.xpose.msra.mxu0 %v1960
        %1994 = vmatprep.subr.mxu0 0.0
        %1995 = vmatpush2.xpose.msra.mxu0 0.0
        %1996 = vmatprep.subr.mxu0 0.0
        %1997 = vmatpush2.xpose.msra.mxu0 0.0
        %1998 = vmatprep.subr.mxu0 0.0
        %1999 = vmatpush2.xpose.msra.mxu0 0.0
        %2000 = vmatprep.subr.mxu0 0.0
        %2001 = vmatpush2.xpose.msra.mxu0 0.0
        %2002 = vmatprep.subr.mxu0 0.0
        %2003 = vmatpush2.xpose.msra.mxu0 0.0
        %2004 = vmatprep.subr.mxu0 0.0
        %2005 = vmatpush2.xpose.msra.mxu0 0.0
        %2006 = vmatprep.subr.mxu0 0.0
        %2007 = vmatpush2.xpose.msra.mxu0 0.0
        %2008 = vmatprep.subr.mxu0 0.0
        %2009 = vmatpush2.xpose.msra.mxu0 0.0
        %2010 = vmatprep.subr.mxu0 0.0
        %2011 = vmatpush2.xpose.msra.mxu0 0.0
        %2012 = vmatprep.subr.mxu0 0.0
        %2013 = vmatpush2.xpose.msra.mxu0 0.0
        %2014 = vmatprep.subr.mxu0 0.0
        %2015 = vmatpush2.xpose.msra.mxu0 0.0
        %2016 = vmatprep.subr.mxu0 0.0
        %2017 = vmatpush2.xpose.msra.mxu0 0.0
        %2018 = vmatprep.subr.mxu0 0.0
        %2019 = vmatpush2.xpose.msra.mxu0 0.0
        %2020 = vmatprep.subr.mxu0 0.0
        %2021 = vmatpush2.xpose.msra.mxu0 0.0
        %2022 = vmatprep.subr.mxu0 0.0
        %2023 = vmatpush2.xpose.msra.mxu0 0.0
        %2024 = vmatprep.subr.mxu0 0.0
        %2025 = vmatpush2.xpose.msra.mxu0 0.0
        %2026 = vmatprep.mubr.f32.mxu0 0.0
        %2027 = vmatmul.mubr.f32.gmra.mxu0 %v1958
        %v2028 = vpop.f32.mrf.mxu0
        %v2029 = vadd.f32 %v1459, %v2028
        %v2030 = vpop.f32.mrf.mxu0
        %2031 = vdwg.mxu0
        %v2032 = vsel %vm618, %v2029, -inf
        %2033 = vmax.xlane.f32.xlu0 %v2032
        %v2034 = vpop.xlane.xlu0 %2033
        %v2035 = vsub.f32 %v2029, %v2034
        %v2036 = vmul.f32 %v2035, 1.442695
        %v2037 = vpow.pop %v2036
        %v2038 = vsel %vm618, %v2037, 0.0
        %2039 = vadd.xlane.f32.xlu0 %v2038
        %v2040 = vpop.xlane.xlu0 %2039
        %v2041 = vrcp.pop %v2040
        %v2042 = vmul.f32 %v2037, %v2041
        %2043 = vrot.lane.b32.xlu0 %v522, 72
        %v2044 = vpop.permute.xlu0 %2043
        %v2047 = vsel %vm618, %v2042, 0
        %2049 = vmatprep.subr.mxu0 0.0
        %2050 = vmatpush1.msra.mxu0 0.0
        %2051 = vmatprep.subr.mxu0 0.0
        %2052 = vmatpush1.msra.mxu0 0.0
        %2053 = vmatprep.subr.mxu0 0.0
        %2054 = vmatpush1.msra.mxu0 0.0
        %2055 = vmatprep.subr.mxu0 0.0
        %2056 = vmatpush1.msra.mxu0 0.0
        %2057 = vmatprep.subr.mxu0 0.0
        %2058 = vmatpush1.msra.mxu0 0.0
        %2059 = vmatprep.subr.mxu0 0.0
        %2060 = vmatpush1.msra.mxu0 0.0
        %2061 = vmatprep.subr.mxu0 0.0
        %2062 = vmatpush1.msra.mxu0 0.0
        %2063 = vmatprep.subr.mxu0 0.0
        %2064 = vmatpush1.msra.mxu0 0.0
        %2065 = vmatprep.subr.mxu0 0.0
        %2066 = vmatpush1.msra.mxu0 0.0
        %2067 = vmatprep.subr.mxu0 0.0
        %2068 = vmatpush1.msra.mxu0 0.0
        %2069 = vmatprep.subr.mxu0 0.0
        %2070 = vmatpush1.msra.mxu0 0.0
        %2071 = vmatprep.subr.mxu0 0.0
        %2072 = vmatpush1.msra.mxu0 0.0
        %2073 = vmatprep.subr.mxu0 0.0
        %2074 = vmatpush1.msra.mxu0 0.0
        %2075 = vmatprep.subr.mxu0 0.0
        %2076 = vmatpush1.msra.mxu0 0.0
        %2077 = vmatprep.subr.mxu0 0.0
        %2078 = vmatpush1.msra.mxu0 0.0
        %2079 = vmatprep.subr.mxu0 0.0
        %2080 = vmatpush1.msra.mxu0 %v2044
        %2081 = vmatprep.subr.mxu0 0.0
        %2082 = vmatpush2.msra.mxu0 0.0
        %2083 = vmatprep.subr.mxu0 0.0
        %2084 = vmatpush2.msra.mxu0 0.0
        %2085 = vmatprep.subr.mxu0 0.0
        %2086 = vmatpush2.msra.mxu0 0.0
        %2087 = vmatprep.subr.mxu0 0.0
        %2088 = vmatpush2.msra.mxu0 0.0
        %2089 = vmatprep.subr.mxu0 0.0
        %2090 = vmatpush2.msra.mxu0 0.0
        %2091 = vmatprep.subr.mxu0 0.0
        %2092 = vmatpush2.msra.mxu0 0.0
        %2093 = vmatprep.subr.mxu0 0.0
        %2094 = vmatpush2.msra.mxu0 0.0
        %2095 = vmatprep.subr.mxu0 0.0
        %2096 = vmatpush2.msra.mxu0 0.0
        %2097 = vmatprep.subr.mxu0 0.0
        %2098 = vmatpush2.msra.mxu0 0.0
        %2099 = vmatprep.subr.mxu0 0.0
        %2100 = vmatpush2.msra.mxu0 0.0
        %2101 = vmatprep.subr.mxu0 0.0
        %2102 = vmatpush2.msra.mxu0 0.0
        %2103 = vmatprep.subr.mxu0 0.0
        %2104 = vmatpush2.msra.mxu0 0.0
        %2105 = vmatprep.subr.mxu0 0.0
        %2106 = vmatpush2.msra.mxu0 0.0
        %2107 = vmatprep.subr.mxu0 0.0
        %2108 = vmatpush2.msra.mxu0 0.0
        %2109 = vmatprep.subr.mxu0 0.0
        %2110 = vmatpush2.msra.mxu0 0.0
        %2111 = vmatprep.subr.mxu0 0.0
        %2112 = vmatpush2.msra.mxu0 0.0
        %2113 = vmatprep.mubr.f32.mxu0 0.0
        %2114 = vmatmul.mubr.f32.gmra.mxu0 %v2047
        %v2115 = vpop.f32.mrf.mxu0
        %v2116 = vadd.f32 0.0, %v2115
        %v2117 = vpop.f32.mrf.mxu0
        %2118 = vdwg.mxu0
        %2120 = vrot.lane.b32.xlu0 %v1786, 8
        %v2121 = vpop.permute.xlu0 %2120
        %2124 = vrot.lane.b32.xlu0 %v1951, 16
        %v2125 = vpop.permute.xlu0 %2124
        %2128 = vrot.lane.b32.xlu0 %v2116, 24
        %v2129 = vpop.permute.xlu0 %2128
        %v2131 = vsel %vm618, %v1621, %v2121
        %v2132 = vsel %vm1288, %v2131, %v2125
        %v2133 = vsel %vm1290, %v2132, %v2129
        %v2135 = vsel %vm451, %v2133, 0
        %2137 = vmatprep.subr.mxu0 0.0
        %2138 = vmatpush1.msra.mxu0 0.0
        %2139 = vmatprep.subr.mxu0 0.0
        %2140 = vmatpush1.msra.mxu0 0.0
        %2141 = vmatprep.subr.mxu0 0.0
        %2142 = vmatpush1.msra.mxu0 0.0
        %2143 = vmatprep.subr.mxu0 0.0
        %2144 = vmatpush1.msra.mxu0 0.0
        %2145 = vmatprep.subr.mxu0 0.0
        %2146 = vmatpush1.msra.mxu0 0.0
        %2147 = vmatprep.subr.mxu0 0.0
        %2148 = vmatpush1.msra.mxu0 0.0
        %2149 = vmatprep.subr.mxu0 0.0
        %2150 = vmatpush1.msra.mxu0 0.0
        %2151 = vmatprep.subr.mxu0 0.0
        %2152 = vmatpush1.msra.mxu0 0.0
        %2153 = vmatprep.subr.mxu0 0.0
        %2154 = vmatpush1.msra.mxu0 0.0
        %2155 = vmatprep.subr.mxu0 0.0
        %2156 = vmatpush1.msra.mxu0 0.0
        %2157 = vmatprep.subr.mxu0 0.0
        %2158 = vmatpush1.msra.mxu0 0.0
        %2159 = vmatprep.subr.mxu0 0.0
        %2160 = vmatpush1.msra.mxu0 0.0
        %2161 = vmatprep.subr.mxu0 0.0
        %2162 = vmatpush1.msra.mxu0 %v1454
        %2163 = vmatprep.subr.mxu0 0.0
        %2164 = vmatpush1.msra.mxu0 %v1453
        %2165 = vmatprep.subr.mxu0 0.0
        %2166 = vmatpush1.msra.mxu0 %v1452
        %2167 = vmatprep.subr.mxu0 0.0
        %2168 = vmatpush1.msra.mxu0 %v1451
        %2169 = vmatprep.subr.mxu0 0.0
        %2170 = vmatpush2.msra.mxu0 0.0
        %2171 = vmatprep.subr.mxu0 0.0
        %2172 = vmatpush2.msra.mxu0 0.0
        %2173 = vmatprep.subr.mxu0 0.0
        %2174 = vmatpush2.msra.mxu0 0.0
        %2175 = vmatprep.subr.mxu0 0.0
        %2176 = vmatpush2.msra.mxu0 0.0
        %2177 = vmatprep.subr.mxu0 0.0
        %2178 = vmatpush2.msra.mxu0 0.0
        %2179 = vmatprep.subr.mxu0 0.0
        %2180 = vmatpush2.msra.mxu0 0.0
        %2181 = vmatprep.subr.mxu0 0.0
        %2182 = vmatpush2.msra.mxu0 0.0
        %2183 = vmatprep.subr.mxu0 0.0
        %2184 = vmatpush2.msra.mxu0 0.0
        %2185 = vmatprep.subr.mxu0 0.0
        %2186 = vmatpush2.msra.mxu0 0.0
        %2187 = vmatprep.subr.mxu0 0.0
        %2188 = vmatpush2.msra.mxu0 0.0
        %2189 = vmatprep.subr.mxu0 0.0
        %2190 = vmatpush2.msra.mxu0 0.0
        %2191 = vmatprep.subr.mxu0 0.0
        %2192 = vmatpush2.msra.mxu0 0.0
        %2193 = vmatprep.subr.mxu0 0.0
        %2194 = vmatpush2.msra.mxu0 0.0
        %2195 = vmatprep.subr.mxu0 0.0
        %2196 = vmatpush2.msra.mxu0 0.0
        %2197 = vmatprep.subr.mxu0 0.0
        %2198 = vmatpush2.msra.mxu0 0.0
        %2199 = vmatprep.subr.mxu0 0.0
        %2200 = vmatpush2.msra.mxu0 0.0
        %2201 = vmatprep.mubr.f32.mxu0 0.0
        %2202 = vmatmul.mubr.f32.gmra.mxu0 %v2135
        %v2203 = vpop.f32.mrf.mxu0
        %v2204 = vadd.f32 0.0, %v2203
        %v2205 = vpop.f32.mrf.mxu0
        %2206 = vdwg.mxu0
        %v2207 = vadd.f32 %v1365, %v2204
        %v2208 = vmul.f32 %v2207, %v2207
        %v2209 = vsel %vm451, %v2208, 0.0
        %2210 = vadd.xlane.f32.xlu0 %v2209
        %v2211 = vpop.xlane.xlu0 %2210
        %v2212 = vmul.f32 %v2211, %v529
        %v2213 = vadd.f32 %v2212, 1e-06
        %v2214 = vrsqrt.pop %v2213
        %v2215 = vmul.f32 %v2207, %v2214
        %v2216 = vld [vmem:[%s10] sm:$0xff]
        %v2217 = vld [vmem:[%s10 + $0x8] sm:$0xff]
        %v2218 = vld [vmem:[%s10 + $0x10] sm:$0xff]
        %v2219 = vld [vmem:[%s10 + $0x18] sm:$0xff]
        %v2221 = vsel %vm451, %v2215, 0
        %2223 = vmatprep.subr.mxu0 0.0
        %2224 = vmatpush1.msra.mxu0 0.0
        %2225 = vmatprep.subr.mxu0 0.0
        %2226 = vmatpush1.msra.mxu0 0.0
        %2227 = vmatprep.subr.mxu0 0.0
        %2228 = vmatpush1.msra.mxu0 0.0
        %2229 = vmatprep.subr.mxu0 0.0
        %2230 = vmatpush1.msra.mxu0 0.0
        %2231 = vmatprep.subr.mxu0 0.0
        %2232 = vmatpush1.msra.mxu0 0.0
        %2233 = vmatprep.subr.mxu0 0.0
        %2234 = vmatpush1.msra.mxu0 0.0
        %2235 = vmatprep.subr.mxu0 0.0
        %2236 = vmatpush1.msra.mxu0 0.0
        %2237 = vmatprep.subr.mxu0 0.0
        %2238 = vmatpush1.msra.mxu0 0.0
        %2239 = vmatprep.subr.mxu0 0.0
        %2240 = vmatpush1.msra.mxu0 0.0
        %2241 = vmatprep.subr.mxu0 0.0
        %2242 = vmatpush1.msra.mxu0 0.0
        %2243 = vmatprep.subr.mxu0 0.0
        %2244 = vmatpush1.msra.mxu0 0.0
        %2245 = vmatprep.subr.mxu0 0.0
        %2246 = vmatpush1.msra.mxu0 0.0
        %2247 = vmatprep.subr.mxu0 0.0
        %2248 = vmatpush1.msra.mxu0 %v2219
        %2249 = vmatprep.subr.mxu0 0.0
        %2250 = vmatpush1.msra.mxu0 %v2218
        %2251 = vmatprep.subr.mxu0 0.0
        %2252 = vmatpush1.msra.mxu0 %v2217
        %2253 = vmatprep.subr.mxu0 0.0
        %2254 = vmatpush1.msra.mxu0 %v2216
        %2255 = vmatprep.subr.mxu0 0.0
        %2256 = vmatpush2.msra.mxu0 0.0
        %2257 = vmatprep.subr.mxu0 0.0
        %2258 = vmatpush2.msra.mxu0 0.0
        %2259 = vmatprep.subr.mxu0 0.0
        %2260 = vmatpush2.msra.mxu0 0.0
        %2261 = vmatprep.subr.mxu0 0.0
        %2262 = vmatpush2.msra.mxu0 0.0
        %2263 = vmatprep.subr.mxu0 0.0
        %2264 = vmatpush2.msra.mxu0 0.0
        %2265 = vmatprep.subr.mxu0 0.0
        %2266 = vmatpush2.msra.mxu0 0.0
        %2267 = vmatprep.subr.mxu0 0.0
        %2268 = vmatpush2.msra.mxu0 0.0
        %2269 = vmatprep.subr.mxu0 0.0
        %2270 = vmatpush2.msra.mxu0 0.0
        %2271 = vmatprep.subr.mxu0 0.0
        %2272 = vmatpush2.msra.mxu0 0.0
        %2273 = vmatprep.subr.mxu0 0.0
        %2274 = vmatpush2.msra.mxu0 0.0
        %2275 = vmatprep.subr.mxu0 0.0
        %2276 = vmatpush2.msra.mxu0 0.0
        %2277 = vmatprep.subr.mxu0 0.0
        %2278 = vmatpush2.msra.mxu0 0.0
        %2279 = vmatprep.subr.mxu0 0.0
        %2280 = vmatpush2.msra.mxu0 0.0
        %2281 = vmatprep.subr.mxu0 0.0
        %2282 = vmatpush2.msra.mxu0 0.0
        %2283 = vmatprep.subr.mxu0 0.0
        %2284 = vmatpush2.msra.mxu0 0.0
        %2285 = vmatprep.subr.mxu0 0.0
        %2286 = vmatpush2.msra.mxu0 0.0
        %2287 = vmatprep.mubr.f32.mxu0 0.0
        %2288 = vmatmul.mubr.f32.gmra.mxu0 %v2221
        %v2289 = vpop.f32.mrf.mxu0
        %v2290 = vadd.f32 0.0, %v2289
        %v2291 = vpop.f32.mrf.mxu0
        %2292 = vdwg.mxu0
        %v2293 = vmul.f32 %v2290, 0.5
        %v2294 = vmul.f32 %v2290, 0.044715
        %v2295 = vmul.f32 %v2294, %v2290
        %v2296 = vmul.f32 %v2295, %v2290
        %v2297 = vadd.f32 %v2290, %v2296
        %v2298 = vmul.f32 %v2297, 0.7978846
        %v2299 = vtanh.pop %v2298
        %v2300 = vadd.f32 %v2299, 1.0
        %v2301 = vmul.f32 %v2293, %v2300
        %2303 = vrot.lane.b32.xlu0 %v2301, 64
        %v2304 = vpop.permute.xlu0 %2303
        %v2306 = vmul.f32 %v2290, %v2304
        %v2307 = vld [vmem:[%s11] sm:$0xff]
        %v2308 = vld [vmem:[%s11 + $0x8] sm:$0xff]
        %v2309 = vld [vmem:[%s11 + $0x10] sm:$0xff]
        %v2310 = vld [vmem:[%s11 + $0x18] sm:$0xff]
        %v2311 = vld [vmem:[%s11 + $0x20] sm:$0xff]
        %v2312 = vld [vmem:[%s11 + $0x28] sm:$0xff]
        %v2313 = vld [vmem:[%s11 + $0x30] sm:$0xff]
        %v2314 = vld [vmem:[%s11 + $0x38] sm:$0xff]
        %vm2315 = vcmask 523264
        %v2317 = vsel %vm2315, %v2306, 0
        %2319 = vmatprep.subr.mxu0 0.0
        %2320 = vmatpush1.msra.mxu0 0.0
        %2321 = vmatprep.subr.mxu0 0.0
        %2322 = vmatpush1.msra.mxu0 0.0
        %2323 = vmatprep.subr.mxu0 0.0
        %2324 = vmatpush1.msra.mxu0 0.0
        %2325 = vmatprep.subr.mxu0 0.0
        %2326 = vmatpush1.msra.mxu0 0.0
        %2327 = vmatprep.subr.mxu0 0.0
        %2328 = vmatpush1.msra.mxu0 0.0
        %2329 = vmatprep.subr.mxu0 0.0
        %2330 = vmatpush1.msra.mxu0 0.0
        %2331 = vmatprep.subr.mxu0 0.0
        %2332 = vmatpush1.msra.mxu0 0.0
        %2333 = vmatprep.subr.mxu0 0.0
        %2334 = vmatpush1.msra.mxu0 0.0
        %2335 = vmatprep.subr.mxu0 0.0
        %2336 = vmatpush1.msra.mxu0 %v2314
        %2337 = vmatprep.subr.mxu0 0.0
        %2338 = vmatpush1.msra.mxu0 %v2313
        %2339 = vmatprep.subr.mxu0 0.0
        %2340 = vmatpush1.msra.mxu0 %v2312
        %2341 = vmatprep.subr.mxu0 0.0
        %2342 = vmatpush1.msra.mxu0 %v2311
        %2343 = vmatprep.subr.mxu0 0.0
        %2344 = vmatpush1.msra.mxu0 %v2310
        %2345 = vmatprep.subr.mxu0 0.0
        %2346 = vmatpush1.msra.mxu0 %v2309
        %2347 = vmatprep.subr.mxu0 0.0
        %2348 = vmatpush1.msra.mxu0 %v2308
        %2349 = vmatprep.subr.mxu0 0.0
        %2350 = vmatpush1.msra.mxu0 %v2307
        %2351 = vmatprep.subr.mxu0 0.0
        %2352 = vmatpush2.msra.mxu0 0.0
        %2353 = vmatprep.subr.mxu0 0.0
        %2354 = vmatpush2.msra.mxu0 0.0
        %2355 = vmatprep.subr.mxu0 0.0
        %2356 = vmatpush2.msra.mxu0 0.0
        %2357 = vmatprep.subr.mxu0 0.0
        %2358 = vmatpush2.msra.mxu0 0.0
        %2359 = vmatprep.subr.mxu0 0.0
        %2360 = vmatpush2.msra.mxu0 0.0
        %2361 = vmatprep.subr.mxu0 0.0
        %2362 = vmatpush2.msra.mxu0 0.0
        %2363 = vmatprep.subr.mxu0 0.0
        %2364 = vmatpush2.msra.mxu0 0.0
        %2365 = vmatprep.subr.mxu0 0.0
        %2366 = vmatpush2.msra.mxu0 0.0
        %2367 = vmatprep.subr.mxu0 0.0
        %2368 = vmatpush2.msra.mxu0 0.0
        %2369 = vmatprep.subr.mxu0 0.0
        %2370 = vmatpush2.msra.mxu0 0.0
        %2371 = vmatprep.subr.mxu0 0.0
        %2372 = vmatpush2.msra.mxu0 0.0
        %2373 = vmatprep.subr.mxu0 0.0
        %2374 = vmatpush2.msra.mxu0 0.0
        %2375 = vmatprep.subr.mxu0 0.0
        %2376 = vmatpush2.msra.mxu0 0.0
        %2377 = vmatprep.subr.mxu0 0.0
        %2378 = vmatpush2.msra.mxu0 0.0
        %2379 = vmatprep.subr.mxu0 0.0
        %2380 = vmatpush2.msra.mxu0 0.0
        %2381 = vmatprep.subr.mxu0 0.0
        %2382 = vmatpush2.msra.mxu0 0.0
        %2383 = vmatprep.mubr.f32.mxu0 0.0
        %2384 = vmatmul.mubr.f32.gmra.mxu0 %v2317
        %v2385 = vpop.f32.mrf.mxu0
        %v2386 = vadd.f32 0.0, %v2385
        %v2387 = vpop.f32.mrf.mxu0
        %2388 = vdwg.mxu0
        %v2389 = vadd.f32 %v2207, %v2386
        %v2390 = vmul.f32 %v2389, %v2389
        %v2391 = vsel %vm451, %v2390, 0.0
        %2392 = vadd.xlane.f32.xlu0 %v2391
        %v2393 = vpop.xlane.xlu0 %2392
        %v2394 = vmul.f32 %v2393, %v529
        %v2395 = vadd.f32 %v2394, 1e-06
        %v2396 = vrsqrt.pop %v2395
        %v2397 = vmul.f32 %v2389, %v2396
        %s2398 = scalar_lea.vmem %s5, 32
        %v2399 = vld [vmem:[%s2398] sm:$0xff]
        %v2400 = vld [vmem:[%s2398 + $0x8] sm:$0xff]
        %v2401 = vld [vmem:[%s2398 + $0x10] sm:$0xff]
        %v2402 = vld [vmem:[%s2398 + $0x18] sm:$0xff]
        %v2404 = vsel %vm451, %v2397, 0
        %2406 = vmatprep.subr.mxu0 0.0
        %2407 = vmatpush1.msra.mxu0 0.0
        %2408 = vmatprep.subr.mxu0 0.0
        %2409 = vmatpush1.msra.mxu0 0.0
        %2410 = vmatprep.subr.mxu0 0.0
        %2411 = vmatpush1.msra.mxu0 0.0
        %2412 = vmatprep.subr.mxu0 0.0
        %2413 = vmatpush1.msra.mxu0 0.0
        %2414 = vmatprep.subr.mxu0 0.0
        %2415 = vmatpush1.msra.mxu0 0.0
        %2416 = vmatprep.subr.mxu0 0.0
        %2417 = vmatpush1.msra.mxu0 0.0
        %2418 = vmatprep.subr.mxu0 0.0
        %2419 = vmatpush1.msra.mxu0 0.0
        %2420 = vmatprep.subr.mxu0 0.0
        %2421 = vmatpush1.msra.mxu0 0.0
        %2422 = vmatprep.subr.mxu0 0.0
        %2423 = vmatpush1.msra.mxu0 0.0
        %2424 = vmatprep.subr.mxu0 0.0
        %2425 = vmatpush1.msra.mxu0 0.0
        %2426 = vmatprep.subr.mxu0 0.0
        %2427 = vmatpush1.msra.mxu0 0.0
        %2428 = vmatprep.subr.mxu0 0.0
        %2429 = vmatpush1.msra.mxu0 0.0
        %2430 = vmatprep.subr.mxu0 0.0
        %2431 = vmatpush1.msra.mxu0 %v2402
        %2432 = vmatprep.subr.mxu0 0.0
        %2433 = vmatpush1.msra.mxu0 %v2401
        %2434 = vmatprep.subr.mxu0 0.0
        %2435 = vmatpush1.msra.mxu0 %v2400
        %2436 = vmatprep.subr.mxu0 0.0
        %2437 = vmatpush1.msra.mxu0 %v2399
        %2438 = vmatprep.subr.mxu0 0.0
        %2439 = vmatpush2.msra.mxu0 0.0
        %2440 = vmatprep.subr.mxu0 0.0
        %2441 = vmatpush2.msra.mxu0 0.0
        %2442 = vmatprep.subr.mxu0 0.0
        %2443 = vmatpush2.msra.mxu0 0.0
        %2444 = vmatprep.subr.mxu0 0.0
        %2445 = vmatpush2.msra.mxu0 0.0
        %2446 = vmatprep.subr.mxu0 0.0
        %2447 = vmatpush2.msra.mxu0 0.0
        %2448 = vmatprep.subr.mxu0 0.0
        %2449 = vmatpush2.msra.mxu0 0.0
        %2450 = vmatprep.subr.mxu0 0.0
        %2451 = vmatpush2.msra.mxu0 0.0
        %2452 = vmatprep.subr.mxu0 0.0
        %2453 = vmatpush2.msra.mxu0 0.0
        %2454 = vmatprep.subr.mxu0 0.0
        %2455 = vmatpush2.msra.mxu0 0.0
        %2456 = vmatprep.subr.mxu0 0.0
        %2457 = vmatpush2.msra.mxu0 0.0
        %2458 = vmatprep.subr.mxu0 0.0
        %2459 = vmatpush2.msra.mxu0 0.0
        %2460 = vmatprep.subr.mxu0 0.0
        %2461 = vmatpush2.msra.mxu0 0.0
        %2462 = vmatprep.subr.mxu0 0.0
        %2463 = vmatpush2.msra.mxu0 0.0
        %2464 = vmatprep.subr.mxu0 0.0
        %2465 = vmatpush2.msra.mxu0 0.0
        %2466 = vmatprep.subr.mxu0 0.0
        %2467 = vmatpush2.msra.mxu0 0.0
        %2468 = vmatprep.subr.mxu0 0.0
        %2469 = vmatpush2.msra.mxu0 0.0
        %2470 = vmatprep.mubr.f32.mxu0 0.0
        %2471 = vmatmul.mubr.f32.gmra.mxu0 %v2404
        %v2472 = vpop.f32.mrf.mxu0
        %v2473 = vadd.f32 0.0, %v2472
        %v2474 = vpop.f32.mrf.mxu0
        %2475 = vdwg.mxu0
        %s2476 = scalar_lea.vmem %s6, 32
        %v2477 = vld [vmem:[%s2476] sm:$0xff]
        %v2478 = vld [vmem:[%s2476 + $0x8] sm:$0xff]
        %v2479 = vld [vmem:[%s2476 + $0x10] sm:$0xff]
        %v2480 = vld [vmem:[%s2476 + $0x18] sm:$0xff]
        %2482 = vrot.lane.b32.xlu0 %v2473, 96
        %v2483 = vpop.permute.xlu0 %2482
        %v2484 = vsel %vm618, %v2473, 0
        %v2486 = vsel %vm618, %v2483, 0
        %2488 = vmatprep.subr.mxu0 0.0
        %2489 = vmatpush1.xpose.msra.mxu0 0.0
        %2490 = vmatprep.subr.mxu0 0.0
        %2491 = vmatpush1.xpose.msra.mxu0 0.0
        %2492 = vmatprep.subr.mxu0 0.0
        %2493 = vmatpush1.xpose.msra.mxu0 0.0
        %2494 = vmatprep.subr.mxu0 0.0
        %2495 = vmatpush1.xpose.msra.mxu0 0.0
        %2496 = vmatprep.subr.mxu0 0.0
        %2497 = vmatpush1.xpose.msra.mxu0 0.0
        %2498 = vmatprep.subr.mxu0 0.0
        %2499 = vmatpush1.xpose.msra.mxu0 0.0
        %2500 = vmatprep.subr.mxu0 0.0
        %2501 = vmatpush1.xpose.msra.mxu0 0.0
        %2502 = vmatprep.subr.mxu0 0.0
        %2503 = vmatpush1.xpose.msra.mxu0 0.0
        %2504 = vmatprep.subr.mxu0 0.0
        %2505 = vmatpush1.xpose.msra.mxu0 0.0
        %2506 = vmatprep.subr.mxu0 0.0
        %2507 = vmatpush1.xpose.msra.mxu0 0.0
        %2508 = vmatprep.subr.mxu0 0.0
        %2509 = vmatpush1.xpose.msra.mxu0 0.0
        %2510 = vmatprep.subr.mxu0 0.0
        %2511 = vmatpush1.xpose.msra.mxu0 0.0
        %2512 = vmatprep.subr.mxu0 0.0
        %2513 = vmatpush1.xpose.msra.mxu0 0.0
        %2514 = vmatprep.subr.mxu0 0.0
        %2515 = vmatpush1.xpose.msra.mxu0 0.0
        %2516 = vmatprep.subr.mxu0 0.0
        %2517 = vmatpush1.xpose.msra.mxu0 0.0
        %2518 = vmatprep.subr.mxu0 0.0
        %2519 = vmatpush1.xpose.msra.mxu0 %v2486
        %2520 = vmatprep.subr.mxu0 0.0
        %2521 = vmatpush2.xpose.msra.mxu0 0.0
        %2522 = vmatprep.subr.mxu0 0.0
        %2523 = vmatpush2.xpose.msra.mxu0 0.0
        %2524 = vmatprep.subr.mxu0 0.0
        %2525 = vmatpush2.xpose.msra.mxu0 0.0
        %2526 = vmatprep.subr.mxu0 0.0
        %2527 = vmatpush2.xpose.msra.mxu0 0.0
        %2528 = vmatprep.subr.mxu0 0.0
        %2529 = vmatpush2.xpose.msra.mxu0 0.0
        %2530 = vmatprep.subr.mxu0 0.0
        %2531 = vmatpush2.xpose.msra.mxu0 0.0
        %2532 = vmatprep.subr.mxu0 0.0
        %2533 = vmatpush2.xpose.msra.mxu0 0.0
        %2534 = vmatprep.subr.mxu0 0.0
        %2535 = vmatpush2.xpose.msra.mxu0 0.0
        %2536 = vmatprep.subr.mxu0 0.0
        %2537 = vmatpush2.xpose.msra.mxu0 0.0
        %2538 = vmatprep.subr.mxu0 0.0
        %2539 = vmatpush2.xpose.msra.mxu0 0.0
        %2540 = vmatprep.subr.mxu0 0.0
        %2541 = vmatpush2.xpose.msra.mxu0 0.0
        %2542 = vmatprep.subr.mxu0 0.0
        %2543 = vmatpush2.xpose.msra.mxu0 0.0
        %2544 = vmatprep.subr.mxu0 0.0
        %2545 = vmatpush2.xpose.msra.mxu0 0.0
        %2546 = vmatprep.subr.mxu0 0.0
        %2547 = vmatpush2.xpose.msra.mxu0 0.0
        %2548 = vmatprep.subr.mxu0 0.0
        %2549 = vmatpush2.xpose.msra.mxu0 0.0
        %2550 = vmatprep.subr.mxu0 0.0
        %2551 = vmatpush2.xpose.msra.mxu0 0.0
        %2552 = vmatprep.mubr.f32.mxu0 0.0
        %2553 = vmatmul.mubr.f32.gmra.mxu0 %v2484
        %v2554 = vpop.f32.mrf.mxu0
        %v2555 = vadd.f32 %v442, %v2554
        %v2556 = vpop.f32.mrf.mxu0
        %2557 = vdwg.mxu0
        %v2558 = vsel %vm618, %v2555, -inf
        %2559 = vmax.xlane.f32.xlu0 %v2558
        %v2560 = vpop.xlane.xlu0 %2559
        %v2561 = vsub.f32 %v2555, %v2560
        %v2562 = vmul.f32 %v2561, 1.442695
        %v2563 = vpow.pop %v2562
        %v2564 = vsel %vm618, %v2563, 0.0
        %2565 = vadd.xlane.f32.xlu0 %v2564
        %v2566 = vpop.xlane.xlu0 %2565
        %v2567 = vrcp.pop %v2566
        %v2568 = vmul.f32 %v2563, %v2567
        %2569 = vrot.lane.b32.xlu0 %v2473, 64
        %v2570 = vpop.permute.xlu0 %2569
        %v2573 = vsel %vm618, %v2568, 0
        %2575 = vmatprep.subr.mxu0 0.0
        %2576 = vmatpush1.msra.mxu0 0.0
        %2577 = vmatprep.subr.mxu0 0.0
        %2578 = vmatpush1.msra.mxu0 0.0
        %2579 = vmatprep.subr.mxu0 0.0
        %2580 = vmatpush1.msra.mxu0 0.0
        %2581 = vmatprep.subr.mxu0 0.0
        %2582 = vmatpush1.msra.mxu0 0.0
        %2583 = vmatprep.subr.mxu0 0.0
        %2584 = vmatpush1.msra.mxu0 0.0
        %2585 = vmatprep.subr.mxu0 0.0
        %2586 = vmatpush1.msra.mxu0 0.0
        %2587 = vmatprep.subr.mxu0 0.0
        %2588 = vmatpush1.msra.mxu0 0.0
        %2589 = vmatprep.subr.mxu0 0.0
        %2590 = vmatpush1.msra.mxu0 0.0
        %2591 = vmatprep.subr.mxu0 0.0
        %2592 = vmatpush1.msra.mxu0 0.0
        %2593 = vmatprep.subr.mxu0 0.0
        %2594 = vmatpush1.msra.mxu0 0.0
        %2595 = vmatprep.subr.mxu0 0.0
        %2596 = vmatpush1.msra.mxu0 0.0
        %2597 = vmatprep.subr.mxu0 0.0
        %2598 = vmatpush1.msra.mxu0 0.0
        %2599 = vmatprep.subr.mxu0 0.0
        %2600 = vmatpush1.msra.mxu0 0.0
        %2601 = vmatprep.subr.mxu0 0.0
        %2602 = vmatpush1.msra.mxu0 0.0
        %2603 = vmatprep.subr.mxu0 0.0
        %2604 = vmatpush1.msra.mxu0 0.0
        %2605 = vmatprep.subr.mxu0 0.0
        %2606 = vmatpush1.msra.mxu0 %v2570
        %2607 = vmatprep.subr.mxu0 0.0
        %2608 = vmatpush2.msra.mxu0 0.0
        %2609 = vmatprep.subr.mxu0 0.0
        %2610 = vmatpush2.msra.mxu0 0.0
        %2611 = vmatprep.subr.mxu0 0.0
        %2612 = vmatpush2.msra.mxu0 0.0
        %2613 = vmatprep.subr.mxu0 0.0
        %2614 = vmatpush2.msra.mxu0 0.0
        %2615 = vmatprep.subr.mxu0 0.0
        %2616 = vmatpush2.msra.mxu0 0.0
        %2617 = vmatprep.subr.mxu0 0.0
        %2618 = vmatpush2.msra.mxu0 0.0
        %2619 = vmatprep.subr.mxu0 0.0
        %2620 = vmatpush2.msra.mxu0 0.0
        %2621 = vmatprep.subr.mxu0 0.0
        %2622 = vmatpush2.msra.mxu0 0.0
        %2623 = vmatprep.subr.mxu0 0.0
        %2624 = vmatpush2.msra.mxu0 0.0
        %2625 = vmatprep.subr.mxu0 0.0
        %2626 = vmatpush2.msra.mxu0 0.0
        %2627 = vmatprep.subr.mxu0 0.0
        %2628 = vmatpush2.msra.mxu0 0.0
        %2629 = vmatprep.subr.mxu0 0.0
        %2630 = vmatpush2.msra.mxu0 0.0
        %2631 = vmatprep.subr.mxu0 0.0
        %2632 = vmatpush2.msra.mxu0 0.0
        %2633 = vmatprep.subr.mxu0 0.0
        %2634 = vmatpush2.msra.mxu0 0.0
        %2635 = vmatprep.subr.mxu0 0.0
        %2636 = vmatpush2.msra.mxu0 0.0
        %2637 = vmatprep.subr.mxu0 0.0
        %2638 = vmatpush2.msra.mxu0 0.0
        %2639 = vmatprep.mubr.f32.mxu0 0.0
        %2640 = vmatmul.mubr.f32.gmra.mxu0 %v2573
        %v2641 = vpop.f32.mrf.mxu0
        %v2642 = vadd.f32 0.0, %v2641
        %v2643 = vpop.f32.mrf.mxu0
        %2644 = vdwg.mxu0
        %2645 = vrot.lane.b32.xlu0 %v2473, 120
        %v2646 = vpop.permute.xlu0 %2645
        %2647 = vrot.lane.b32.xlu0 %v2473, 88
        %v2648 = vpop.permute.xlu0 %2647
        %v2649 = vsel %vm618, %v2646, 0
        %v2651 = vsel %vm618, %v2648, 0
        %2653 = vmatprep.subr.mxu0 0.0
        %2654 = vmatpush1.xpose.msra.mxu0 0.0
        %2655 = vmatprep.subr.mxu0 0.0
        %2656 = vmatpush1.xpose.msra.mxu0 0.0
        %2657 = vmatprep.subr.mxu0 0.0
        %2658 = vmatpush1.xpose.msra.mxu0 0.0
        %2659 = vmatprep.subr.mxu0 0.0
        %2660 = vmatpush1.xpose.msra.mxu0 0.0
        %2661 = vmatprep.subr.mxu0 0.0
        %2662 = vmatpush1.xpose.msra.mxu0 0.0
        %2663 = vmatprep.subr.mxu0 0.0
        %2664 = vmatpush1.xpose.msra.mxu0 0.0
        %2665 = vmatprep.subr.mxu0 0.0
        %2666 = vmatpush1.xpose.msra.mxu0 0.0
        %2667 = vmatprep.subr.mxu0 0.0
        %2668 = vmatpush1.xpose.msra.mxu0 0.0
        %2669 = vmatprep.subr.mxu0 0.0
        %2670 = vmatpush1.xpose.msra.mxu0 0.0
        %2671 = vmatprep.subr.mxu0 0.0
        %2672 = vmatpush1.xpose.msra.mxu0 0.0
        %2673 = vmatprep.subr.mxu0 0.0
        %2674 = vmatpush1.xpose.msra.mxu0 0.0
        %2675 = vmatprep.subr.mxu0 0.0
        %2676 = vmatpush1.xpose.msra.mxu0 0.0
        %2677 = vmatprep.subr.mxu0 0.0
        %2678 = vmatpush1.xpose.msra.mxu0 0.0
        %2679 = vmatprep.subr.mxu0 0.0
        %2680 = vmatpush1.xpose.msra.mxu0 0.0
        %2681 = vmatprep.subr.mxu0 0.0
        %2682 = vmatpush1.xpose.msra.mxu0 0.0
        %2683 = vmatprep.subr.mxu0 0.0
        %2684 = vmatpush1.xpose.msra.mxu0 %v2651
        %2685 = vmatprep.subr.mxu0 0.0
        %2686 = vmatpush2.xpose.msra.mxu0 0.0
        %2687 = vmatprep.subr.mxu0 0.0
        %2688 = vmatpush2.xpose.msra.mxu0 0.0
        %2689 = vmatprep.subr.mxu0 0.0
        %2690 = vmatpush2.xpose.msra.mxu0 0.0
        %2691 = vmatprep.subr.mxu0 0.0
        %2692 = vmatpush2.xpose.msra.mxu0 0.0
        %2693 = vmatprep.subr.mxu0 0.0
        %2694 = vmatpush2.xpose.msra.mxu0 0.0
        %2695 = vmatprep.subr.mxu0 0.0
        %2696 = vmatpush2.xpose.msra.mxu0 0.0
        %2697 = vmatprep.subr.mxu0 0.0
        %2698 = vmatpush2.xpose.msra.mxu0 0.0
        %2699 = vmatprep.subr.mxu0 0.0
        %2700 = vmatpush2.xpose.msra.mxu0 0.0
        %2701 = vmatprep.subr.mxu0 0.0
        %2702 = vmatpush2.xpose.msra.mxu0 0.0
        %2703 = vmatprep.subr.mxu0 0.0
        %2704 = vmatpush2.xpose.msra.mxu0 0.0
        %2705 = vmatprep.subr.mxu0 0.0
        %2706 = vmatpush2.xpose.msra.mxu0 0.0
        %2707 = vmatprep.subr.mxu0 0.0
        %2708 = vmatpush2.xpose.msra.mxu0 0.0
        %2709 = vmatprep.subr.mxu0 0.0
        %2710 = vmatpush2.xpose.msra.mxu0 0.0
        %2711 = vmatprep.subr.mxu0 0.0
        %2712 = vmatpush2.xpose.msra.mxu0 0.0
        %2713 = vmatprep.subr.mxu0 0.0
        %2714 = vmatpush2.xpose.msra.mxu0 0.0
        %2715 = vmatprep.subr.mxu0 0.0
        %2716 = vmatpush2.xpose.msra.mxu0 0.0
        %2717 = vmatprep.mubr.f32.mxu0 0.0
        %2718 = vmatmul.mubr.f32.gmra.mxu0 %v2649
        %v2719 = vpop.f32.mrf.mxu0
        %v2720 = vadd.f32 %v443, %v2719
        %v2721 = vpop.f32.mrf.mxu0
        %2722 = vdwg.mxu0
        %v2723 = vsel %vm618, %v2720, -inf
        %2724 = vmax.xlane.f32.xlu0 %v2723
        %v2725 = vpop.xlane.xlu0 %2724
        %v2726 = vsub.f32 %v2720, %v2725
        %v2727 = vmul.f32 %v2726, 1.442695
        %v2728 = vpow.pop %v2727
        %v2729 = vsel %vm618, %v2728, 0.0
        %2730 = vadd.xlane.f32.xlu0 %v2729
        %v2731 = vpop.xlane.xlu0 %2730
        %v2732 = vrcp.pop %v2731
        %v2733 = vmul.f32 %v2728, %v2732
        %2734 = vrot.lane.b32.xlu0 %v2473, 56
        %v2735 = vpop.permute.xlu0 %2734
        %v2738 = vsel %vm618, %v2733, 0
        %2740 = vmatprep.subr.mxu0 0.0
        %2741 = vmatpush1.msra.mxu0 0.0
        %2742 = vmatprep.subr.mxu0 0.0
        %2743 = vmatpush1.msra.mxu0 0.0
        %2744 = vmatprep.subr.mxu0 0.0
        %2745 = vmatpush1.msra.mxu0 0.0
        %2746 = vmatprep.subr.mxu0 0.0
        %2747 = vmatpush1.msra.mxu0 0.0
        %2748 = vmatprep.subr.mxu0 0.0
        %2749 = vmatpush1.msra.mxu0 0.0
        %2750 = vmatprep.subr.mxu0 0.0
        %2751 = vmatpush1.msra.mxu0 0.0
        %2752 = vmatprep.subr.mxu0 0.0
        %2753 = vmatpush1.msra.mxu0 0.0
        %2754 = vmatprep.subr.mxu0 0.0
        %2755 = vmatpush1.msra.mxu0 0.0
        %2756 = vmatprep.subr.mxu0 0.0
        %2757 = vmatpush1.msra.mxu0 0.0
        %2758 = vmatprep.subr.mxu0 0.0
        %2759 = vmatpush1.msra.mxu0 0.0
        %2760 = vmatprep.subr.mxu0 0.0
        %2761 = vmatpush1.msra.mxu0 0.0
        %2762 = vmatprep.subr.mxu0 0.0
        %2763 = vmatpush1.msra.mxu0 0.0
        %2764 = vmatprep.subr.mxu0 0.0
        %2765 = vmatpush1.msra.mxu0 0.0
        %2766 = vmatprep.subr.mxu0 0.0
        %2767 = vmatpush1.msra.mxu0 0.0
        %2768 = vmatprep.subr.mxu0 0.0
        %2769 = vmatpush1.msra.mxu0 0.0
        %2770 = vmatprep.subr.mxu0 0.0
        %2771 = vmatpush1.msra.mxu0 %v2735
        %2772 = vmatprep.subr.mxu0 0.0
        %2773 = vmatpush2.msra.mxu0 0.0
        %2774 = vmatprep.subr.mxu0 0.0
        %2775 = vmatpush2.msra.mxu0 0.0
        %2776 = vmatprep.subr.mxu0 0.0
        %2777 = vmatpush2.msra.mxu0 0.0
        %2778 = vmatprep.subr.mxu0 0.0
        %2779 = vmatpush2.msra.mxu0 0.0
        %2780 = vmatprep.subr.mxu0 0.0
        %2781 = vmatpush2.msra.mxu0 0.0
        %2782 = vmatprep.subr.mxu0 0.0
        %2783 = vmatpush2.msra.mxu0 0.0
        %2784 = vmatprep.subr.mxu0 0.0
        %2785 = vmatpush2.msra.mxu0 0.0
        %2786 = vmatprep.subr.mxu0 0.0
        %2787 = vmatpush2.msra.mxu0 0.0
        %2788 = vmatprep.subr.mxu0 0.0
        %2789 = vmatpush2.msra.mxu0 0.0
        %2790 = vmatprep.subr.mxu0 0.0
        %2791 = vmatpush2.msra.mxu0 0.0
        %2792 = vmatprep.subr.mxu0 0.0
        %2793 = vmatpush2.msra.mxu0 0.0
        %2794 = vmatprep.subr.mxu0 0.0
        %2795 = vmatpush2.msra.mxu0 0.0
        %2796 = vmatprep.subr.mxu0 0.0
        %2797 = vmatpush2.msra.mxu0 0.0
        %2798 = vmatprep.subr.mxu0 0.0
        %2799 = vmatpush2.msra.mxu0 0.0
        %2800 = vmatprep.subr.mxu0 0.0
        %2801 = vmatpush2.msra.mxu0 0.0
        %2802 = vmatprep.subr.mxu0 0.0
        %2803 = vmatpush2.msra.mxu0 0.0
        %2804 = vmatprep.mubr.f32.mxu0 0.0
        %2805 = vmatmul.mubr.f32.gmra.mxu0 %v2738
        %v2806 = vpop.f32.mrf.mxu0
        %v2807 = vadd.f32 0.0, %v2806
        %v2808 = vpop.f32.mrf.mxu0
        %2809 = vdwg.mxu0
        %2810 = vrot.lane.b32.xlu0 %v2473, 112
        %v2811 = vpop.permute.xlu0 %2810
        %2812 = vrot.lane.b32.xlu0 %v2473, 80
        %v2813 = vpop.permute.xlu0 %2812
        %v2814 = vsel %vm618, %v2811, 0
        %v2816 = vsel %vm618, %v2813, 0
        %2818 = vmatprep.subr.mxu0 0.0
        %2819 = vmatpush1.xpose.msra.mxu0 0.0
        %2820 = vmatprep.subr.mxu0 0.0
        %2821 = vmatpush1.xpose.msra.mxu0 0.0
        %2822 = vmatprep.subr.mxu0 0.0
        %2823 = vmatpush1.xpose.msra.mxu0 0.0
        %2824 = vmatprep.subr.mxu0 0.0
        %2825 = vmatpush1.xpose.msra.mxu0 0.0
        %2826 = vmatprep.subr.mxu0 0.0
        %2827 = vmatpush1.xpose.msra.mxu0 0.0
        %2828 = vmatprep.subr.mxu0 0.0
        %2829 = vmatpush1.xpose.msra.mxu0 0.0
        %2830 = vmatprep.subr.mxu0 0.0
        %2831 = vmatpush1.xpose.msra.mxu0 0.0
        %2832 = vmatprep.subr.mxu0 0.0
        %2833 = vmatpush1.xpose.msra.mxu0 0.0
        %2834 = vmatprep.subr.mxu0 0.0
        %2835 = vmatpush1.xpose.msra.mxu0 0.0
        %2836 = vmatprep.subr.mxu0 0.0
        %2837 = vmatpush1.xpose.msra.mxu0 0.0
        %2838 = vmatprep.subr.mxu0 0.0
        %2839 = vmatpush1.xpose.msra.mxu0 0.0
        %2840 = vmatprep.subr.mxu0 0.0
        %2841 = vmatpush1.xpose.msra.mxu0 0.0
        %2842 = vmatprep.subr.mxu0 0.0
        %2843 = vmatpush1.xpose.msra.mxu0 0.0
        %2844 = vmatprep.subr.mxu0 0.0
        %2845 = vmatpush1.xpose.msra.mxu0 0.0
        %2846 = vmatprep.subr.mxu0 0.0
        %2847 = vmatpush1.xpose.msra.mxu0 0.0
        %2848 = vmatprep.subr.mxu0 0.0
        %2849 = vmatpush1.xpose.msra.mxu0 %v2816
        %2850 = vmatprep.subr.mxu0 0.0
        %2851 = vmatpush2.xpose.msra.mxu0 0.0
        %2852 = vmatprep.subr.mxu0 0.0
        %2853 = vmatpush2.xpose.msra.mxu0 0.0
        %2854 = vmatprep.subr.mxu0 0.0
        %2855 = vmatpush2.xpose.msra.mxu0 0.0
        %2856 = vmatprep.subr.mxu0 0.0
        %2857 = vmatpush2.xpose.msra.mxu0 0.0
        %2858 = vmatprep.subr.mxu0 0.0
        %2859 = vmatpush2.xpose.msra.mxu0 0.0
        %2860 = vmatprep.subr.mxu0 0.0
        %2861 = vmatpush2.xpose.msra.mxu0 0.0
        %2862 = vmatprep.subr.mxu0 0.0
        %2863 = vmatpush2.xpose.msra.mxu0 0.0
        %2864 = vmatprep.subr.mxu0 0.0
        %2865 = vmatpush2.xpose.msra.mxu0 0.0
        %2866 = vmatprep.subr.mxu0 0.0
        %2867 = vmatpush2.xpose.msra.mxu0 0.0
        %2868 = vmatprep.subr.mxu0 0.0
        %2869 = vmatpush2.xpose.msra.mxu0 0.0
        %2870 = vmatprep.subr.mxu0 0.0
        %2871 = vmatpush2.xpose.msra.mxu0 0.0
        %2872 = vmatprep.subr.mxu0 0.0
        %2873 = vmatpush2.xpose.msra.mxu0 0.0
        %2874 = vmatprep.subr.mxu0 0.0
        %2875 = vmatpush2.xpose.msra.mxu0 0.0
        %2876 = vmatprep.subr.mxu0 0.0
        %2877 = vmatpush2.xpose.msra.mxu0 0.0
        %2878 = vmatprep.subr.mxu0 0.0
        %2879 = vmatpush2.xpose.msra.mxu0 0.0
        %2880 = vmatprep.subr.mxu0 0.0
        %2881 = vmatpush2.xpose.msra.mxu0 0.0
        %2882 = vmatprep.mubr.f32.mxu0 0.0
        %2883 = vmatmul.mubr.f32.gmra.mxu0 %v2814
        %v2884 = vpop.f32.mrf.mxu0
        %v2885 = vadd.f32 %v444, %v2884
        %v2886 = vpop.f32.mrf.mxu0
        %2887 = vdwg.mxu0
        %v2888 = vsel %vm618, %v2885, -inf
        %2889 = vmax.xlane.f32.xlu0 %v2888
        %v2890 = vpop.xlane.xlu0 %2889
        %v2891 = vsub.f32 %v2885, %v2890
        %v2892 = vmul.f32 %v2891, 1.442695
        %v2893 = vpow.pop %v2892
        %v2894 = vsel %vm618, %v2893, 0.0
        %2895 = vadd.xlane.f32.xlu0 %v2894
        %v2896 = vpop.xlane.xlu0 %2895
        %v2897 = vrcp.pop %v2896
        %v2898 = vmul.f32 %v2893, %v2897
        %2899 = vrot.lane.b32.xlu0 %v2473, 48
        %v2900 = vpop.permute.xlu0 %2899
        %v2903 = vsel %vm618, %v2898, 0
        %2905 = vmatprep.subr.mxu0 0.0
        %2906 = vmatpush1.msra.mxu0 0.0
        %2907 = vmatprep.subr.mxu0 0.0
        %2908 = vmatpush1.msra.mxu0 0.0
        %2909 = vmatprep.subr.mxu0 0.0
        %2910 = vmatpush1.msra.mxu0 0.0
        %2911 = vmatprep.subr.mxu0 0.0
        %2912 = vmatpush1.msra.mxu0 0.0
        %2913 = vmatprep.subr.mxu0 0.0
        %2914 = vmatpush1.msra.mxu0 0.0
        %2915 = vmatprep.subr.mxu0 0.0
        %2916 = vmatpush1.msra.mxu0 0.0
        %2917 = vmatprep.subr.mxu0 0.0
        %2918 = vmatpush1.msra.mxu0 0.0
        %2919 = vmatprep.subr.mxu0 0.0
        %2920 = vmatpush1.msra.mxu0 0.0
        %2921 = vmatprep.subr.mxu0 0.0
        %2922 = vmatpush1.msra.mxu0 0.0
        %2923 = vmatprep.subr.mxu0 0.0
        %2924 = vmatpush1.msra.mxu0 0.0
        %2925 = vmatprep.subr.mxu0 0.0
        %2926 = vmatpush1.msra.mxu0 0.0
        %2927 = vmatprep.subr.mxu0 0.0
        %2928 = vmatpush1.msra.mxu0 0.0
        %2929 = vmatprep.subr.mxu0 0.0
        %2930 = vmatpush1.msra.mxu0 0.0
        %2931 = vmatprep.subr.mxu0 0.0
        %2932 = vmatpush1.msra.mxu0 0.0
        %2933 = vmatprep.subr.mxu0 0.0
        %2934 = vmatpush1.msra.mxu0 0.0
        %2935 = vmatprep.subr.mxu0 0.0
        %2936 = vmatpush1.msra.mxu0 %v2900
        %2937 = vmatprep.subr.mxu0 0.0
        %2938 = vmatpush2.msra.mxu0 0.0
        %2939 = vmatprep.subr.mxu0 0.0
        %2940 = vmatpush2.msra.mxu0 0.0
        %2941 = vmatprep.subr.mxu0 0.0
        %2942 = vmatpush2.msra.mxu0 0.0
        %2943 = vmatprep.subr.mxu0 0.0
        %2944 = vmatpush2.msra.mxu0 0.0
        %2945 = vmatprep.subr.mxu0 0.0
        %2946 = vmatpush2.msra.mxu0 0.0
        %2947 = vmatprep.subr.mxu0 0.0
        %2948 = vmatpush2.msra.mxu0 0.0
        %2949 = vmatprep.subr.mxu0 0.0
        %2950 = vmatpush2.msra.mxu0 0.0
        %2951 = vmatprep.subr.mxu0 0.0
        %2952 = vmatpush2.msra.mxu0 0.0
        %2953 = vmatprep.subr.mxu0 0.0
        %2954 = vmatpush2.msra.mxu0 0.0
        %2955 = vmatprep.subr.mxu0 0.0
        %2956 = vmatpush2.msra.mxu0 0.0
        %2957 = vmatprep.subr.mxu0 0.0
        %2958 = vmatpush2.msra.mxu0 0.0
        %2959 = vmatprep.subr.mxu0 0.0
        %2960 = vmatpush2.msra.mxu0 0.0
        %2961 = vmatprep.subr.mxu0 0.0
        %2962 = vmatpush2.msra.mxu0 0.0
        %2963 = vmatprep.subr.mxu0 0.0
        %2964 = vmatpush2.msra.mxu0 0.0
        %2965 = vmatprep.subr.mxu0 0.0
        %2966 = vmatpush2.msra.mxu0 0.0
        %2967 = vmatprep.subr.mxu0 0.0
        %2968 = vmatpush2.msra.mxu0 0.0
        %2969 = vmatprep.mubr.f32.mxu0 0.0
        %2970 = vmatmul.mubr.f32.gmra.mxu0 %v2903
        %v2971 = vpop.f32.mrf.mxu0
        %v2972 = vadd.f32 0.0, %v2971
        %v2973 = vpop.f32.mrf.mxu0
        %2974 = vdwg.mxu0
        %2975 = vrot.lane.b32.xlu0 %v2473, 104
        %v2976 = vpop.permute.xlu0 %2975
        %2977 = vrot.lane.b32.xlu0 %v2473, 72
        %v2978 = vpop.permute.xlu0 %2977
        %v2979 = vsel %vm618, %v2976, 0
        %v2981 = vsel %vm618, %v2978, 0
        %2983 = vmatprep.subr.mxu0 0.0
        %2984 = vmatpush1.xpose.msra.mxu0 0.0
        %2985 = vmatprep.subr.mxu0 0.0
        %2986 = vmatpush1.xpose.msra.mxu0 0.0
        %2987 = vmatprep.subr.mxu0 0.0
        %2988 = vmatpush1.xpose.msra.mxu0 0.0
        %2989 = vmatprep.subr.mxu0 0.0
        %2990 = vmatpush1.xpose.msra.mxu0 0.0
        %2991 = vmatprep.subr.mxu0 0.0
        %2992 = vmatpush1.xpose.msra.mxu0 0.0
        %2993 = vmatprep.subr.mxu0 0.0
        %2994 = vmatpush1.xpose.msra.mxu0 0.0
        %2995 = vmatprep.subr.mxu0 0.0
        %2996 = vmatpush1.xpose.msra.mxu0 0.0
        %2997 = vmatprep.subr.mxu0 0.0
        %2998 = vmatpush1.xpose.msra.mxu0 0.0
        %2999 = vmatprep.subr.mxu0 0.0
        %3000 = vmatpush1.xpose.msra.mxu0 0.0
        %3001 = vmatprep.subr.mxu0 0.0
        %3002 = vmatpush1.xpose.msra.mxu0 0.0
        %3003 = vmatprep.subr.mxu0 0.0
        %3004 = vmatpush1.xpose.msra.mxu0 0.0
        %3005 = vmatprep.subr.mxu0 0.0
        %3006 = vmatpush1.xpose.msra.mxu0 0.0
        %3007 = vmatprep.subr.mxu0 0.0
        %3008 = vmatpush1.xpose.msra.mxu0 0.0
        %3009 = vmatprep.subr.mxu0 0.0
        %3010 = vmatpush1.xpose.msra.mxu0 0.0
        %3011 = vmatprep.subr.mxu0 0.0
        %3012 = vmatpush1.xpose.msra.mxu0 0.0
        %3013 = vmatprep.subr.mxu0 0.0
        %3014 = vmatpush1.xpose.msra.mxu0 %v2981
        %3015 = vmatprep.subr.mxu0 0.0
        %3016 = vmatpush2.xpose.msra.mxu0 0.0
        %3017 = vmatprep.subr.mxu0 0.0
        %3018 = vmatpush2.xpose.msra.mxu0 0.0
        %3019 = vmatprep.subr.mxu0 0.0
        %3020 = vmatpush2.xpose.msra.mxu0 0.0
        %3021 = vmatprep.subr.mxu0 0.0
        %3022 = vmatpush2.xpose.msra.mxu0 0.0
        %3023 = vmatprep.subr.mxu0 0.0
        %3024 = vmatpush2.xpose.msra.mxu0 0.0
        %3025 = vmatprep.subr.mxu0 0.0
        %3026 = vmatpush2.xpose.msra.mxu0 0.0
        %3027 = vmatprep.subr.mxu0 0.0
        %3028 = vmatpush2.xpose.msra.mxu0 0.0
        %3029 = vmatprep.subr.mxu0 0.0
        %3030 = vmatpush2.xpose.msra.mxu0 0.0
        %3031 = vmatprep.subr.mxu0 0.0
        %3032 = vmatpush2.xpose.msra.mxu0 0.0
        %3033 = vmatprep.subr.mxu0 0.0
        %3034 = vmatpush2.xpose.msra.mxu0 0.0
        %3035 = vmatprep.subr.mxu0 0.0
        %3036 = vmatpush2.xpose.msra.mxu0 0.0
        %3037 = vmatprep.subr.mxu0 0.0
        %3038 = vmatpush2.xpose.msra.mxu0 0.0
        %3039 = vmatprep.subr.mxu0 0.0
        %3040 = vmatpush2.xpose.msra.mxu0 0.0
        %3041 = vmatprep.subr.mxu0 0.0
        %3042 = vmatpush2.xpose.msra.mxu0 0.0
        %3043 = vmatprep.subr.mxu0 0.0
        %3044 = vmatpush2.xpose.msra.mxu0 0.0
        %3045 = vmatprep.subr.mxu0 0.0
        %3046 = vmatpush2.xpose.msra.mxu0 0.0
        %3047 = vmatprep.mubr.f32.mxu0 0.0
        %3048 = vmatmul.mubr.f32.gmra.mxu0 %v2979
        %v3049 = vpop.f32.mrf.mxu0
        %v3050 = vadd.f32 %v445, %v3049
        %v3051 = vpop.f32.mrf.mxu0
        %3052 = vdwg.mxu0
        %v3053 = vsel %vm618, %v3050, -inf
        %3054 = vmax.xlane.f32.xlu0 %v3053
        %v3055 = vpop.xlane.xlu0 %3054
        %v3056 = vsub.f32 %v3050, %v3055
        %v3057 = vmul.f32 %v3056, 1.442695
        %v3058 = vpow.pop %v3057
        %v3059 = vsel %vm618, %v3058, 0.0
        %3060 = vadd.xlane.f32.xlu0 %v3059
        %v3061 = vpop.xlane.xlu0 %3060
        %v3062 = vrcp.pop %v3061
        %v3063 = vmul.f32 %v3058, %v3062
        %3064 = vrot.lane.b32.xlu0 %v2473, 40
        %v3065 = vpop.permute.xlu0 %3064
        %v3068 = vsel %vm618, %v3063, 0
        %3070 = vmatprep.subr.mxu0 0.0
        %3071 = vmatpush1.msra.mxu0 0.0
        %3072 = vmatprep.subr.mxu0 0.0
        %3073 = vmatpush1.msra.mxu0 0.0
        %3074 = vmatprep.subr.mxu0 0.0
        %3075 = vmatpush1.msra.mxu0 0.0
        %3076 = vmatprep.subr.mxu0 0.0
        %3077 = vmatpush1.msra.mxu0 0.0
        %3078 = vmatprep.subr.mxu0 0.0
        %3079 = vmatpush1.msra.mxu0 0.0
        %3080 = vmatprep.subr.mxu0 0.0
        %3081 = vmatpush1.msra.mxu0 0.0
        %3082 = vmatprep.subr.mxu0 0.0
        %3083 = vmatpush1.msra.mxu0 0.0
        %3084 = vmatprep.subr.mxu0 0.0
        %3085 = vmatpush1.msra.mxu0 0.0
        %3086 = vmatprep.subr.mxu0 0.0
        %3087 = vmatpush1.msra.mxu0 0.0
        %3088 = vmatprep.subr.mxu0 0.0
        %3089 = vmatpush1.msra.mxu0 0.0
        %3090 = vmatprep.subr.mxu0 0.0
        %3091 = vmatpush1.msra.mxu0 0.0
        %3092 = vmatprep.subr.mxu0 0.0
        %3093 = vmatpush1.msra.mxu0 0.0
        %3094 = vmatprep.subr.mxu0 0.0
        %3095 = vmatpush1.msra.mxu0 0.0
        %3096 = vmatprep.subr.mxu0 0.0
        %3097 = vmatpush1.msra.mxu0 0.0
        %3098 = vmatprep.subr.mxu0 0.0
        %3099 = vmatpush1.msra.mxu0 0.0
        %3100 = vmatprep.subr.mxu0 0.0
        %3101 = vmatpush1.msra.mxu0 %v3065
        %3102 = vmatprep.subr.mxu0 0.0
        %3103 = vmatpush2.msra.mxu0 0.0
        %3104 = vmatprep.subr.mxu0 0.0
        %3105 = vmatpush2.msra.mxu0 0.0
        %3106 = vmatprep.subr.mxu0 0.0
        %3107 = vmatpush2.msra.mxu0 0.0
        %3108 = vmatprep.subr.mxu0 0.0
        %3109 = vmatpush2.msra.mxu0 0.0
        %3110 = vmatprep.subr.mxu0 0.0
        %3111 = vmatpush2.msra.mxu0 0.0
        %3112 = vmatprep.subr.mxu0 0.0
        %3113 = vmatpush2.msra.mxu0 0.0
        %3114 = vmatprep.subr.mxu0 0.0
        %3115 = vmatpush2.msra.mxu0 0.0
        %3116 = vmatprep.subr.mxu0 0.0
        %3117 = vmatpush2.msra.mxu0 0.0
        %3118 = vmatprep.subr.mxu0 0.0
        %3119 = vmatpush2.msra.mxu0 0.0
        %3120 = vmatprep.subr.mxu0 0.0
        %3121 = vmatpush2.msra.mxu0 0.0
        %3122 = vmatprep.subr.mxu0 0.0
        %3123 = vmatpush2.msra.mxu0 0.0
        %3124 = vmatprep.subr.mxu0 0.0
        %3125 = vmatpush2.msra.mxu0 0.0
        %3126 = vmatprep.subr.mxu0 0.0
        %3127 = vmatpush2.msra.mxu0 0.0
        %3128 = vmatprep.subr.mxu0 0.0
        %3129 = vmatpush2.msra.mxu0 0.0
        %3130 = vmatprep.subr.mxu0 0.0
        %3131 = vmatpush2.msra.mxu0 0.0
        %3132 = vmatprep.subr.mxu0 0.0
        %3133 = vmatpush2.msra.mxu0 0.0
        %3134 = vmatprep.mubr.f32.mxu0 0.0
        %3135 = vmatmul.mubr.f32.gmra.mxu0 %v3068
        %v3136 = vpop.f32.mrf.mxu0
        %v3137 = vadd.f32 0.0, %v3136
        %v3138 = vpop.f32.mrf.mxu0
        %3139 = vdwg.mxu0
        %3141 = vrot.lane.b32.xlu0 %v2807, 8
        %v3142 = vpop.permute.xlu0 %3141
        %3145 = vrot.lane.b32.xlu0 %v2972, 16
        %v3146 = vpop.permute.xlu0 %3145
        %3149 = vrot.lane.b32.xlu0 %v3137, 24
        %v3150 = vpop.permute.xlu0 %3149
        %v3152 = vsel %vm618, %v2642, %v3142
        %v3153 = vsel %vm1288, %v3152, %v3146
        %v3154 = vsel %vm1290, %v3153, %v3150
        %v3156 = vsel %vm451, %v3154, 0
        %3158 = vmatprep.subr.mxu0 0.0
        %3159 = vmatpush1.msra.mxu0 0.0
        %3160 = vmatprep.subr.mxu0 0.0
        %3161 = vmatpush1.msra.mxu0 0.0
        %3162 = vmatprep.subr.mxu0 0.0
        %3163 = vmatpush1.msra.mxu0 0.0
        %3164 = vmatprep.subr.mxu0 0.0
        %3165 = vmatpush1.msra.mxu0 0.0
        %3166 = vmatprep.subr.mxu0 0.0
        %3167 = vmatpush1.msra.mxu0 0.0
        %3168 = vmatprep.subr.mxu0 0.0
        %3169 = vmatpush1.msra.mxu0 0.0
        %3170 = vmatprep.subr.mxu0 0.0
        %3171 = vmatpush1.msra.mxu0 0.0
        %3172 = vmatprep.subr.mxu0 0.0
        %3173 = vmatpush1.msra.mxu0 0.0
        %3174 = vmatprep.subr.mxu0 0.0
        %3175 = vmatpush1.msra.mxu0 0.0
        %3176 = vmatprep.subr.mxu0 0.0
        %3177 = vmatpush1.msra.mxu0 0.0
        %3178 = vmatprep.subr.mxu0 0.0
        %3179 = vmatpush1.msra.mxu0 0.0
        %3180 = vmatprep.subr.mxu0 0.0
        %3181 = vmatpush1.msra.mxu0 0.0
        %3182 = vmatprep.subr.mxu0 0.0
        %3183 = vmatpush1.msra.mxu0 %v2480
        %3184 = vmatprep.subr.mxu0 0.0
        %3185 = vmatpush1.msra.mxu0 %v2479
        %3186 = vmatprep.subr.mxu0 0.0
        %3187 = vmatpush1.msra.mxu0 %v2478
        %3188 = vmatprep.subr.mxu0 0.0
        %3189 = vmatpush1.msra.mxu0 %v2477
        %3190 = vmatprep.subr.mxu0 0.0
        %3191 = vmatpush2.msra.mxu0 0.0
        %3192 = vmatprep.subr.mxu0 0.0
        %3193 = vmatpush2.msra.mxu0 0.0
        %3194 = vmatprep.subr.mxu0 0.0
        %3195 = vmatpush2.msra.mxu0 0.0
        %3196 = vmatprep.subr.mxu0 0.0
        %3197 = vmatpush2.msra.mxu0 0.0
        %3198 = vmatprep.subr.mxu0 0.0
        %3199 = vmatpush2.msra.mxu0 0.0
        %3200 = vmatprep.subr.mxu0 0.0
        %3201 = vmatpush2.msra.mxu0 0.0
        %3202 = vmatprep.subr.mxu0 0.0
        %3203 = vmatpush2.msra.mxu0 0.0
        %3204 = vmatprep.subr.mxu0 0.0
        %3205 = vmatpush2.msra.mxu0 0.0
        %3206 = vmatprep.subr.mxu0 0.0
        %3207 = vmatpush2.msra.mxu0 0.0
        %3208 = vmatprep.subr.mxu0 0.0
        %3209 = vmatpush2.msra.mxu0 0.0
        %3210 = vmatprep.subr.mxu0 0.0
        %3211 = vmatpush2.msra.mxu0 0.0
        %3212 = vmatprep.subr.mxu0 0.0
        %3213 = vmatpush2.msra.mxu0 0.0
        %3214 = vmatprep.subr.mxu0 0.0
        %3215 = vmatpush2.msra.mxu0 0.0
        %3216 = vmatprep.subr.mxu0 0.0
        %3217 = vmatpush2.msra.mxu0 0.0
        %3218 = vmatprep.subr.mxu0 0.0
        %3219 = vmatpush2.msra.mxu0 0.0
        %3220 = vmatprep.subr.mxu0 0.0
        %3221 = vmatpush2.msra.mxu0 0.0
        %3222 = vmatprep.mubr.f32.mxu0 0.0
        %3223 = vmatmul.mubr.f32.gmra.mxu0 %v3156
        %v3224 = vpop.f32.mrf.mxu0
        %v3225 = vadd.f32 0.0, %v3224
        %v3226 = vpop.f32.mrf.mxu0
        %3227 = vdwg.mxu0
        %v3228 = vadd.f32 %v2389, %v3225
        %v3229 = vmul.f32 %v3228, %v3228
        %v3230 = vsel %vm451, %v3229, 0.0
        %3231 = vadd.xlane.f32.xlu0 %v3230
        %v3232 = vpop.xlane.xlu0 %3231
        %v3233 = vmul.f32 %v3232, %v529
        %v3234 = vadd.f32 %v3233, 1e-06
        %v3235 = vrsqrt.pop %v3234
        %v3236 = vmul.f32 %v3228, %v3235
        %s3237 = scalar_lea.vmem %s7, 32
        %v3238 = vld [vmem:[%s3237] sm:$0xff]
        %v3239 = vld [vmem:[%s3237 + $0x8] sm:$0xff]
        %v3240 = vld [vmem:[%s3237 + $0x10] sm:$0xff]
        %v3241 = vld [vmem:[%s3237 + $0x18] sm:$0xff]
        %v3243 = vsel %vm451, %v3236, 0
        %3245 = vmatprep.subr.mxu0 0.0
        %3246 = vmatpush1.msra.mxu0 0.0
        %3247 = vmatprep.subr.mxu0 0.0
        %3248 = vmatpush1.msra.mxu0 0.0
        %3249 = vmatprep.subr.mxu0 0.0
        %3250 = vmatpush1.msra.mxu0 0.0
        %3251 = vmatprep.subr.mxu0 0.0
        %3252 = vmatpush1.msra.mxu0 0.0
        %3253 = vmatprep.subr.mxu0 0.0
        %3254 = vmatpush1.msra.mxu0 0.0
        %3255 = vmatprep.subr.mxu0 0.0
        %3256 = vmatpush1.msra.mxu0 0.0
        %3257 = vmatprep.subr.mxu0 0.0
        %3258 = vmatpush1.msra.mxu0 0.0
        %3259 = vmatprep.subr.mxu0 0.0
        %3260 = vmatpush1.msra.mxu0 0.0
        %3261 = vmatprep.subr.mxu0 0.0
        %3262 = vmatpush1.msra.mxu0 0.0
        %3263 = vmatprep.subr.mxu0 0.0
        %3264 = vmatpush1.msra.mxu0 0.0
        %3265 = vmatprep.subr.mxu0 0.0
        %3266 = vmatpush1.msra.mxu0 0.0
        %3267 = vmatprep.subr.mxu0 0.0
        %3268 = vmatpush1.msra.mxu0 0.0
        %3269 = vmatprep.subr.mxu0 0.0
        %3270 = vmatpush1.msra.mxu0 %v3241
        %3271 = vmatprep.subr.mxu0 0.0
        %3272 = vmatpush1.msra.mxu0 %v3240
        %3273 = vmatprep.subr.mxu0 0.0
        %3274 = vmatpush1.msra.mxu0 %v3239
        %3275 = vmatprep.subr.mxu0 0.0
        %3276 = vmatpush1.msra.mxu0 %v3238
        %3277 = vmatprep.subr.mxu0 0.0
        %3278 = vmatpush2.msra.mxu0 0.0
        %3279 = vmatprep.subr.mxu0 0.0
        %3280 = vmatpush2.msra.mxu0 0.0
        %3281 = vmatprep.subr.mxu0 0.0
        %3282 = vmatpush2.msra.mxu0 0.0
        %3283 = vmatprep.subr.mxu0 0.0
        %3284 = vmatpush2.msra.mxu0 0.0
        %3285 = vmatprep.subr.mxu0 0.0
        %3286 = vmatpush2.msra.mxu0 0.0
        %3287 = vmatprep.subr.mxu0 0.0
        %3288 = vmatpush2.msra.mxu0 0.0
        %3289 = vmatprep.subr.mxu0 0.0
        %3290 = vmatpush2.msra.mxu0 0.0
        %3291 = vmatprep.subr.mxu0 0.0
        %3292 = vmatpush2.msra.mxu0 0.0
        %3293 = vmatprep.subr.mxu0 0.0
        %3294 = vmatpush2.msra.mxu0 0.0
        %3295 = vmatprep.subr.mxu0 0.0
        %3296 = vmatpush2.msra.mxu0 0.0
        %3297 = vmatprep.subr.mxu0 0.0
        %3298 = vmatpush2.msra.mxu0 0.0
        %3299 = vmatprep.subr.mxu0 0.0
        %3300 = vmatpush2.msra.mxu0 0.0
        %3301 = vmatprep.subr.mxu0 0.0
        %3302 = vmatpush2.msra.mxu0 0.0
        %3303 = vmatprep.subr.mxu0 0.0
        %3304 = vmatpush2.msra.mxu0 0.0
        %3305 = vmatprep.subr.mxu0 0.0
        %3306 = vmatpush2.msra.mxu0 0.0
        %3307 = vmatprep.subr.mxu0 0.0
        %3308 = vmatpush2.msra.mxu0 0.0
        %3309 = vmatprep.mubr.f32.mxu0 0.0
        %3310 = vmatmul.mubr.f32.gmra.mxu0 %v3243
        %v3311 = vpop.f32.mrf.mxu0
        %v3312 = vadd.f32 0.0, %v3311
        %v3313 = vpop.f32.mrf.mxu0
        %3314 = vdwg.mxu0
        %s3315 = scalar_lea.vmem %s9, 32
        %v3316 = vld [vmem:[%s3315] sm:$0xff]
        %v3317 = vld [vmem:[%s3315 + $0x8] sm:$0xff]
        %v3318 = vld [vmem:[%s3315 + $0x10] sm:$0xff]
        %v3319 = vld [vmem:[%s3315 + $0x18] sm:$0xff]
        %3320 = vrot.lane.b32.xlu0 %v522, 64
        %v3321 = vpop.permute.xlu0 %3320
        %v3323 = vsel %vm618, %v3312, 0
        %v3325 = vsel %vm618, %v3321, 0
        %3327 = vmatprep.subr.mxu0 0.0
        %3328 = vmatpush1.xpose.msra.mxu0 0.0
        %3329 = vmatprep.subr.mxu0 0.0
        %3330 = vmatpush1.xpose.msra.mxu0 0.0
        %3331 = vmatprep.subr.mxu0 0.0
        %3332 = vmatpush1.xpose.msra.mxu0 0.0
        %3333 = vmatprep.subr.mxu0 0.0
        %3334 = vmatpush1.xpose.msra.mxu0 0.0
        %3335 = vmatprep.subr.mxu0 0.0
        %3336 = vmatpush1.xpose.msra.mxu0 0.0
        %3337 = vmatprep.subr.mxu0 0.0
        %3338 = vmatpush1.xpose.msra.mxu0 0.0
        %3339 = vmatprep.subr.mxu0 0.0
        %3340 = vmatpush1.xpose.msra.mxu0 0.0
        %3341 = vmatprep.subr.mxu0 0.0
        %3342 = vmatpush1.xpose.msra.mxu0 0.0
        %3343 = vmatprep.subr.mxu0 0.0
        %3344 = vmatpush1.xpose.msra.mxu0 0.0
        %3345 = vmatprep.subr.mxu0 0.0
        %3346 = vmatpush1.xpose.msra.mxu0 0.0
        %3347 = vmatprep.subr.mxu0 0.0
        %3348 = vmatpush1.xpose.msra.mxu0 0.0
        %3349 = vmatprep.subr.mxu0 0.0
        %3350 = vmatpush1.xpose.msra.mxu0 0.0
        %3351 = vmatprep.subr.mxu0 0.0
        %3352 = vmatpush1.xpose.msra.mxu0 0.0
        %3353 = vmatprep.subr.mxu0 0.0
        %3354 = vmatpush1.xpose.msra.mxu0 0.0
        %3355 = vmatprep.subr.mxu0 0.0
        %3356 = vmatpush1.xpose.msra.mxu0 0.0
        %3357 = vmatprep.subr.mxu0 0.0
        %3358 = vmatpush1.xpose.msra.mxu0 %v3325
        %3359 = vmatprep.subr.mxu0 0.0
        %3360 = vmatpush2.xpose.msra.mxu0 0.0
        %3361 = vmatprep.subr.mxu0 0.0
        %3362 = vmatpush2.xpose.msra.mxu0 0.0
        %3363 = vmatprep.subr.mxu0 0.0
        %3364 = vmatpush2.xpose.msra.mxu0 0.0
        %3365 = vmatprep.subr.mxu0 0.0
        %3366 = vmatpush2.xpose.msra.mxu0 0.0
        %3367 = vmatprep.subr.mxu0 0.0
        %3368 = vmatpush2.xpose.msra.mxu0 0.0
        %3369 = vmatprep.subr.mxu0 0.0
        %3370 = vmatpush2.xpose.msra.mxu0 0.0
        %3371 = vmatprep.subr.mxu0 0.0
        %3372 = vmatpush2.xpose.msra.mxu0 0.0
        %3373 = vmatprep.subr.mxu0 0.0
        %3374 = vmatpush2.xpose.msra.mxu0 0.0
        %3375 = vmatprep.subr.mxu0 0.0
        %3376 = vmatpush2.xpose.msra.mxu0 0.0
        %3377 = vmatprep.subr.mxu0 0.0
        %3378 = vmatpush2.xpose.msra.mxu0 0.0
        %3379 = vmatprep.subr.mxu0 0.0
        %3380 = vmatpush2.xpose.msra.mxu0 0.0
        %3381 = vmatprep.subr.mxu0 0.0
        %3382 = vmatpush2.xpose.msra.mxu0 0.0
        %3383 = vmatprep.subr.mxu0 0.0
        %3384 = vmatpush2.xpose.msra.mxu0 0.0
        %3385 = vmatprep.subr.mxu0 0.0
        %3386 = vmatpush2.xpose.msra.mxu0 0.0
        %3387 = vmatprep.subr.mxu0 0.0
        %3388 = vmatpush2.xpose.msra.mxu0 0.0
        %3389 = vmatprep.subr.mxu0 0.0
        %3390 = vmatpush2.xpose.msra.mxu0 0.0
        %3391 = vmatprep.mubr.f32.mxu0 0.0
        %3392 = vmatmul.mubr.f32.gmra.mxu0 %v3323
        %v3393 = vpop.f32.mrf.mxu0
        %v3394 = vadd.f32 %v1459, %v3393
        %v3395 = vpop.f32.mrf.mxu0
        %3396 = vdwg.mxu0
        %v3397 = vsel %vm618, %v3394, -inf
        %3398 = vmax.xlane.f32.xlu0 %v3397
        %v3399 = vpop.xlane.xlu0 %3398
        %v3400 = vsub.f32 %v3394, %v3399
        %v3401 = vmul.f32 %v3400, 1.442695
        %v3402 = vpow.pop %v3401
        %v3403 = vsel %vm618, %v3402, 0.0
        %3404 = vadd.xlane.f32.xlu0 %v3403
        %v3405 = vpop.xlane.xlu0 %3404
        %v3406 = vrcp.pop %v3405
        %v3407 = vmul.f32 %v3402, %v3406
        %3408 = vrot.lane.b32.xlu0 %v522, 32
        %v3409 = vpop.permute.xlu0 %3408
        %v3412 = vsel %vm618, %v3407, 0
        %3414 = vmatprep.subr.mxu0 0.0
        %3415 = vmatpush1.msra.mxu0 0.0
        %3416 = vmatprep.subr.mxu0 0.0
        %3417 = vmatpush1.msra.mxu0 0.0
        %3418 = vmatprep.subr.mxu0 0.0
        %3419 = vmatpush1.msra.mxu0 0.0
        %3420 = vmatprep.subr.mxu0 0.0
        %3421 = vmatpush1.msra.mxu0 0.0
        %3422 = vmatprep.subr.mxu0 0.0
        %3423 = vmatpush1.msra.mxu0 0.0
        %3424 = vmatprep.subr.mxu0 0.0
        %3425 = vmatpush1.msra.mxu0 0.0
        %3426 = vmatprep.subr.mxu0 0.0
        %3427 = vmatpush1.msra.mxu0 0.0
        %3428 = vmatprep.subr.mxu0 0.0
        %3429 = vmatpush1.msra.mxu0 0.0
        %3430 = vmatprep.subr.mxu0 0.0
        %3431 = vmatpush1.msra.mxu0 0.0
        %3432 = vmatprep.subr.mxu0 0.0
        %3433 = vmatpush1.msra.mxu0 0.0
        %3434 = vmatprep.subr.mxu0 0.0
        %3435 = vmatpush1.msra.mxu0 0.0
        %3436 = vmatprep.subr.mxu0 0.0
        %3437 = vmatpush1.msra.mxu0 0.0
        %3438 = vmatprep.subr.mxu0 0.0
        %3439 = vmatpush1.msra.mxu0 0.0
        %3440 = vmatprep.subr.mxu0 0.0
        %3441 = vmatpush1.msra.mxu0 0.0
        %3442 = vmatprep.subr.mxu0 0.0
        %3443 = vmatpush1.msra.mxu0 0.0
        %3444 = vmatprep.subr.mxu0 0.0
        %3445 = vmatpush1.msra.mxu0 %v3409
        %3446 = vmatprep.subr.mxu0 0.0
        %3447 = vmatpush2.msra.mxu0 0.0
        %3448 = vmatprep.subr.mxu0 0.0
        %3449 = vmatpush2.msra.mxu0 0.0
        %3450 = vmatprep.subr.mxu0 0.0
        %3451 = vmatpush2.msra.mxu0 0.0
        %3452 = vmatprep.subr.mxu0 0.0
        %3453 = vmatpush2.msra.mxu0 0.0
        %3454 = vmatprep.subr.mxu0 0.0
        %3455 = vmatpush2.msra.mxu0 0.0
        %3456 = vmatprep.subr.mxu0 0.0
        %3457 = vmatpush2.msra.mxu0 0.0
        %3458 = vmatprep.subr.mxu0 0.0
        %3459 = vmatpush2.msra.mxu0 0.0
        %3460 = vmatprep.subr.mxu0 0.0
        %3461 = vmatpush2.msra.mxu0 0.0
        %3462 = vmatprep.subr.mxu0 0.0
        %3463 = vmatpush2.msra.mxu0 0.0
        %3464 = vmatprep.subr.mxu0 0.0
        %3465 = vmatpush2.msra.mxu0 0.0
        %3466 = vmatprep.subr.mxu0 0.0
        %3467 = vmatpush2.msra.mxu0 0.0
        %3468 = vmatprep.subr.mxu0 0.0
        %3469 = vmatpush2.msra.mxu0 0.0
        %3470 = vmatprep.subr.mxu0 0.0
        %3471 = vmatpush2.msra.mxu0 0.0
        %3472 = vmatprep.subr.mxu0 0.0
        %3473 = vmatpush2.msra.mxu0 0.0
        %3474 = vmatprep.subr.mxu0 0.0
        %3475 = vmatpush2.msra.mxu0 0.0
        %3476 = vmatprep.subr.mxu0 0.0
        %3477 = vmatpush2.msra.mxu0 0.0
        %3478 = vmatprep.mubr.f32.mxu0 0.0
        %3479 = vmatmul.mubr.f32.gmra.mxu0 %v3412
        %v3480 = vpop.f32.mrf.mxu0
        %v3481 = vadd.f32 0.0, %v3480
        %v3482 = vpop.f32.mrf.mxu0
        %3483 = vdwg.mxu0
        %3484 = vrot.lane.b32.xlu0 %v3312, 120
        %v3485 = vpop.permute.xlu0 %3484
        %3486 = vrot.lane.b32.xlu0 %v522, 56
        %v3487 = vpop.permute.xlu0 %3486
        %v3488 = vsel %vm618, %v3485, 0
        %v3490 = vsel %vm618, %v3487, 0
        %3492 = vmatprep.subr.mxu0 0.0
        %3493 = vmatpush1.xpose.msra.mxu0 0.0
        %3494 = vmatprep.subr.mxu0 0.0
        %3495 = vmatpush1.xpose.msra.mxu0 0.0
        %3496 = vmatprep.subr.mxu0 0.0
        %3497 = vmatpush1.xpose.msra.mxu0 0.0
        %3498 = vmatprep.subr.mxu0 0.0
        %3499 = vmatpush1.xpose.msra.mxu0 0.0
        %3500 = vmatprep.subr.mxu0 0.0
        %3501 = vmatpush1.xpose.msra.mxu0 0.0
        %3502 = vmatprep.subr.mxu0 0.0
        %3503 = vmatpush1.xpose.msra.mxu0 0.0
        %3504 = vmatprep.subr.mxu0 0.0
        %3505 = vmatpush1.xpose.msra.mxu0 0.0
        %3506 = vmatprep.subr.mxu0 0.0
        %3507 = vmatpush1.xpose.msra.mxu0 0.0
        %3508 = vmatprep.subr.mxu0 0.0
        %3509 = vmatpush1.xpose.msra.mxu0 0.0
        %3510 = vmatprep.subr.mxu0 0.0
        %3511 = vmatpush1.xpose.msra.mxu0 0.0
        %3512 = vmatprep.subr.mxu0 0.0
        %3513 = vmatpush1.xpose.msra.mxu0 0.0
        %3514 = vmatprep.subr.mxu0 0.0
        %3515 = vmatpush1.xpose.msra.mxu0 0.0
        %3516 = vmatprep.subr.mxu0 0.0
        %3517 = vmatpush1.xpose.msra.mxu0 0.0
        %3518 = vmatprep.subr.mxu0 0.0
        %3519 = vmatpush1.xpose.msra.mxu0 0.0
        %3520 = vmatprep.subr.mxu0 0.0
        %3521 = vmatpush1.xpose.msra.mxu0 0.0
        %3522 = vmatprep.subr.mxu0 0.0
        %3523 = vmatpush1.xpose.msra.mxu0 %v3490
        %3524 = vmatprep.subr.mxu0 0.0
        %3525 = vmatpush2.xpose.msra.mxu0 0.0
        %3526 = vmatprep.subr.mxu0 0.0
        %3527 = vmatpush2.xpose.msra.mxu0 0.0
        %3528 = vmatprep.subr.mxu0 0.0
        %3529 = vmatpush2.xpose.msra.mxu0 0.0
        %3530 = vmatprep.subr.mxu0 0.0
        %3531 = vmatpush2.xpose.msra.mxu0 0.0
        %3532 = vmatprep.subr.mxu0 0.0
        %3533 = vmatpush2.xpose.msra.mxu0 0.0
        %3534 = vmatprep.subr.mxu0 0.0
        %3535 = vmatpush2.xpose.msra.mxu0 0.0
        %3536 = vmatprep.subr.mxu0 0.0
        %3537 = vmatpush2.xpose.msra.mxu0 0.0
        %3538 = vmatprep.subr.mxu0 0.0
        %3539 = vmatpush2.xpose.msra.mxu0 0.0
        %3540 = vmatprep.subr.mxu0 0.0
        %3541 = vmatpush2.xpose.msra.mxu0 0.0
        %3542 = vmatprep.subr.mxu0 0.0
        %3543 = vmatpush2.xpose.msra.mxu0 0.0
        %3544 = vmatprep.subr.mxu0 0.0
        %3545 = vmatpush2.xpose.msra.mxu0 0.0
        %3546 = vmatprep.subr.mxu0 0.0
        %3547 = vmatpush2.xpose.msra.mxu0 0.0
        %3548 = vmatprep.subr.mxu0 0.0
        %3549 = vmatpush2.xpose.msra.mxu0 0.0
        %3550 = vmatprep.subr.mxu0 0.0
        %3551 = vmatpush2.xpose.msra.mxu0 0.0
        %3552 = vmatprep.subr.mxu0 0.0
        %3553 = vmatpush2.xpose.msra.mxu0 0.0
        %3554 = vmatprep.subr.mxu0 0.0
        %3555 = vmatpush2.xpose.msra.mxu0 0.0
        %3556 = vmatprep.mubr.f32.mxu0 0.0
        %3557 = vmatmul.mubr.f32.gmra.mxu0 %v3488
        %v3558 = vpop.f32.mrf.mxu0
        %v3559 = vadd.f32 %v1459, %v3558
        %v3560 = vpop.f32.mrf.mxu0
        %3561 = vdwg.mxu0
        %v3562 = vsel %vm618, %v3559, -inf
        %3563 = vmax.xlane.f32.xlu0 %v3562
        %v3564 = vpop.xlane.xlu0 %3563
        %v3565 = vsub.f32 %v3559, %v3564
        %v3566 = vmul.f32 %v3565, 1.442695
        %v3567 = vpow.pop %v3566
        %v3568 = vsel %vm618, %v3567, 0.0
        %3569 = vadd.xlane.f32.xlu0 %v3568
        %v3570 = vpop.xlane.xlu0 %3569
        %v3571 = vrcp.pop %v3570
        %v3572 = vmul.f32 %v3567, %v3571
        %3573 = vrot.lane.b32.xlu0 %v522, 24
        %v3574 = vpop.permute.xlu0 %3573
        %v3577 = vsel %vm618, %v3572, 0
        %3579 = vmatprep.subr.mxu0 0.0
        %3580 = vmatpush1.msra.mxu0 0.0
        %3581 = vmatprep.subr.mxu0 0.0
        %3582 = vmatpush1.msra.mxu0 0.0
        %3583 = vmatprep.subr.mxu0 0.0
        %3584 = vmatpush1.msra.mxu0 0.0
        %3585 = vmatprep.subr.mxu0 0.0
        %3586 = vmatpush1.msra.mxu0 0.0
        %3587 = vmatprep.subr.mxu0 0.0
        %3588 = vmatpush1.msra.mxu0 0.0
        %3589 = vmatprep.subr.mxu0 0.0
        %3590 = vmatpush1.msra.mxu0 0.0
        %3591 = vmatprep.subr.mxu0 0.0
        %3592 = vmatpush1.msra.mxu0 0.0
        %3593 = vmatprep.subr.mxu0 0.0
        %3594 = vmatpush1.msra.mxu0 0.0
        %3595 = vmatprep.subr.mxu0 0.0
        %3596 = vmatpush1.msra.mxu0 0.0
        %3597 = vmatprep.subr.mxu0 0.0
        %3598 = vmatpush1.msra.mxu0 0.0
        %3599 = vmatprep.subr.mxu0 0.0
        %3600 = vmatpush1.msra.mxu0 0.0
        %3601 = vmatprep.subr.mxu0 0.0
        %3602 = vmatpush1.msra.mxu0 0.0
        %3603 = vmatprep.subr.mxu0 0.0
        %3604 = vmatpush1.msra.mxu0 0.0
        %3605 = vmatprep.subr.mxu0 0.0
        %3606 = vmatpush1.msra.mxu0 0.0
        %3607 = vmatprep.subr.mxu0 0.0
        %3608 = vmatpush1.msra.mxu0 0.0
        %3609 = vmatprep.subr.mxu0 0.0
        %3610 = vmatpush1.msra.mxu0 %v3574
        %3611 = vmatprep.subr.mxu0 0.0
        %3612 = vmatpush2.msra.mxu0 0.0
        %3613 = vmatprep.subr.mxu0 0.0
        %3614 = vmatpush2.msra.mxu0 0.0
        %3615 = vmatprep.subr.mxu0 0.0
        %3616 = vmatpush2.msra.mxu0 0.0
        %3617 = vmatprep.subr.mxu0 0.0
        %3618 = vmatpush2.msra.mxu0 0.0
        %3619 = vmatprep.subr.mxu0 0.0
        %3620 = vmatpush2.msra.mxu0 0.0
        %3621 = vmatprep.subr.mxu0 0.0
        %3622 = vmatpush2.msra.mxu0 0.0
        %3623 = vmatprep.subr.mxu0 0.0
        %3624 = vmatpush2.msra.mxu0 0.0
        %3625 = vmatprep.subr.mxu0 0.0
        %3626 = vmatpush2.msra.mxu0 0.0
        %3627 = vmatprep.subr.mxu0 0.0
        %3628 = vmatpush2.msra.mxu0 0.0
        %3629 = vmatprep.subr.mxu0 0.0
        %3630 = vmatpush2.msra.mxu0 0.0
        %3631 = vmatprep.subr.mxu0 0.0
        %3632 = vmatpush2.msra.mxu0 0.0
        %3633 = vmatprep.subr.mxu0 0.0
        %3634 = vmatpush2.msra.mxu0 0.0
        %3635 = vmatprep.subr.mxu0 0.0
        %3636 = vmatpush2.msra.mxu0 0.0
        %3637 = vmatprep.subr.mxu0 0.0
        %3638 = vmatpush2.msra.mxu0 0.0
        %3639 = vmatprep.subr.mxu0 0.0
        %3640 = vmatpush2.msra.mxu0 0.0
        %3641 = vmatprep.subr.mxu0 0.0
        %3642 = vmatpush2.msra.mxu0 0.0
        %3643 = vmatprep.mubr.f32.mxu0 0.0
        %3644 = vmatmul.mubr.f32.gmra.mxu0 %v3577
        %v3645 = vpop.f32.mrf.mxu0
        %v3646 = vadd.f32 0.0, %v3645
        %v3647 = vpop.f32.mrf.mxu0
        %3648 = vdwg.mxu0
        %3649 = vrot.lane.b32.xlu0 %v3312, 112
        %v3650 = vpop.permute.xlu0 %3649
        %3651 = vrot.lane.b32.xlu0 %v522, 48
        %v3652 = vpop.permute.xlu0 %3651
        %v3653 = vsel %vm618, %v3650, 0
        %v3655 = vsel %vm618, %v3652, 0
        %3657 = vmatprep.subr.mxu0 0.0
        %3658 = vmatpush1.xpose.msra.mxu0 0.0
        %3659 = vmatprep.subr.mxu0 0.0
        %3660 = vmatpush1.xpose.msra.mxu0 0.0
        %3661 = vmatprep.subr.mxu0 0.0
        %3662 = vmatpush1.xpose.msra.mxu0 0.0
        %3663 = vmatprep.subr.mxu0 0.0
        %3664 = vmatpush1.xpose.msra.mxu0 0.0
        %3665 = vmatprep.subr.mxu0 0.0
        %3666 = vmatpush1.xpose.msra.mxu0 0.0
        %3667 = vmatprep.subr.mxu0 0.0
        %3668 = vmatpush1.xpose.msra.mxu0 0.0
        %3669 = vmatprep.subr.mxu0 0.0
        %3670 = vmatpush1.xpose.msra.mxu0 0.0
        %3671 = vmatprep.subr.mxu0 0.0
        %3672 = vmatpush1.xpose.msra.mxu0 0.0
        %3673 = vmatprep.subr.mxu0 0.0
        %3674 = vmatpush1.xpose.msra.mxu0 0.0
        %3675 = vmatprep.subr.mxu0 0.0
        %3676 = vmatpush1.xpose.msra.mxu0 0.0
        %3677 = vmatprep.subr.mxu0 0.0
        %3678 = vmatpush1.xpose.msra.mxu0 0.0
        %3679 = vmatprep.subr.mxu0 0.0
        %3680 = vmatpush1.xpose.msra.mxu0 0.0
        %3681 = vmatprep.subr.mxu0 0.0
        %3682 = vmatpush1.xpose.msra.mxu0 0.0
        %3683 = vmatprep.subr.mxu0 0.0
        %3684 = vmatpush1.xpose.msra.mxu0 0.0
        %3685 = vmatprep.subr.mxu0 0.0
        %3686 = vmatpush1.xpose.msra.mxu0 0.0
        %3687 = vmatprep.subr.mxu0 0.0
        %3688 = vmatpush1.xpose.msra.mxu0 %v3655
        %3689 = vmatprep.subr.mxu0 0.0
        %3690 = vmatpush2.xpose.msra.mxu0 0.0
        %3691 = vmatprep.subr.mxu0 0.0
        %3692 = vmatpush2.xpose.msra.mxu0 0.0
        %3693 = vmatprep.subr.mxu0 0.0
        %3694 = vmatpush2.xpose.msra.mxu0 0.0
        %3695 = vmatprep.subr.mxu0 0.0
        %3696 = vmatpush2.xpose.msra.mxu0 0.0
        %3697 = vmatprep.subr.mxu0 0.0
        %3698 = vmatpush2.xpose.msra.mxu0 0.0
        %3699 = vmatprep.subr.mxu0 0.0
        %3700 = vmatpush2.xpose.msra.mxu0 0.0
        %3701 = vmatprep.subr.mxu0 0.0
        %3702 = vmatpush2.xpose.msra.mxu0 0.0
        %3703 = vmatprep.subr.mxu0 0.0
        %3704 = vmatpush2.xpose.msra.mxu0 0.0
        %3705 = vmatprep.subr.mxu0 0.0
        %3706 = vmatpush2.xpose.msra.mxu0 0.0
        %3707 = vmatprep.subr.mxu0 0.0
        %3708 = vmatpush2.xpose.msra.mxu0 0.0
        %3709 = vmatprep.subr.mxu0 0.0
        %3710 = vmatpush2.xpose.msra.mxu0 0.0
        %3711 = vmatprep.subr.mxu0 0.0
        %3712 = vmatpush2.xpose.msra.mxu0 0.0
        %3713 = vmatprep.subr.mxu0 0.0
        %3714 = vmatpush2.xpose.msra.mxu0 0.0
        %3715 = vmatprep.subr.mxu0 0.0
        %3716 = vmatpush2.xpose.msra.mxu0 0.0
        %3717 = vmatprep.subr.mxu0 0.0
        %3718 = vmatpush2.xpose.msra.mxu0 0.0
        %3719 = vmatprep.subr.mxu0 0.0
        %3720 = vmatpush2.xpose.msra.mxu0 0.0
        %3721 = vmatprep.mubr.f32.mxu0 0.0
        %3722 = vmatmul.mubr.f32.gmra.mxu0 %v3653
        %v3723 = vpop.f32.mrf.mxu0
        %v3724 = vadd.f32 %v1459, %v3723
        %v3725 = vpop.f32.mrf.mxu0
        %3726 = vdwg.mxu0
        %v3727 = vsel %vm618, %v3724, -inf
        %3728 = vmax.xlane.f32.xlu0 %v3727
        %v3729 = vpop.xlane.xlu0 %3728
        %v3730 = vsub.f32 %v3724, %v3729
        %v3731 = vmul.f32 %v3730, 1.442695
        %v3732 = vpow.pop %v3731
        %v3733 = vsel %vm618, %v3732, 0.0
        %3734 = vadd.xlane.f32.xlu0 %v3733
        %v3735 = vpop.xlane.xlu0 %3734
        %v3736 = vrcp.pop %v3735
        %v3737 = vmul.f32 %v3732, %v3736
        %3738 = vrot.lane.b32.xlu0 %v522, 16
        %v3739 = vpop.permute.xlu0 %3738
        %v3742 = vsel %vm618, %v3737, 0
        %3744 = vmatprep.subr.mxu0 0.0
        %3745 = vmatpush1.msra.mxu0 0.0
        %3746 = vmatprep.subr.mxu0 0.0
        %3747 = vmatpush1.msra.mxu0 0.0
        %3748 = vmatprep.subr.mxu0 0.0
        %3749 = vmatpush1.msra.mxu0 0.0
        %3750 = vmatprep.subr.mxu0 0.0
        %3751 = vmatpush1.msra.mxu0 0.0
        %3752 = vmatprep.subr.mxu0 0.0
        %3753 = vmatpush1.msra.mxu0 0.0
        %3754 = vmatprep.subr.mxu0 0.0
        %3755 = vmatpush1.msra.mxu0 0.0
        %3756 = vmatprep.subr.mxu0 0.0
        %3757 = vmatpush1.msra.mxu0 0.0
        %3758 = vmatprep.subr.mxu0 0.0
        %3759 = vmatpush1.msra.mxu0 0.0
        %3760 = vmatprep.subr.mxu0 0.0
        %3761 = vmatpush1.msra.mxu0 0.0
        %3762 = vmatprep.subr.mxu0 0.0
        %3763 = vmatpush1.msra.mxu0 0.0
        %3764 = vmatprep.subr.mxu0 0.0
        %3765 = vmatpush1.msra.mxu0 0.0
        %3766 = vmatprep.subr.mxu0 0.0
        %3767 = vmatpush1.msra.mxu0 0.0
        %3768 = vmatprep.subr.mxu0 0.0
        %3769 = vmatpush1.msra.mxu0 0.0
        %3770 = vmatprep.subr.mxu0 0.0
        %3771 = vmatpush1.msra.mxu0 0.0
        %3772 = vmatprep.subr.mxu0 0.0
        %3773 = vmatpush1.msra.mxu0 0.0
        %3774 = vmatprep.subr.mxu0 0.0
        %3775 = vmatpush1.msra.mxu0 %v3739
        %3776 = vmatprep.subr.mxu0 0.0
        %3777 = vmatpush2.msra.mxu0 0.0
        %3778 = vmatprep.subr.mxu0 0.0
        %3779 = vmatpush2.msra.mxu0 0.0
        %3780 = vmatprep.subr.mxu0 0.0
        %3781 = vmatpush2.msra.mxu0 0.0
        %3782 = vmatprep.subr.mxu0 0.0
        %3783 = vmatpush2.msra.mxu0 0.0
        %3784 = vmatprep.subr.mxu0 0.0
        %3785 = vmatpush2.msra.mxu0 0.0
        %3786 = vmatprep.subr.mxu0 0.0
        %3787 = vmatpush2.msra.mxu0 0.0
        %3788 = vmatprep.subr.mxu0 0.0
        %3789 = vmatpush2.msra.mxu0 0.0
        %3790 = vmatprep.subr.mxu0 0.0
        %3791 = vmatpush2.msra.mxu0 0.0
        %3792 = vmatprep.subr.mxu0 0.0
        %3793 = vmatpush2.msra.mxu0 0.0
        %3794 = vmatprep.subr.mxu0 0.0
        %3795 = vmatpush2.msra.mxu0 0.0
        %3796 = vmatprep.subr.mxu0 0.0
        %3797 = vmatpush2.msra.mxu0 0.0
        %3798 = vmatprep.subr.mxu0 0.0
        %3799 = vmatpush2.msra.mxu0 0.0
        %3800 = vmatprep.subr.mxu0 0.0
        %3801 = vmatpush2.msra.mxu0 0.0
        %3802 = vmatprep.subr.mxu0 0.0
        %3803 = vmatpush2.msra.mxu0 0.0
        %3804 = vmatprep.subr.mxu0 0.0
        %3805 = vmatpush2.msra.mxu0 0.0
        %3806 = vmatprep.subr.mxu0 0.0
        %3807 = vmatpush2.msra.mxu0 0.0
        %3808 = vmatprep.mubr.f32.mxu0 0.0
        %3809 = vmatmul.mubr.f32.gmra.mxu0 %v3742
        %v3810 = vpop.f32.mrf.mxu0
        %v3811 = vadd.f32 0.0, %v3810
        %v3812 = vpop.f32.mrf.mxu0
        %3813 = vdwg.mxu0
        %3814 = vrot.lane.b32.xlu0 %v3312, 104
        %v3815 = vpop.permute.xlu0 %3814
        %3816 = vrot.lane.b32.xlu0 %v522, 40
        %v3817 = vpop.permute.xlu0 %3816
        %v3818 = vsel %vm618, %v3815, 0
        %v3820 = vsel %vm618, %v3817, 0
        %3822 = vmatprep.subr.mxu0 0.0
        %3823 = vmatpush1.xpose.msra.mxu0 0.0
        %3824 = vmatprep.subr.mxu0 0.0
        %3825 = vmatpush1.xpose.msra.mxu0 0.0
        %3826 = vmatprep.subr.mxu0 0.0
        %3827 = vmatpush1.xpose.msra.mxu0 0.0
        %3828 = vmatprep.subr.mxu0 0.0
        %3829 = vmatpush1.xpose.msra.mxu0 0.0
        %3830 = vmatprep.subr.mxu0 0.0
        %3831 = vmatpush1.xpose.msra.mxu0 0.0
        %3832 = vmatprep.subr.mxu0 0.0
        %3833 = vmatpush1.xpose.msra.mxu0 0.0
        %3834 = vmatprep.subr.mxu0 0.0
        %3835 = vmatpush1.xpose.msra.mxu0 0.0
        %3836 = vmatprep.subr.mxu0 0.0
        %3837 = vmatpush1.xpose.msra.mxu0 0.0
        %3838 = vmatprep.subr.mxu0 0.0
        %3839 = vmatpush1.xpose.msra.mxu0 0.0
        %3840 = vmatprep.subr.mxu0 0.0
        %3841 = vmatpush1.xpose.msra.mxu0 0.0
        %3842 = vmatprep.subr.mxu0 0.0
        %3843 = vmatpush1.xpose.msra.mxu0 0.0
        %3844 = vmatprep.subr.mxu0 0.0
        %3845 = vmatpush1.xpose.msra.mxu0 0.0
        %3846 = vmatprep.subr.mxu0 0.0
        %3847 = vmatpush1.xpose.msra.mxu0 0.0
        %3848 = vmatprep.subr.mxu0 0.0
        %3849 = vmatpush1.xpose.msra.mxu0 0.0
        %3850 = vmatprep.subr.mxu0 0.0
        %3851 = vmatpush1.xpose.msra.mxu0 0.0
        %3852 = vmatprep.subr.mxu0 0.0
        %3853 = vmatpush1.xpose.msra.mxu0 %v3820
        %3854 = vmatprep.subr.mxu0 0.0
        %3855 = vmatpush2.xpose.msra.mxu0 0.0
        %3856 = vmatprep.subr.mxu0 0.0
        %3857 = vmatpush2.xpose.msra.mxu0 0.0
        %3858 = vmatprep.subr.mxu0 0.0
        %3859 = vmatpush2.xpose.msra.mxu0 0.0
        %3860 = vmatprep.subr.mxu0 0.0
        %3861 = vmatpush2.xpose.msra.mxu0 0.0
        %3862 = vmatprep.subr.mxu0 0.0
        %3863 = vmatpush2.xpose.msra.mxu0 0.0
        %3864 = vmatprep.subr.mxu0 0.0
        %3865 = vmatpush2.xpose.msra.mxu0 0.0
        %3866 = vmatprep.subr.mxu0 0.0
        %3867 = vmatpush2.xpose.msra.mxu0 0.0
        %3868 = vmatprep.subr.mxu0 0.0
        %3869 = vmatpush2.xpose.msra.mxu0 0.0
        %3870 = vmatprep.subr.mxu0 0.0
        %3871 = vmatpush2.xpose.msra.mxu0 0.0
        %3872 = vmatprep.subr.mxu0 0.0
        %3873 = vmatpush2.xpose.msra.mxu0 0.0
        %3874 = vmatprep.subr.mxu0 0.0
        %3875 = vmatpush2.xpose.msra.mxu0 0.0
        %3876 = vmatprep.subr.mxu0 0.0
        %3877 = vmatpush2.xpose.msra.mxu0 0.0
        %3878 = vmatprep.subr.mxu0 0.0
        %3879 = vmatpush2.xpose.msra.mxu0 0.0
        %3880 = vmatprep.subr.mxu0 0.0
        %3881 = vmatpush2.xpose.msra.mxu0 0.0
        %3882 = vmatprep.subr.mxu0 0.0
        %3883 = vmatpush2.xpose.msra.mxu0 0.0
        %3884 = vmatprep.subr.mxu0 0.0
        %3885 = vmatpush2.xpose.msra.mxu0 0.0
        %3886 = vmatprep.mubr.f32.mxu0 0.0
        %3887 = vmatmul.mubr.f32.gmra.mxu0 %v3818
        %v3888 = vpop.f32.mrf.mxu0
        %v3889 = vadd.f32 %v1459, %v3888
        %v3890 = vpop.f32.mrf.mxu0
        %3891 = vdwg.mxu0
        %v3892 = vsel %vm618, %v3889, -inf
        %3893 = vmax.xlane.f32.xlu0 %v3892
        %v3894 = vpop.xlane.xlu0 %3893
        %v3895 = vsub.f32 %v3889, %v3894
        %v3896 = vmul.f32 %v3895, 1.442695
        %v3897 = vpow.pop %v3896
        %v3898 = vsel %vm618, %v3897, 0.0
        %3899 = vadd.xlane.f32.xlu0 %v3898
        %v3900 = vpop.xlane.xlu0 %3899
        %v3901 = vrcp.pop %v3900
        %v3902 = vmul.f32 %v3897, %v3901
        %3903 = vrot.lane.b32.xlu0 %v522, 8
        %v3904 = vpop.permute.xlu0 %3903
        %v3907 = vsel %vm618, %v3902, 0
        %3909 = vmatprep.subr.mxu0 0.0
        %3910 = vmatpush1.msra.mxu0 0.0
        %3911 = vmatprep.subr.mxu0 0.0
        %3912 = vmatpush1.msra.mxu0 0.0
        %3913 = vmatprep.subr.mxu0 0.0
        %3914 = vmatpush1.msra.mxu0 0.0
        %3915 = vmatprep.subr.mxu0 0.0
        %3916 = vmatpush1.msra.mxu0 0.0
        %3917 = vmatprep.subr.mxu0 0.0
        %3918 = vmatpush1.msra.mxu0 0.0
        %3919 = vmatprep.subr.mxu0 0.0
        %3920 = vmatpush1.msra.mxu0 0.0
        %3921 = vmatprep.subr.mxu0 0.0
        %3922 = vmatpush1.msra.mxu0 0.0
        %3923 = vmatprep.subr.mxu0 0.0
        %3924 = vmatpush1.msra.mxu0 0.0
        %3925 = vmatprep.subr.mxu0 0.0
        %3926 = vmatpush1.msra.mxu0 0.0
        %3927 = vmatprep.subr.mxu0 0.0
        %3928 = vmatpush1.msra.mxu0 0.0
        %3929 = vmatprep.subr.mxu0 0.0
        %3930 = vmatpush1.msra.mxu0 0.0
        %3931 = vmatprep.subr.mxu0 0.0
        %3932 = vmatpush1.msra.mxu0 0.0
        %3933 = vmatprep.subr.mxu0 0.0
        %3934 = vmatpush1.msra.mxu0 0.0
        %3935 = vmatprep.subr.mxu0 0.0
        %3936 = vmatpush1.msra.mxu0 0.0
        %3937 = vmatprep.subr.mxu0 0.0
        %3938 = vmatpush1.msra.mxu0 0.0
        %3939 = vmatprep.subr.mxu0 0.0
        %3940 = vmatpush1.msra.mxu0 %v3904
        %3941 = vmatprep.subr.mxu0 0.0
        %3942 = vmatpush2.msra.mxu0 0.0
        %3943 = vmatprep.subr.mxu0 0.0
        %3944 = vmatpush2.msra.mxu0 0.0
        %3945 = vmatprep.subr.mxu0 0.0
        %3946 = vmatpush2.msra.mxu0 0.0
        %3947 = vmatprep.subr.mxu0 0.0
        %3948 = vmatpush2.msra.mxu0 0.0
        %3949 = vmatprep.subr.mxu0 0.0
        %3950 = vmatpush2.msra.mxu0 0.0
        %3951 = vmatprep.subr.mxu0 0.0
        %3952 = vmatpush2.msra.mxu0 0.0
        %3953 = vmatprep.subr.mxu0 0.0
        %3954 = vmatpush2.msra.mxu0 0.0
        %3955 = vmatprep.subr.mxu0 0.0
        %3956 = vmatpush2.msra.mxu0 0.0
        %3957 = vmatprep.subr.mxu0 0.0
        %3958 = vmatpush2.msra.mxu0 0.0
        %3959 = vmatprep.subr.mxu0 0.0
        %3960 = vmatpush2.msra.mxu0 0.0
        %3961 = vmatprep.subr.mxu0 0.0
        %3962 = vmatpush2.msra.mxu0 0.0
        %3963 = vmatprep.subr.mxu0 0.0
        %3964 = vmatpush2.msra.mxu0 0.0
        %3965 = vmatprep.subr.mxu0 0.0
        %3966 = vmatpush2.msra.mxu0 0.0
        %3967 = vmatprep.subr.mxu0 0.0
        %3968 = vmatpush2.msra.mxu0 0.0
        %3969 = vmatprep.subr.mxu0 0.0
        %3970 = vmatpush2.msra.mxu0 0.0
        %3971 = vmatprep.subr.mxu0 0.0
        %3972 = vmatpush2.msra.mxu0 0.0
        %3973 = vmatprep.mubr.f32.mxu0 0.0
        %3974 = vmatmul.mubr.f32.gmra.mxu0 %v3907
        %v3975 = vpop.f32.mrf.mxu0
        %v3976 = vadd.f32 0.0, %v3975
        %v3977 = vpop.f32.mrf.mxu0
        %3978 = vdwg.mxu0
        %3980 = vrot.lane.b32.xlu0 %v3646, 8
        %v3981 = vpop.permute.xlu0 %3980
        %3984 = vrot.lane.b32.xlu0 %v3811, 16
        %v3985 = vpop.permute.xlu0 %3984
        %3988 = vrot.lane.b32.xlu0 %v3976, 24
        %v3989 = vpop.permute.xlu0 %3988
        %v3991 = vsel %vm618, %v3481, %v3981
        %v3992 = vsel %vm1288, %v3991, %v3985
        %v3993 = vsel %vm1290, %v3992, %v3989
        %v3995 = vsel %vm451, %v3993, 0
        %3997 = vmatprep.subr.mxu0 0.0
        %3998 = vmatpush1.msra.mxu0 0.0
        %3999 = vmatprep.subr.mxu0 0.0
        %4000 = vmatpush1.msra.mxu0 0.0
        %4001 = vmatprep.subr.mxu0 0.0
        %4002 = vmatpush1.msra.mxu0 0.0
        %4003 = vmatprep.subr.mxu0 0.0
        %4004 = vmatpush1.msra.mxu0 0.0
        %4005 = vmatprep.subr.mxu0 0.0
        %4006 = vmatpush1.msra.mxu0 0.0
        %4007 = vmatprep.subr.mxu0 0.0
        %4008 = vmatpush1.msra.mxu0 0.0
        %4009 = vmatprep.subr.mxu0 0.0
        %4010 = vmatpush1.msra.mxu0 0.0
        %4011 = vmatprep.subr.mxu0 0.0
        %4012 = vmatpush1.msra.mxu0 0.0
        %4013 = vmatprep.subr.mxu0 0.0
        %4014 = vmatpush1.msra.mxu0 0.0
        %4015 = vmatprep.subr.mxu0 0.0
        %4016 = vmatpush1.msra.mxu0 0.0
        %4017 = vmatprep.subr.mxu0 0.0
        %4018 = vmatpush1.msra.mxu0 0.0
        %4019 = vmatprep.subr.mxu0 0.0
        %4020 = vmatpush1.msra.mxu0 0.0
        %4021 = vmatprep.subr.mxu0 0.0
        %4022 = vmatpush1.msra.mxu0 %v3319
        %4023 = vmatprep.subr.mxu0 0.0
        %4024 = vmatpush1.msra.mxu0 %v3318
        %4025 = vmatprep.subr.mxu0 0.0
        %4026 = vmatpush1.msra.mxu0 %v3317
        %4027 = vmatprep.subr.mxu0 0.0
        %4028 = vmatpush1.msra.mxu0 %v3316
        %4029 = vmatprep.subr.mxu0 0.0
        %4030 = vmatpush2.msra.mxu0 0.0
        %4031 = vmatprep.subr.mxu0 0.0
        %4032 = vmatpush2.msra.mxu0 0.0
        %4033 = vmatprep.subr.mxu0 0.0
        %4034 = vmatpush2.msra.mxu0 0.0
        %4035 = vmatprep.subr.mxu0 0.0
        %4036 = vmatpush2.msra.mxu0 0.0
        %4037 = vmatprep.subr.mxu0 0.0
        %4038 = vmatpush2.msra.mxu0 0.0
        %4039 = vmatprep.subr.mxu0 0.0
        %4040 = vmatpush2.msra.mxu0 0.0
        %4041 = vmatprep.subr.mxu0 0.0
        %4042 = vmatpush2.msra.mxu0 0.0
        %4043 = vmatprep.subr.mxu0 0.0
        %4044 = vmatpush2.msra.mxu0 0.0
        %4045 = vmatprep.subr.mxu0 0.0
        %4046 = vmatpush2.msra.mxu0 0.0
        %4047 = vmatprep.subr.mxu0 0.0
        %4048 = vmatpush2.msra.mxu0 0.0
        %4049 = vmatprep.subr.mxu0 0.0
        %4050 = vmatpush2.msra.mxu0 0.0
        %4051 = vmatprep.subr.mxu0 0.0
        %4052 = vmatpush2.msra.mxu0 0.0
        %4053 = vmatprep.subr.mxu0 0.0
        %4054 = vmatpush2.msra.mxu0 0.0
        %4055 = vmatprep.subr.mxu0 0.0
        %4056 = vmatpush2.msra.mxu0 0.0
        %4057 = vmatprep.subr.mxu0 0.0
        %4058 = vmatpush2.msra.mxu0 0.0
        %4059 = vmatprep.subr.mxu0 0.0
        %4060 = vmatpush2.msra.mxu0 0.0
        %4061 = vmatprep.mubr.f32.mxu0 0.0
        %4062 = vmatmul.mubr.f32.gmra.mxu0 %v3995
        %v4063 = vpop.f32.mrf.mxu0
        %v4064 = vadd.f32 0.0, %v4063
        %v4065 = vpop.f32.mrf.mxu0
        %4066 = vdwg.mxu0
        %v4067 = vadd.f32 %v3228, %v4064
        %v4068 = vmul.f32 %v4067, %v4067
        %v4069 = vsel %vm451, %v4068, 0.0
        %4070 = vadd.xlane.f32.xlu0 %v4069
        %v4071 = vpop.xlane.xlu0 %4070
        %v4072 = vmul.f32 %v4071, %v529
        %v4073 = vadd.f32 %v4072, 1e-06
        %v4074 = vrsqrt.pop %v4073
        %v4075 = vmul.f32 %v4067, %v4074
        %s4076 = scalar_lea.vmem %s10, 32
        %v4077 = vld [vmem:[%s4076] sm:$0xff]
        %v4078 = vld [vmem:[%s4076 + $0x8] sm:$0xff]
        %v4079 = vld [vmem:[%s4076 + $0x10] sm:$0xff]
        %v4080 = vld [vmem:[%s4076 + $0x18] sm:$0xff]
        %v4082 = vsel %vm451, %v4075, 0
        %4084 = vmatprep.subr.mxu0 0.0
        %4085 = vmatpush1.msra.mxu0 0.0
        %4086 = vmatprep.subr.mxu0 0.0
        %4087 = vmatpush1.msra.mxu0 0.0
        %4088 = vmatprep.subr.mxu0 0.0
        %4089 = vmatpush1.msra.mxu0 0.0
        %4090 = vmatprep.subr.mxu0 0.0
        %4091 = vmatpush1.msra.mxu0 0.0
        %4092 = vmatprep.subr.mxu0 0.0
        %4093 = vmatpush1.msra.mxu0 0.0
        %4094 = vmatprep.subr.mxu0 0.0
        %4095 = vmatpush1.msra.mxu0 0.0
        %4096 = vmatprep.subr.mxu0 0.0
        %4097 = vmatpush1.msra.mxu0 0.0
        %4098 = vmatprep.subr.mxu0 0.0
        %4099 = vmatpush1.msra.mxu0 0.0
        %4100 = vmatprep.subr.mxu0 0.0
        %4101 = vmatpush1.msra.mxu0 0.0
        %4102 = vmatprep.subr.mxu0 0.0
        %4103 = vmatpush1.msra.mxu0 0.0
        %4104 = vmatprep.subr.mxu0 0.0
        %4105 = vmatpush1.msra.mxu0 0.0
        %4106 = vmatprep.subr.mxu0 0.0
        %4107 = vmatpush1.msra.mxu0 0.0
        %4108 = vmatprep.subr.mxu0 0.0
        %4109 = vmatpush1.msra.mxu0 %v4080
        %4110 = vmatprep.subr.mxu0 0.0
        %4111 = vmatpush1.msra.mxu0 %v4079
        %4112 = vmatprep.subr.mxu0 0.0
        %4113 = vmatpush1.msra.mxu0 %v4078
        %4114 = vmatprep.subr.mxu0 0.0
        %4115 = vmatpush1.msra.mxu0 %v4077
        %4116 = vmatprep.subr.mxu0 0.0
        %4117 = vmatpush2.msra.mxu0 0.0
        %4118 = vmatprep.subr.mxu0 0.0
        %4119 = vmatpush2.msra.mxu0 0.0
        %4120 = vmatprep.subr.mxu0 0.0
        %4121 = vmatpush2.msra.mxu0 0.0
        %4122 = vmatprep.subr.mxu0 0.0
        %4123 = vmatpush2.msra.mxu0 0.0
        %4124 = vmatprep.subr.mxu0 0.0
        %4125 = vmatpush2.msra.mxu0 0.0
        %4126 = vmatprep.subr.mxu0 0.0
        %4127 = vmatpush2.msra.mxu0 0.0
        %4128 = vmatprep.subr.mxu0 0.0
        %4129 = vmatpush2.msra.mxu0 0.0
        %4130 = vmatprep.subr.mxu0 0.0
        %4131 = vmatpush2.msra.mxu0 0.0
        %4132 = vmatprep.subr.mxu0 0.0
        %4133 = vmatpush2.msra.mxu0 0.0
        %4134 = vmatprep.subr.mxu0 0.0
        %4135 = vmatpush2.msra.mxu0 0.0
        %4136 = vmatprep.subr.mxu0 0.0
        %4137 = vmatpush2.msra.mxu0 0.0
        %4138 = vmatprep.subr.mxu0 0.0
        %4139 = vmatpush2.msra.mxu0 0.0
        %4140 = vmatprep.subr.mxu0 0.0
        %4141 = vmatpush2.msra.mxu0 0.0
        %4142 = vmatprep.subr.mxu0 0.0
        %4143 = vmatpush2.msra.mxu0 0.0
        %4144 = vmatprep.subr.mxu0 0.0
        %4145 = vmatpush2.msra.mxu0 0.0
        %4146 = vmatprep.subr.mxu0 0.0
        %4147 = vmatpush2.msra.mxu0 0.0
        %4148 = vmatprep.mubr.f32.mxu0 0.0
        %4149 = vmatmul.mubr.f32.gmra.mxu0 %v4082
        %v4150 = vpop.f32.mrf.mxu0
        %v4151 = vadd.f32 0.0, %v4150
        %v4152 = vpop.f32.mrf.mxu0
        %4153 = vdwg.mxu0
        %v4154 = vmul.f32 %v4151, 0.5
        %v4155 = vmul.f32 %v4151, 0.044715
        %v4156 = vmul.f32 %v4155, %v4151
        %v4157 = vmul.f32 %v4156, %v4151
        %v4158 = vadd.f32 %v4151, %v4157
        %v4159 = vmul.f32 %v4158, 0.7978846
        %v4160 = vtanh.pop %v4159
        %v4161 = vadd.f32 %v4160, 1.0
        %v4162 = vmul.f32 %v4154, %v4161
        %4164 = vrot.lane.b32.xlu0 %v4162, 64
        %v4165 = vpop.permute.xlu0 %4164
        %v4167 = vmul.f32 %v4151, %v4165
        %s4168 = scalar_lea.vmem %s11, 64
        %v4169 = vld [vmem:[%s4168] sm:$0xff]
        %v4170 = vld [vmem:[%s4168 + $0x8] sm:$0xff]
        %v4171 = vld [vmem:[%s4168 + $0x10] sm:$0xff]
        %v4172 = vld [vmem:[%s4168 + $0x18] sm:$0xff]
        %v4173 = vld [vmem:[%s4168 + $0x20] sm:$0xff]
        %v4174 = vld [vmem:[%s4168 + $0x28] sm:$0xff]
        %v4175 = vld [vmem:[%s4168 + $0x30] sm:$0xff]
        %v4176 = vld [vmem:[%s4168 + $0x38] sm:$0xff]
        %v4178 = vsel %vm2315, %v4167, 0
        %4180 = vmatprep.subr.mxu0 0.0
        %4181 = vmatpush1.msra.mxu0 0.0
        %4182 = vmatprep.subr.mxu0 0.0
        %4183 = vmatpush1.msra.mxu0 0.0
        %4184 = vmatprep.subr.mxu0 0.0
        %4185 = vmatpush1.msra.mxu0 0.0
        %4186 = vmatprep.subr.mxu0 0.0
        %4187 = vmatpush1.msra.mxu0 0.0
        %4188 = vmatprep.subr.mxu0 0.0
        %4189 = vmatpush1.msra.mxu0 0.0
        %4190 = vmatprep.subr.mxu0 0.0
        %4191 = vmatpush1.msra.mxu0 0.0
        %4192 = vmatprep.subr.mxu0 0.0
        %4193 = vmatpush1.msra.mxu0 0.0
        %4194 = vmatprep.subr.mxu0 0.0
        %4195 = vmatpush1.msra.mxu0 0.0
        %4196 = vmatprep.subr.mxu0 0.0
        %4197 = vmatpush1.msra.mxu0 %v4176
        %4198 = vmatprep.subr.mxu0 0.0
        %4199 = vmatpush1.msra.mxu0 %v4175
        %4200 = vmatprep.subr.mxu0 0.0
        %4201 = vmatpush1.msra.mxu0 %v4174
        %4202 = vmatprep.subr.mxu0 0.0
        %4203 = vmatpush1.msra.mxu0 %v4173
        %4204 = vmatprep.subr.mxu0 0.0
        %4205 = vmatpush1.msra.mxu0 %v4172
        %4206 = vmatprep.subr.mxu0 0.0
        %4207 = vmatpush1.msra.mxu0 %v4171
        %4208 = vmatprep.subr.mxu0 0.0
        %4209 = vmatpush1.msra.mxu0 %v4170
        %4210 = vmatprep.subr.mxu0 0.0
        %4211 = vmatpush1.msra.mxu0 %v4169
        %4212 = vmatprep.subr.mxu0 0.0
        %4213 = vmatpush2.msra.mxu0 0.0
        %4214 = vmatprep.subr.mxu0 0.0
        %4215 = vmatpush2.msra.mxu0 0.0
        %4216 = vmatprep.subr.mxu0 0.0
        %4217 = vmatpush2.msra.mxu0 0.0
        %4218 = vmatprep.subr.mxu0 0.0
        %4219 = vmatpush2.msra.mxu0 0.0
        %4220 = vmatprep.subr.mxu0 0.0
        %4221 = vmatpush2.msra.mxu0 0.0
        %4222 = vmatprep.subr.mxu0 0.0
        %4223 = vmatpush2.msra.mxu0 0.0
        %4224 = vmatprep.subr.mxu0 0.0
        %4225 = vmatpush2.msra.mxu0 0.0
        %4226 = vmatprep.subr.mxu0 0.0
        %4227 = vmatpush2.msra.mxu0 0.0
        %4228 = vmatprep.subr.mxu0 0.0
        %4229 = vmatpush2.msra.mxu0 0.0
        %4230 = vmatprep.subr.mxu0 0.0
        %4231 = vmatpush2.msra.mxu0 0.0
        %4232 = vmatprep.subr.mxu0 0.0
        %4233 = vmatpush2.msra.mxu0 0.0
        %4234 = vmatprep.subr.mxu0 0.0
        %4235 = vmatpush2.msra.mxu0 0.0
        %4236 = vmatprep.subr.mxu0 0.0
        %4237 = vmatpush2.msra.mxu0 0.0
        %4238 = vmatprep.subr.mxu0 0.0
        %4239 = vmatpush2.msra.mxu0 0.0
        %4240 = vmatprep.subr.mxu0 0.0
        %4241 = vmatpush2.msra.mxu0 0.0
        %4242 = vmatprep.subr.mxu0 0.0
        %4243 = vmatpush2.msra.mxu0 0.0
        %4244 = vmatprep.mubr.f32.mxu0 0.0
        %4245 = vmatmul.mubr.f32.gmra.mxu0 %v4178
        %v4246 = vpop.f32.mrf.mxu0
        %v4247 = vadd.f32 0.0, %v4246
        %v4248 = vpop.f32.mrf.mxu0
        %4249 = vdwg.mxu0
        %v4250 = vadd.f32 %v4067, %v4247
        %v4251 = vld [vmem:[%s4] sm:$0x1]
        %v4252 = vmul.f32 %v4250, %v4250
        %v4253 = vsel %vm451, %v4252, 0.0
        %4254 = vadd.xlane.f32.xlu0 %v4253
        %v4255 = vpop.xlane.xlu0 %4254
        %v4256 = vmul.f32 %v4255, %v529
        %v4257 = vadd.f32 %v4256, 1e-06
        %v4258 = vrsqrt.pop %v4257
        %v4259 = vmul.f32 %v4250, %v4258
        %v4261 = vlaneseq
        %v4262 = vshrl.u32 %v4261, 7
        %v4263 = vsub.s32 0, %v4262
        %v4264 = vrot.slane %v4251, %v4263
        %v4266 = vmul.f32 %v4264, %v4259
        %4267 = vst.msk [vmem:[%s428] sm:$0xff] %vm451, %v4266
        %s4268 = sand.u32 %s301, 1
        %s4269 = scalar_lea.sflag [#allocation3], %s4268
        %s4270 = sand.u32 %s301, 1
        %s4271 = smul.addr %s4270, 8
        %s4272 = scalar_lea.vmem [#allocation2], %s4271
        // Predicated region
        $region69: #{t5_decoder_forward.1} parent=67 // pred_check
          %p4273 = pneg %p311
        $region70: #{t5_decoder_forward.1} parent=67 // pred_check_branch
          %4275 = sbr.rel (%p4273) target = $region72
        $region71: #{t5_decoder_forward.1} parent=67 // pred_region
          %s4277 = ssub.s32 128, 128
          %4278 = vsyncadd %s4269, %s4277
          %s4279 = smul.addr %s26, 128
          %s4280 = scalar_lea.hbm %s12, %s4279
          %s4282 = sshll.u32 %s4272, 4
          %s4283 = int_to_ptr.vmem [resolvable:$true] %s4282
          %4285 = dma.vmem_to_hbm [thread:$0]  %s4283, 128, %s4280, %s4269
        $region72: #{t5_decoder_forward.1} parent=67 // pred_fallthru
          _
      $region68: #{t5_decoder_forward.1} parent=5 // pred_fallthru
        _
      %p4286 = scmp.le.s32.totalorder 2, %s21
      // Predicated region
      $region73: #{t5_decoder_forward.1} parent=5 // pred_check
        %p4287 = pneg %p4286
      $region74: #{t5_decoder_forward.1} parent=5 // pred_check_branch
        %4289 = sbr.rel (%p4287) target = $region76
      $region75: #{t5_decoder_forward.1} parent=5 // pred_region
        %s4290 = ssub.s32 %s21, 2
        // Predicated region
        $region77: #{t5_decoder_forward.1} parent=75 // pred_check
          %p4291 = pneg %p317
        $region78: #{t5_decoder_forward.1} parent=75 // pred_check_branch
          %4293 = sbr.rel (%p4291) target = $region80
        $region79: #{t5_decoder_forward.1} parent=75 // pred_region
          %s4294 = sand.u32 %s302, 1
          %s4295 = scalar_lea.sflag [#allocation3], %s4294
          %s4296 = sand.u32 %s302, 1
          %s4297 = smul.addr %s4296, 8
          %s4298 = scalar_lea.vmem [#allocation2], %s4297
          %4299 = dma.done %s4295, 128
        $region80: #{t5_decoder_forward.1} parent=75 // pred_fallthru
          _
      $region76: #{t5_decoder_forward.1} parent=5 // pred_fallthru
        _
    $region6: #{t5_decoder_forward.1} parent=1 // loop_footer
      %s25 = sadd.s32 1, %s21
    $region7: #{t5_decoder_forward.1} parent=1 // loop_footer_branch
      %20 = sbr.rel target = $region3
    $region8: #{t5_decoder_forward.1} parent=1 // loop_exit
      _
    %4300 = vsyncpa [#allocation3], 1
    %s4301 = scalar_lea.sflag [#allocation3], 1
    %4302 = vsyncpa %s4301, 1

</llo_original>
